<compile_context>
chip_gen: v5e
topology: v5e:2x2
jax: 0.10.0
libtpu: 0.0.40
codegen_flags: <defaults>
</compile_context>

<pallas_src>
import functools

import jax
import jax.numpy as jnp
from jax.experimental import pallas as pl
from jax.experimental.pallas import tpu as pltpu

BN_EPS = 1e-5


@functools.lru_cache(maxsize=None)
def _vmem_limit_bytes():
    """Scoped-VMEM budget: ~half of physical (64 MiB on v5e/v6e, 32 MiB on v7x)."""
    limit = 32 * 1024 * 1024
    try:
        cap = int(pltpu.get_tpu_info().vmem_capacity_bytes)
        limit = max(limit, min(cap // 2, 64 * 1024 * 1024))
    except Exception:   # conservative fallback (older jax / non-TPU trace)
        pass
    return limit


def _row_tile(m, target, min_steps=2):
    """Row tile: multiple of 8, <= target, and >= min_steps grid steps when possible
    so the single 'parallel' grid axis shards across both v7x TensorCores."""
    t = min(target, max(8, pl.cdiv(m, min_steps)))
    return pl.cdiv(t, 8) * 8


# ----------------------------- Pallas kernels -----------------------------

def _stats_matmul_kernel(*refs, m_true, write_y, pre_affine):
    """Pass A: y = act(p) @ w + b per row tile; emit per-tile BN partial stats.

    act(p) is identity, or relu(p * pre_scale + pre_shift) applied per patch column
    when the previous layer's BatchNorm+ReLU is fused in (pre_affine).  Rows >=
    m_true (ragged last tile) are masked out of the statistics; their stores are
    dropped by Pallas' masked edge stores.
    """
    it = iter(refs)
    p_ref, w_ref, b_ref = next(it), next(it), next(it)
    if pre_affine:
        sc_ref, sh_ref = next(it), next(it)
    out_refs = list(it)

    p = p_ref[...]
    if pre_affine:
        p = jnp.maximum(p.astype(jnp.float32) * sc_ref[...] + sh_ref[...], 0.0)
        p = p.astype(jnp.bfloat16)
    y = jnp.dot(p, w_ref[...], preferred_element_type=jnp.float32) + b_ref[...]

    if write_y:
        out_refs[0][...] = y.astype(out_refs[0].dtype)        # bf16 intermediate
    stats_ref = out_refs[-1]

    tile_m = y.shape[0]
    row = (pl.program_id(0) * tile_m
           + jax.lax.broadcasted_iota(jnp.int32, (tile_m, 1), 0))
    ym = jnp.where(row < m_true, y, 0.0)
    s1 = jnp.sum(ym, axis=0, keepdims=True)                   # (1, C) sum
    s2 = jnp.sum(ym * ym, axis=0, keepdims=True)              # (1, C) sum of squares
    # TODO(synk): single-pass E[y^2]-E[y]^2 can cancel when |mean|^2 >> var; use a
    # shifted/Welford accumulation if BN-stat fidelity matters.
    stats_ref[...] = jnp.concatenate([s1, s2], axis=-1)[None]  # (1,1,2C) lane-dense


def _conv1_pool_kernel(x_ref, w_ref, scale_ref, shift_ref, o_ref):
    """Pass B of block 1: one long matmul over the 4 pool taps, BN affine per tap,
    2x2 max over taps, ReLU.  Rows/weights are pixel-pair packed (128 lanes)."""
    t, r, k = x_ref.shape
    x = x_ref[...].reshape(t * r, k)                   # tile-aligned leading-dim merge
    y = jnp.dot(x, w_ref[...], preferred_element_type=jnp.float32)
    y = y.reshape(t, r, w_ref.shape[1])
    z = jnp.max(y * scale_ref[...] + shift_ref[...], axis=0)   # affine, then pool
    o_ref[...] = jnp.maximum(z, 0.0).astype(o_ref.dtype)       # ReLU, bf16 out


def _bn_relu_kernel(y_ref, scale_ref, shift_ref, o_ref):
    """Final BN affine + ReLU (block 3 output, already 128-lane dense)."""
    y = y_ref[...].astype(jnp.float32)
    o_ref[...] = jnp.maximum(y * scale_ref[...] + shift_ref[...], 0.0).astype(o_ref.dtype)


# ----------------------------- kernel wrappers -----------------------------

def matmul_bias_stats(patches, w_mat, bias, *, write_y, pre_scale=None,
                      pre_shift=None, row_tile_target=2048):
    m, k = patches.shape
    cout = w_mat.shape[1]
    tile_m = _row_tile(m, row_tile_target)
    grid_m = pl.cdiv(m, tile_m)
    pre_affine = pre_scale is not None

    in_specs = [pl.BlockSpec((tile_m, k), lambda i: (i, 0)),
                pl.BlockSpec((k, cout), lambda i: (0, 0)),      # weights stay resident
                pl.BlockSpec((1, cout), lambda i: (0, 0))]
    inputs = [patches.astype(jnp.bfloat16), w_mat.astype(jnp.bfloat16),
              bias.reshape(1, cout).astype(jnp.float32)]
    if pre_affine:
        in_specs += [pl.BlockSpec((1, k), lambda i: (0, 0)),
                     pl.BlockSpec((1, k), lambda i: (0, 0))]
        inputs += [pre_scale.reshape(1, k).astype(jnp.float32),
                   pre_shift.reshape(1, k).astype(jnp.float32)]

    out_shapes, out_specs = [], []
    if write_y:
        out_shapes.append(jax.ShapeDtypeStruct((m, cout), jnp.bfloat16))
        out_specs.append(pl.BlockSpec((tile_m, cout), lambda i: (i, 0)))
    out_shapes.append(jax.ShapeDtypeStruct((grid_m, 1, 2 * cout), jnp.float32))
    out_specs.append(pl.BlockSpec((1, 1, 2 * cout), lambda i: (i, 0, 0)))

    flops = 2 * m * k * cout
    bytes_accessed = (m * k * 2 + k * cout * 2
                      + (m * cout * 2 if write_y else 0) + grid_m * 2 * cout * 4)
    outs = pl.pallas_call(
        functools.partial(_stats_matmul_kernel, m_true=m, write_y=write_y,
                          pre_affine=pre_affine),
        out_shape=tuple(out_shapes),
        grid=(grid_m,),
        in_specs=in_specs,
        out_specs=tuple(out_specs),
        compiler_params=pltpu.CompilerParams(
            dimension_semantics=("parallel",),
            vmem_limit_bytes=_vmem_limit_bytes()),
        cost_estimate=pl.CostEstimate(flops=flops, transcendentals=0,
                                      bytes_accessed=bytes_accessed),
    )(*inputs)
    if write_y:
        return outs[0], outs[1]
    return outs[0]


def conv1_bn_pool_relu(tap_pairs, w_wide, scale_wide, shift_wide, *,
                       row_tile_target=2048):
    _, r2, k = tap_pairs.shape
    cw = w_wide.shape[1]                                        # 128 (pixel-pair packed)
    tile_r = _row_tile(r2, row_tile_target)
    grid_r = pl.cdiv(r2, tile_r)
    flops = 2 * 4 * r2 * k * cw
    bytes_accessed = 4 * r2 * k * 2 + k * cw * 2 + r2 * cw * 2
    return pl.pallas_call(
        _conv1_pool_kernel,
        out_shape=jax.ShapeDtypeStruct((r2, cw), jnp.bfloat16),
        grid=(grid_r,),
        in_specs=[pl.BlockSpec((4, tile_r, k), lambda i: (0, i, 0)),
                  pl.BlockSpec((k, cw), lambda i: (0, 0)),
                  pl.BlockSpec((1, cw), lambda i: (0, 0)),
                  pl.BlockSpec((1, cw), lambda i: (0, 0))],
        out_specs=pl.BlockSpec((tile_r, cw), lambda i: (i, 0)),
        compiler_params=pltpu.CompilerParams(
            dimension_semantics=("parallel",),
            vmem_limit_bytes=_vmem_limit_bytes()),
        cost_estimate=pl.CostEstimate(flops=flops, transcendentals=0,
                                      bytes_accessed=bytes_accessed),
    )(tap_pairs.astype(jnp.bfloat16), w_wide.astype(jnp.bfloat16),
      scale_wide.reshape(1, cw).astype(jnp.float32),
      shift_wide.reshape(1, cw).astype(jnp.float32))


def bn_relu(y, scale, shift, *, out_dtype=jnp.float32, row_tile_target=4096):
    m, c = y.shape
    tile_m = _row_tile(m, row_tile_target)
    grid_m = pl.cdiv(m, tile_m)
    return pl.pallas_call(
        _bn_relu_kernel,
        out_shape=jax.ShapeDtypeStruct((m, c), out_dtype),
        grid=(grid_m,),
        in_specs=[pl.BlockSpec((tile_m, c), lambda i: (i, 0)),
                  pl.BlockSpec((1, c), lambda i: (0, 0)),
                  pl.BlockSpec((1, c), lambda i: (0, 0))],
        out_specs=pl.BlockSpec((tile_m, c), lambda i: (i, 0)),
        compiler_params=pltpu.CompilerParams(
            dimension_semantics=("parallel",),
            vmem_limit_bytes=_vmem_limit_bytes()),
        cost_estimate=pl.CostEstimate(flops=0, transcendentals=0,
                                      bytes_accessed=m * c * 6),
    )(y, scale.reshape(1, c).astype(jnp.float32),
      shift.reshape(1, c).astype(jnp.float32))


# ------------------------------- JAX glue ----------------------------------

def _im2col(x_nhwc, k, stride):
    """(N,H,W,C) -> (N, OH, OW, k*k*C); column order (kh, kw, cin)."""
    n, h, w, c = x_nhwc.shape
    oh = (h - k) // stride + 1
    ow = (w - k) // stride + 1
    cols = []
    for kh in range(k):
        for kw in range(k):
            cols.append(x_nhwc[:, kh:kh + stride * oh:stride,
                               kw:kw + stride * ow:stride, :])
    p = jnp.stack(cols, axis=3)                        # (N, OH, OW, k*k, C)
    return p.reshape(n, oh, ow, k * k * c)


def _conv1_paired_taps(x_nhwc):
    """conv1(stride 1) + maxpool(2) as 4 stride-2 tap convolutions, with two
    horizontally adjacent pooled outputs packed per patch row (lane-dense 2*64).

    Returns (4, N*12*6, 2*25*C); tap (dh,dw) row (n,i,t) holds the patches of the
    pooled positions (n, i, 2t) and (n, i, 2t+1) concatenated on the last axis,
    so the pool is an elementwise max over axis 0.
    """
    # TODO(synk): this tap gather is still XLA-materialized (~18x the raw image);
    # building it from a VMEM-resident image tile needs strided in-kernel slicing.
    n = x_nhwc.shape[0]
    taps = []
    for dh in (0, 1):
        for dw in (0, 1):
            p = _im2col(x_nhwc[:, dh:, dw:, :], 5, 2)   # (N, 12, 12, 25*C)
            kc = p.shape[-1]
            taps.append(p.reshape(n, 12, 6, 2 * kc))
    return jnp.stack(taps, axis=0).reshape(4, n * 12 * 6, -1)


def _block_diag2(w):
    """[[W, 0], [0, W]]: one matmul produces two packed pixels side by side."""
    z = jnp.zeros_like(w)
    return jnp.concatenate([jnp.concatenate([w, z], axis=1),
                            jnp.concatenate([z, w], axis=1)], axis=0)


def _finalize_stats(partials, m_rows, *, paired=False):
    """Reduce per-tile (sum | sumsq) partials -> per-channel (mean, biased var)."""
    s = jnp.sum(partials, axis=(0, 1))                 # (2 * lanes,)
    lanes = s.shape[0] // 2
    s1, s2 = s[:lanes], s[lanes:]
    if paired:                                         # two pixels packed per row
        half = lanes // 2
        s1 = s1[:half] + s1[half:]
        s2 = s2[:half] + s2[half:]
        count = 2.0 * m_rows
    else:
        count = 1.0 * m_rows
    mean = s1 / count
    var = jnp.maximum(s2 / count - mean * mean, 0.0)   # biased var, as PyTorch BN uses
    return mean, var


def _conv_weight_to_mat(w_oihw):
    """PyTorch (Cout, Cin, kh, kw) -> (kh*kw*Cin, Cout), matching im2col order."""
    cout, cin, kh, kw = w_oihw.shape
    return jnp.transpose(w_oihw, (2, 3, 1, 0)).reshape(kh * kw * cin, cout)


def _kaiming_conv(key, cout, cin, k):
    """kaiming_normal_(mode='fan_out') for Conv2d weight, bias = 0."""
    fan_out = cout * k * k
    return jax.random.normal(key, (cout, cin, k, k), jnp.float32) * (2.0 / fan_out) ** 0.5


def init_params(key):
    k1, k2, k3 = jax.random.split(key, 3)
    return dict(
        w1=_conv_weight_to_mat(_kaiming_conv(k1, 64, 3, 5)),
        b1=jnp.zeros((64,), jnp.float32), g1=jnp.ones((64,), jnp.float32),
        be1=jnp.zeros((64,), jnp.float32),
        w2=_conv_weight_to_mat(_kaiming_conv(k2, 64, 64, 5)),
        b2=jnp.zeros((64,), jnp.float32), g2=jnp.ones((64,), jnp.float32),
        be2=jnp.zeros((64,), jnp.float32),
        w3=_conv_weight_to_mat(_kaiming_conv(k3, 128, 64, 5)),
        b3=jnp.zeros((128,), jnp.float32), g3=jnp.ones((128,), jnp.float32),
        be3=jnp.zeros((128,), jnp.float32),
    )


def svhn_feature_extractor(params, x):
    n, c_in = x.shape[0], x.shape[1]
    x = jnp.transpose(x, (0, 2, 3, 1)).astype(jnp.bfloat16)      # NHWC (N, 28, 28, cin)

    # ---- Block 1: Conv2d(3,64,5) -> BN -> MaxPool2d(2) -> ReLU   (28 -> 24 -> 12)
    # x.expand(N,3,28,28): for a 1-channel input the replicated channels are
    # identical, so fold the replication into the weight (K: 75 -> 25).
    if c_in == 1:
        w1 = params['w1'].reshape(25, 3, 64).sum(axis=1)          # (25, 64)
    else:
        w1 = params['w1']                                         # (75, 64)
    w1_wide = _block_diag2(w1)                                    # (2K, 128)
    b1_wide = jnp.concatenate([params['b1'], params['b1']])
    taps = _conv1_paired_taps(x)                                  # (4, N*72, 2K) bf16
    r2 = taps.shape[1]
    m1 = 4 * r2                                                   # N*288 packed rows
    stats1 = matmul_bias_stats(taps.reshape(m1, -1), w1_wide, b1_wide,
                               write_y=False, row_tile_target=8192)
    mean1, var1 = _finalize_stats(stats1, m1, paired=True)        # over N*576 pixels
    scale1 = params['g1'] * jax.lax.rsqrt(var1 + BN_EPS)
    shift1 = params['be1'] + (params['b1'] - mean1) * scale1      # fold conv bias
    a1 = conv1_bn_pool_relu(taps, w1_wide,
                            jnp.concatenate([scale1, scale1]),
                            jnp.concatenate([shift1, shift1]))    # (N*72, 128) bf16
    a1 = a1.reshape(n, 12, 12, 64)

    # ---- Block 2: Conv2d(64,64,5,stride=2,padding=1) -> BN stats     (12 -> 5)
    # TODO(synk): the im2col patches (~3x a1) and the pad copy are still built by
    # XLA; a direct-conv kernel holding the padded neighborhood in VMEM would
    # remove the remaining patch blowup on these small layers.
    a1p = jnp.pad(a1, ((0, 0), (1, 1), (1, 1), (0, 0)))
    p2 = _im2col(a1p, 5, 2).reshape(n * 25, 1600)                 # bf16
    y2, stats2 = matmul_bias_stats(p2, params['w2'], params['b2'], write_y=True)
    mean2, var2 = _finalize_stats(stats2, n * 25)
    scale2 = params['g2'] * jax.lax.rsqrt(var2 + BN_EPS)
    shift2 = params['be2'] - mean2 * scale2                       # y2 already has bias

    # ---- Block 3: Conv2d(64,128,5,stride=2,padding=2) -> BN -> ReLU   (5 -> 3)
    # Block 2's BN+ReLU is fused into this conv's pass A: relu(p*scale2 + shift2)
    # is applied to the patch columns in-kernel, so a2 never exists in HBM.  The
    # zero padding is reproduced exactly by padding y2 with the per-channel value
    # whose affine image is strictly negative (ReLU maps it back to 0).
    margin = 1.0 + 0.01 * jnp.abs(shift2)                         # robust to bf16 rounding
    safe_scale2 = jnp.where(scale2 == 0, 1.0, scale2)             # scale2==0 only if gamma==0
    pad_val = jnp.where(scale2 == 0, 0.0, -(shift2 + margin) / safe_scale2)
    y2p = jnp.broadcast_to(pad_val.astype(jnp.bfloat16), (n, 9, 9, 64))
    y2p = jax.lax.dynamic_update_slice(y2p, y2.reshape(n, 5, 5, 64), (0, 2, 2, 0))
    p3 = _im2col(y2p, 5, 2).reshape(n * 9, 1600)                  # pre-activation patches
    y3, stats3 = matmul_bias_stats(p3, params['w3'], params['b3'], write_y=True,
                                   pre_scale=jnp.tile(scale2, 25),
                                   pre_shift=jnp.tile(shift2, 25))
    mean3, var3 = _finalize_stats(stats3, n * 9)
    scale3 = params['g3'] * jax.lax.rsqrt(var3 + BN_EPS)
    shift3 = params['be3'] - mean3 * scale3
    a3 = bn_relu(y3, scale3, shift3).reshape(n, 3, 3, 128)        # f32 output

    # Dropout2d(p=0) -> identity.  x.view(-1, 128*3*3) flattens NCHW order:
    return jnp.transpose(a3, (0, 3, 1, 2)).reshape(n, 128 * 3 * 3)


if __name__ == "__main__":
    key = jax.random.PRNGKey(0)
    kp, kx = jax.random.split(key)
    params = init_params(kp)
    # MNIST-style single-channel input; forward expands it to (N, 3, 28, 28).
    x = jax.random.normal(kx, (2, 1, 28, 28), jnp.float32)
    out = jax.jit(svhn_feature_extractor)(params, x)
    jax.block_until_ready(out)
    assert out.shape == (2, 128 * 3 * 3), out.shape
    print("KERNEL_OK")
</pallas_src>

<mosaic_0001>
module attributes {stable_mosaic.version = 11 : i64} {
  func.func @_stats_matmul_kernel(%arg0: i32, %arg1: memref<288x50xbf16, #tpu.memory_space<vmem>>, %arg2: memref<50x128xbf16, #tpu.memory_space<vmem>>, %arg3: memref<1x128xf32, #tpu.memory_space<vmem>>, %arg4: memref<1x1x256xf32, #tpu.memory_space<vmem>>) attributes {dimension_semantics = [#tpu.dimension_semantics<parallel>], iteration_bounds = array<i64: 2>, scalar_prefetch = 0 : i64, scratch_operands = 0 : i64, tpu.core_type = #tpu.core_type<tc>, window_params = [{transform_indices = @transform_0, window_bounds = array<i64: 288, 50>}, {pipeline_mode = #tpu.pipeline_mode<synchronous>, transform_indices = @transform_1, window_bounds = array<i64: 50, 128>}, {pipeline_mode = #tpu.pipeline_mode<synchronous>, transform_indices = @transform_2, window_bounds = array<i64: 1, 128>}, {transform_indices = @transform_3, window_bounds = array<i64: 1, 1, 256>}]} {
    %c0 = arith.constant 0 : index
    %c0_0 = arith.constant 0 : index
    %0 = vector.load %arg1[%c0, %c0_0] : memref<288x50xbf16, #tpu.memory_space<vmem>>, vector<288x50xbf16>
    %c0_1 = arith.constant 0 : index
    %c0_2 = arith.constant 0 : index
    %1 = vector.load %arg2[%c0_1, %c0_2] : memref<50x128xbf16, #tpu.memory_space<vmem>>, vector<50x128xbf16>
    %cst = arith.constant dense<0.000000e+00> : vector<288x128xf32>
    %2 = tpu.matmul %0, %1, %cst {dimension_numbers = #tpu.dot_dimension_numbers<[1], [0], [0], [1], [0, 0, 1, 1], [], []>} : vector<288x50xbf16>, vector<50x128xbf16>, vector<288x128xf32> -> vector<288x128xf32>
    %c0_3 = arith.constant 0 : index
    %c0_4 = arith.constant 0 : index
    %3 = vector.load %arg3[%c0_3, %c0_4] : memref<1x128xf32, #tpu.memory_space<vmem>>, vector<1x128xf32>
    %4 = vector.broadcast %3 : vector<1x128xf32> to vector<288x128xf32>
    %5 = arith.addf %2, %4 : vector<288x128xf32>
    %c288_i32 = arith.constant 288 : i32
    %6 = arith.muli %arg0, %c288_i32 : i32
    %7 = tpu.iota {dimensions = array<i32: 0>} : vector<288x1xi32>
    %8 = vector.broadcast %6 : i32 to vector<288x1xi32>
    %9 = arith.addi %8, %7 : vector<288x1xi32>
    %c576_i32 = arith.constant 576 : i32
    %10 = vector.broadcast %c576_i32 : i32 to vector<288x1xi32>
    %11 = arith.cmpi slt, %9, %10 : vector<288x1xi32>
    %cst_5 = arith.constant 0.000000e+00 : f32
    %12 = vector.shape_cast %11 : vector<288x1xi1> to vector<288x1xi1>
    %13 = vector.broadcast %12 : vector<288x1xi1> to vector<288x128xi1>
    %14 = vector.broadcast %cst_5 : f32 to vector<288x128xf32>
    %15 = arith.select %13, %5, %14 : vector<288x128xi1>, vector<288x128xf32>
    %cst_6 = arith.constant dense<0.000000e+00> : vector<128xf32>
    %16 = vector.multi_reduction <add>, %15, %cst_6 [0] : vector<288x128xf32> to vector<128xf32>
    %17 = vector.shape_cast %16 : vector<128xf32> to vector<1x128xf32>
    %18 = arith.mulf %15, %15 : vector<288x128xf32>
    %cst_7 = arith.constant dense<0.000000e+00> : vector<128xf32>
    %19 = vector.multi_reduction <add>, %18, %cst_7 [0] : vector<288x128xf32> to vector<128xf32>
    %20 = vector.shape_cast %19 : vector<128xf32> to vector<1x128xf32>
    %21 = tpu.concatenate %17, %20 in 1 : vector<1x128xf32>, vector<1x128xf32> -> vector<1x256xf32>
    %22 = vector.shape_cast %21 : vector<1x256xf32> to vector<1x1x256xf32>
    %c0_8 = arith.constant 0 : index
    %c0_9 = arith.constant 0 : index
    %c0_10 = arith.constant 0 : index
    %23 = vector.load %arg4[%c0_8, %c0_9, %c0_10] : memref<1x1x256xf32, #tpu.memory_space<vmem>>, vector<1x1x256xf32>
    tpu.vector_store %arg4[%c0_8, %c0_9, %c0_10], %22 {strides = array<i32>} : memref<1x1x256xf32, #tpu.memory_space<vmem>>, vector<1x1x256xf32>,
    return
  }
  func.func @transform_0(%arg0: i32) -> (i32, i32) {
    %c0_i32 = arith.constant 0 : i32
    %c0_i32_0 = arith.constant 0 : i32
    return %arg0, %c0_i32 : i32, i32
  }
  func.func @transform_1(%arg0: i32) -> (i32, i32) {
    %c0_i32 = arith.constant 0 : i32
    %c0_i32_0 = arith.constant 0 : i32
    %c0_i32_1 = arith.constant 0 : i32
    return %c0_i32, %c0_i32_0 : i32, i32
  }
  func.func @transform_2(%arg0: i32) -> (i32, i32) {
    %c0_i32 = arith.constant 0 : i32
    %c0_i32_0 = arith.constant 0 : i32
    %c0_i32_1 = arith.constant 0 : i32
    return %c0_i32, %c0_i32_0 : i32, i32
  }
  func.func @transform_3(%arg0: i32) -> (i32, i32, i32) {
    %c0_i32 = arith.constant 0 : i32
    %c0_i32_0 = arith.constant 0 : i32
    %c0_i32_1 = arith.constant 0 : i32
    return %arg0, %c0_i32, %c0_i32_0 : i32, i32, i32
  }
}

module attributes {stable_mosaic.version = 11 : i64} {
  func.func @_conv1_pool_kernel(%arg0: i32, %arg1: memref<4x72x50xbf16, #tpu.memory_space<vmem>>, %arg2: memref<50x128xbf16, #tpu.memory_space<vmem>>, %arg3: memref<1x128xf32, #tpu.memory_space<vmem>>, %arg4: memref<1x128xf32, #tpu.memory_space<vmem>>, %arg5: memref<72x128xbf16, #tpu.memory_space<vmem>>) attributes {dimension_semantics = [#tpu.dimension_semantics<parallel>], iteration_bounds = array<i64: 2>, scalar_prefetch = 0 : i64, scratch_operands = 0 : i64, tpu.core_type = #tpu.core_type<tc>, window_params = [{transform_indices = @transform_0, window_bounds = array<i64: 4, 72, 50>}, {pipeline_mode = #tpu.pipeline_mode<synchronous>, transform_indices = @transform_1, window_bounds = array<i64: 50, 128>}, {pipeline_mode = #tpu.pipeline_mode<synchronous>, transform_indices = @transform_2, window_bounds = array<i64: 1, 128>}, {pipeline_mode = #tpu.pipeline_mode<synchronous>, transform_indices = @transform_3, window_bounds = array<i64: 1, 128>}, {transform_indices = @transform_4, window_bounds = array<i64: 72, 128>}]} {
    %c0 = arith.constant 0 : index
    %c0_0 = arith.constant 0 : index
    %c0_1 = arith.constant 0 : index
    %0 = vector.load %arg1[%c0, %c0_0, %c0_1] : memref<4x72x50xbf16, #tpu.memory_space<vmem>>, vector<4x72x50xbf16>
    %1 = vector.shape_cast %0 : vector<4x72x50xbf16> to vector<288x50xbf16>
    %c0_2 = arith.constant 0 : index
    %c0_3 = arith.constant 0 : index
    %2 = vector.load %arg2[%c0_2, %c0_3] : memref<50x128xbf16, #tpu.memory_space<vmem>>, vector<50x128xbf16>
    %cst = arith.constant dense<0.000000e+00> : vector<288x128xf32>
    %3 = tpu.matmul %1, %2, %cst {dimension_numbers = #tpu.dot_dimension_numbers<[1], [0], [0], [1], [0, 0, 1, 1], [], []>} : vector<288x50xbf16>, vector<50x128xbf16>, vector<288x128xf32> -> vector<288x128xf32>
    %4 = vector.shape_cast %3 : vector<288x128xf32> to vector<4x72x128xf32>
    %c0_4 = arith.constant 0 : index
    %c0_5 = arith.constant 0 : index
    %5 = vector.load %arg3[%c0_4, %c0_5] : memref<1x128xf32, #tpu.memory_space<vmem>>, vector<1x128xf32>
    %6 = vector.shape_cast %5 : vector<1x128xf32> to vector<1x1x128xf32>
    %7 = vector.broadcast %6 : vector<1x1x128xf32> to vector<4x72x128xf32>
    %8 = arith.mulf %4, %7 : vector<4x72x128xf32>
    %c0_6 = arith.constant 0 : index
    %c0_7 = arith.constant 0 : index
    %9 = vector.load %arg4[%c0_6, %c0_7] : memref<1x128xf32, #tpu.memory_space<vmem>>, vector<1x128xf32>
    %10 = vector.shape_cast %9 : vector<1x128xf32> to vector<1x1x128xf32>
    %11 = vector.broadcast %10 : vector<1x1x128xf32> to vector<4x72x128xf32>
    %12 = arith.addf %8, %11 : vector<4x72x128xf32>
    %cst_8 = arith.constant dense<0xFF800000> : vector<72x128xf32>
    %13 = vector.multi_reduction <maximumf>, %12, %cst_8 [0] : vector<4x72x128xf32> to vector<72x128xf32>
    %cst_9 = arith.constant 0.000000e+00 : f32
    %14 = vector.broadcast %cst_9 : f32 to vector<72x128xf32>
    %15 = arith.maximumf %13, %14 : vector<72x128xf32>
    %16 = arith.truncf %15 : vector<72x128xf32> to vector<72x128xbf16>
    %c0_10 = arith.constant 0 : index
    %c0_11 = arith.constant 0 : index
    %17 = vector.load %arg5[%c0_10, %c0_11] : memref<72x128xbf16, #tpu.memory_space<vmem>>, vector<72x128xbf16>
    tpu.vector_store %arg5[%c0_10, %c0_11], %16 {strides = array<i32>} : memref<72x128xbf16, #tpu.memory_space<vmem>>, vector<72x128xbf16>,
    return
  }
  func.func @transform_0(%arg0: i32) -> (i32, i32, i32) {
    %c0_i32 = arith.constant 0 : i32
    %c0_i32_0 = arith.constant 0 : i32
    %c0_i32_1 = arith.constant 0 : i32
    return %c0_i32, %arg0, %c0_i32_0 : i32, i32, i32
  }
  func.func @transform_1(%arg0: i32) -> (i32, i32) {
    %c0_i32 = arith.constant 0 : i32
    %c0_i32_0 = arith.constant 0 : i32
    %c0_i32_1 = arith.constant 0 : i32
    return %c0_i32, %c0_i32_0 : i32, i32
  }
  func.func @transform_2(%arg0: i32) -> (i32, i32) {
    %c0_i32 = arith.constant 0 : i32
    %c0_i32_0 = arith.constant 0 : i32
    %c0_i32_1 = arith.constant 0 : i32
    return %c0_i32, %c0_i32_0 : i32, i32
  }
  func.func @transform_3(%arg0: i32) -> (i32, i32) {
    %c0_i32 = arith.constant 0 : i32
    %c0_i32_0 = arith.constant 0 : i32
    %c0_i32_1 = arith.constant 0 : i32
    return %c0_i32, %c0_i32_0 : i32, i32
  }
  func.func @transform_4(%arg0: i32) -> (i32, i32) {
    %c0_i32 = arith.constant 0 : i32
    %c0_i32_0 = arith.constant 0 : i32
    return %arg0, %c0_i32 : i32, i32
  }
}

module attributes {stable_mosaic.version = 11 : i64} {
  func.func @_stats_matmul_kernel(%arg0: i32, %arg1: memref<32x1600xbf16, #tpu.memory_space<vmem>>, %arg2: memref<1600x64xbf16, #tpu.memory_space<vmem>>, %arg3: memref<1x64xf32, #tpu.memory_space<vmem>>, %arg4: memref<32x64xbf16, #tpu.memory_space<vmem>>, %arg5: memref<1x1x128xf32, #tpu.memory_space<vmem>>) attributes {dimension_semantics = [#tpu.dimension_semantics<parallel>], iteration_bounds = array<i64: 2>, scalar_prefetch = 0 : i64, scratch_operands = 0 : i64, tpu.core_type = #tpu.core_type<tc>, window_params = [{transform_indices = @transform_0, window_bounds = array<i64: 32, 1600>}, {pipeline_mode = #tpu.pipeline_mode<synchronous>, transform_indices = @transform_1, window_bounds = array<i64: 1600, 64>}, {pipeline_mode = #tpu.pipeline_mode<synchronous>, transform_indices = @transform_2, window_bounds = array<i64: 1, 64>}, {transform_indices = @transform_3, window_bounds = array<i64: 32, 64>}, {transform_indices = @transform_4, window_bounds = array<i64: 1, 1, 128>}]} {
    %c0 = arith.constant 0 : index
    %c0_0 = arith.constant 0 : index
    %0 = vector.load %arg1[%c0, %c0_0] : memref<32x1600xbf16, #tpu.memory_space<vmem>>, vector<32x1600xbf16>
    %c0_1 = arith.constant 0 : index
    %c0_2 = arith.constant 0 : index
    %1 = vector.load %arg2[%c0_1, %c0_2] : memref<1600x64xbf16, #tpu.memory_space<vmem>>, vector<1600x64xbf16>
    %cst = arith.constant dense<0.000000e+00> : vector<32x64xf32>
    %2 = tpu.matmul %0, %1, %cst {dimension_numbers = #tpu.dot_dimension_numbers<[1], [0], [0], [1], [0, 0, 1, 1], [], []>} : vector<32x1600xbf16>, vector<1600x64xbf16>, vector<32x64xf32> -> vector<32x64xf32>
    %c0_3 = arith.constant 0 : index
    %c0_4 = arith.constant 0 : index
    %3 = vector.load %arg3[%c0_3, %c0_4] : memref<1x64xf32, #tpu.memory_space<vmem>>, vector<1x64xf32>
    %4 = vector.broadcast %3 : vector<1x64xf32> to vector<32x64xf32>
    %5 = arith.addf %2, %4 : vector<32x64xf32>
    %6 = arith.truncf %5 : vector<32x64xf32> to vector<32x64xbf16>
    %c0_5 = arith.constant 0 : index
    %c0_6 = arith.constant 0 : index
    %7 = vector.load %arg4[%c0_5, %c0_6] : memref<32x64xbf16, #tpu.memory_space<vmem>>, vector<32x64xbf16>
    tpu.vector_store %arg4[%c0_5, %c0_6], %6 {strides = array<i32>} : memref<32x64xbf16, #tpu.memory_space<vmem>>, vector<32x64xbf16>,
    %c32_i32 = arith.constant 32 : i32
    %8 = arith.muli %arg0, %c32_i32 : i32
    %9 = tpu.iota {dimensions = array<i32: 0>} : vector<32x1xi32>
    %10 = vector.broadcast %8 : i32 to vector<32x1xi32>
    %11 = arith.addi %10, %9 : vector<32x1xi32>
    %c50_i32 = arith.constant 50 : i32
    %12 = vector.broadcast %c50_i32 : i32 to vector<32x1xi32>
    %13 = arith.cmpi slt, %11, %12 : vector<32x1xi32>
    %cst_7 = arith.constant 0.000000e+00 : f32
    %14 = vector.shape_cast %13 : vector<32x1xi1> to vector<32x1xi1>
    %15 = vector.broadcast %14 : vector<32x1xi1> to vector<32x64xi1>
    %16 = vector.broadcast %cst_7 : f32 to vector<32x64xf32>
    %17 = arith.select %15, %5, %16 : vector<32x64xi1>, vector<32x64xf32>
    %cst_8 = arith.constant dense<0.000000e+00> : vector<64xf32>
    %18 = vector.multi_reduction <add>, %17, %cst_8 [0] : vector<32x64xf32> to vector<64xf32>
    %19 = vector.shape_cast %18 : vector<64xf32> to vector<1x64xf32>
    %20 = arith.mulf %17, %17 : vector<32x64xf32>
    %cst_9 = arith.constant dense<0.000000e+00> : vector<64xf32>
    %21 = vector.multi_reduction <add>, %20, %cst_9 [0] : vector<32x64xf32> to vector<64xf32>
    %22 = vector.shape_cast %21 : vector<64xf32> to vector<1x64xf32>
    %23 = tpu.concatenate %19, %22 in 1 : vector<1x64xf32>, vector<1x64xf32> -> vector<1x128xf32>
    %24 = vector.shape_cast %23 : vector<1x128xf32> to vector<1x1x128xf32>
    %c0_10 = arith.constant 0 : index
    %c0_11 = arith.constant 0 : index
    %c0_12 = arith.constant 0 : index
    %25 = vector.load %arg5[%c0_10, %c0_11, %c0_12] : memref<1x1x128xf32, #tpu.memory_space<vmem>>, vector<1x1x128xf32>
    tpu.vector_store %arg5[%c0_10, %c0_11, %c0_12], %24 {strides = array<i32>} : memref<1x1x128xf32, #tpu.memory_space<vmem>>, vector<1x1x128xf32>,
    return
  }
  func.func @transform_0(%arg0: i32) -> (i32, i32) {
    %c0_i32 = arith.constant 0 : i32
    %c0_i32_0 = arith.constant 0 : i32
    return %arg0, %c0_i32 : i32, i32
  }
  func.func @transform_1(%arg0: i32) -> (i32, i32) {
    %c0_i32 = arith.constant 0 : i32
    %c0_i32_0 = arith.constant 0 : i32
    %c0_i32_1 = arith.constant 0 : i32
    return %c0_i32, %c0_i32_0 : i32, i32
  }
  func.func @transform_2(%arg0: i32) -> (i32, i32) {
    %c0_i32 = arith.constant 0 : i32
    %c0_i32_0 = arith.constant 0 : i32
    %c0_i32_1 = arith.constant 0 : i32
    return %c0_i32, %c0_i32_0 : i32, i32
  }
  func.func @transform_3(%arg0: i32) -> (i32, i32) {
    %c0_i32 = arith.constant 0 : i32
    %c0_i32_0 = arith.constant 0 : i32
    return %arg0, %c0_i32 : i32, i32
  }
  func.func @transform_4(%arg0: i32) -> (i32, i32, i32) {
    %c0_i32 = arith.constant 0 : i32
    %c0_i32_0 = arith.constant 0 : i32
    %c0_i32_1 = arith.constant 0 : i32
    return %arg0, %c0_i32, %c0_i32_0 : i32, i32, i32
  }
}

module attributes {stable_mosaic.version = 11 : i64} {
  func.func @_stats_matmul_kernel(%arg0: i32, %arg1: memref<16x1600xbf16, #tpu.memory_space<vmem>>, %arg2: memref<1600x128xbf16, #tpu.memory_space<vmem>>, %arg3: memref<1x128xf32, #tpu.memory_space<vmem>>, %arg4: memref<1x1600xf32, #tpu.memory_space<vmem>>, %arg5: memref<1x1600xf32, #tpu.memory_space<vmem>>, %arg6: memref<16x128xbf16, #tpu.memory_space<vmem>>, %arg7: memref<1x1x256xf32, #tpu.memory_space<vmem>>) attributes {dimension_semantics = [#tpu.dimension_semantics<parallel>], iteration_bounds = array<i64: 2>, scalar_prefetch = 0 : i64, scratch_operands = 0 : i64, tpu.core_type = #tpu.core_type<tc>, window_params = [{transform_indices = @transform_0, window_bounds = array<i64: 16, 1600>}, {pipeline_mode = #tpu.pipeline_mode<synchronous>, transform_indices = @transform_1, window_bounds = array<i64: 1600, 128>}, {pipeline_mode = #tpu.pipeline_mode<synchronous>, transform_indices = @transform_2, window_bounds = array<i64: 1, 128>}, {pipeline_mode = #tpu.pipeline_mode<synchronous>, transform_indices = @transform_3, window_bounds = array<i64: 1, 1600>}, {pipeline_mode = #tpu.pipeline_mode<synchronous>, transform_indices = @transform_4, window_bounds = array<i64: 1, 1600>}, {transform_indices = @transform_5, window_bounds = array<i64: 16, 128>}, {transform_indices = @transform_6, window_bounds = array<i64: 1, 1, 256>}]} {
    %c0 = arith.constant 0 : index
    %c0_0 = arith.constant 0 : index
    %0 = vector.load %arg1[%c0, %c0_0] : memref<16x1600xbf16, #tpu.memory_space<vmem>>, vector<16x1600xbf16>
    %1 = arith.extf %0 : vector<16x1600xbf16> to vector<16x1600xf32>
    %c0_1 = arith.constant 0 : index
    %c0_2 = arith.constant 0 : index
    %2 = vector.load %arg4[%c0_1, %c0_2] : memref<1x1600xf32, #tpu.memory_space<vmem>>, vector<1x1600xf32>
    %3 = vector.broadcast %2 : vector<1x1600xf32> to vector<16x1600xf32>
    %4 = arith.mulf %1, %3 : vector<16x1600xf32>
    %c0_3 = arith.constant 0 : index
    %c0_4 = arith.constant 0 : index
    %5 = vector.load %arg5[%c0_3, %c0_4] : memref<1x1600xf32, #tpu.memory_space<vmem>>, vector<1x1600xf32>
    %6 = vector.broadcast %5 : vector<1x1600xf32> to vector<16x1600xf32>
    %7 = arith.addf %4, %6 : vector<16x1600xf32>
    %cst = arith.constant 0.000000e+00 : f32
    %8 = vector.broadcast %cst : f32 to vector<16x1600xf32>
    %9 = arith.maximumf %7, %8 : vector<16x1600xf32>
    %10 = arith.truncf %9 : vector<16x1600xf32> to vector<16x1600xbf16>
    %c0_5 = arith.constant 0 : index
    %c0_6 = arith.constant 0 : index
    %11 = vector.load %arg2[%c0_5, %c0_6] : memref<1600x128xbf16, #tpu.memory_space<vmem>>, vector<1600x128xbf16>
    %cst_7 = arith.constant dense<0.000000e+00> : vector<16x128xf32>
    %12 = tpu.matmul %10, %11, %cst_7 {dimension_numbers = #tpu.dot_dimension_numbers<[1], [0], [0], [1], [0, 0, 1, 1], [], []>} : vector<16x1600xbf16>, vector<1600x128xbf16>, vector<16x128xf32> -> vector<16x128xf32>
    %c0_8 = arith.constant 0 : index
    %c0_9 = arith.constant 0 : index
    %13 = vector.load %arg3[%c0_8, %c0_9] : memref<1x128xf32, #tpu.memory_space<vmem>>, vector<1x128xf32>
    %14 = vector.broadcast %13 : vector<1x128xf32> to vector<16x128xf32>
    %15 = arith.addf %12, %14 : vector<16x128xf32>
    %16 = arith.truncf %15 : vector<16x128xf32> to vector<16x128xbf16>
    %c0_10 = arith.constant 0 : index
    %c0_11 = arith.constant 0 : index
    %17 = vector.load %arg6[%c0_10, %c0_11] : memref<16x128xbf16, #tpu.memory_space<vmem>>, vector<16x128xbf16>
    tpu.vector_store %arg6[%c0_10, %c0_11], %16 {strides = array<i32>} : memref<16x128xbf16, #tpu.memory_space<vmem>>, vector<16x128xbf16>,
    %c16_i32 = arith.constant 16 : i32
    %18 = arith.muli %arg0, %c16_i32 : i32
    %19 = tpu.iota {dimensions = array<i32: 0>} : vector<16x1xi32>
    %20 = vector.broadcast %18 : i32 to vector<16x1xi32>
    %21 = arith.addi %20, %19 : vector<16x1xi32>
    %c18_i32 = arith.constant 18 : i32
    %22 = vector.broadcast %c18_i32 : i32 to vector<16x1xi32>
    %23 = arith.cmpi slt, %21, %22 : vector<16x1xi32>
    %cst_12 = arith.constant 0.000000e+00 : f32
    %24 = vector.shape_cast %23 : vector<16x1xi1> to vector<16x1xi1>
    %25 = vector.broadcast %24 : vector<16x1xi1> to vector<16x128xi1>
    %26 = vector.broadcast %cst_12 : f32 to vector<16x128xf32>
    %27 = arith.select %25, %15, %26 : vector<16x128xi1>, vector<16x128xf32>
    %cst_13 = arith.constant dense<0.000000e+00> : vector<128xf32>
    %28 = vector.multi_reduction <add>, %27, %cst_13 [0] : vector<16x128xf32> to vector<128xf32>
    %29 = vector.shape_cast %28 : vector<128xf32> to vector<1x128xf32>
    %30 = arith.mulf %27, %27 : vector<16x128xf32>
    %cst_14 = arith.constant dense<0.000000e+00> : vector<128xf32>
    %31 = vector.multi_reduction <add>, %30, %cst_14 [0] : vector<16x128xf32> to vector<128xf32>
    %32 = vector.shape_cast %31 : vector<128xf32> to vector<1x128xf32>
    %33 = tpu.concatenate %29, %32 in 1 : vector<1x128xf32>, vector<1x128xf32> -> vector<1x256xf32>
    %34 = vector.shape_cast %33 : vector<1x256xf32> to vector<1x1x256xf32>
    %c0_15 = arith.constant 0 : index
    %c0_16 = arith.constant 0 : index
    %c0_17 = arith.constant 0 : index
    %35 = vector.load %arg7[%c0_15, %c0_16, %c0_17] : memref<1x1x256xf32, #tpu.memory_space<vmem>>, vector<1x1x256xf32>
    tpu.vector_store %arg7[%c0_15, %c0_16, %c0_17], %34 {strides = array<i32>} : memref<1x1x256xf32, #tpu.memory_space<vmem>>, vector<1x1x256xf32>,
    return
  }
  func.func @transform_0(%arg0: i32) -> (i32, i32) {
    %c0_i32 = arith.constant 0 : i32
    %c0_i32_0 = arith.constant 0 : i32
    return %arg0, %c0_i32 : i32, i32
  }
  func.func @transform_1(%arg0: i32) -> (i32, i32) {
    %c0_i32 = arith.constant 0 : i32
    %c0_i32_0 = arith.constant 0 : i32
    %c0_i32_1 = arith.constant 0 : i32
    return %c0_i32, %c0_i32_0 : i32, i32
  }
  func.func @transform_2(%arg0: i32) -> (i32, i32) {
    %c0_i32 = arith.constant 0 : i32
    %c0_i32_0 = arith.constant 0 : i32
    %c0_i32_1 = arith.constant 0 : i32
    return %c0_i32, %c0_i32_0 : i32, i32
  }
  func.func @transform_3(%arg0: i32) -> (i32, i32) {
    %c0_i32 = arith.constant 0 : i32
    %c0_i32_0 = arith.constant 0 : i32
    %c0_i32_1 = arith.constant 0 : i32
    return %c0_i32, %c0_i32_0 : i32, i32
  }
  func.func @transform_4(%arg0: i32) -> (i32, i32) {
    %c0_i32 = arith.constant 0 : i32
    %c0_i32_0 = arith.constant 0 : i32
    %c0_i32_1 = arith.constant 0 : i32
    return %c0_i32, %c0_i32_0 : i32, i32
  }
  func.func @transform_5(%arg0: i32) -> (i32, i32) {
    %c0_i32 = arith.constant 0 : i32
    %c0_i32_0 = arith.constant 0 : i32
    return %arg0, %c0_i32 : i32, i32
  }
  func.func @transform_6(%arg0: i32) -> (i32, i32, i32) {
    %c0_i32 = arith.constant 0 : i32
    %c0_i32_0 = arith.constant 0 : i32
    %c0_i32_1 = arith.constant 0 : i32
    return %arg0, %c0_i32, %c0_i32_0 : i32, i32, i32
  }
}

module attributes {stable_mosaic.version = 11 : i64} {
  func.func @_bn_relu_kernel(%arg0: i32, %arg1: memref<16x128xbf16, #tpu.memory_space<vmem>>, %arg2: memref<1x128xf32, #tpu.memory_space<vmem>>, %arg3: memref<1x128xf32, #tpu.memory_space<vmem>>, %arg4: memref<16x128xf32, #tpu.memory_space<vmem>>) attributes {dimension_semantics = [#tpu.dimension_semantics<parallel>], iteration_bounds = array<i64: 2>, scalar_prefetch = 0 : i64, scratch_operands = 0 : i64, tpu.core_type = #tpu.core_type<tc>, window_params = [{transform_indices = @transform_0, window_bounds = array<i64: 16, 128>}, {pipeline_mode = #tpu.pipeline_mode<synchronous>, transform_indices = @transform_1, window_bounds = array<i64: 1, 128>}, {pipeline_mode = #tpu.pipeline_mode<synchronous>, transform_indices = @transform_2, window_bounds = array<i64: 1, 128>}, {transform_indices = @transform_3, window_bounds = array<i64: 16, 128>}]} {
    %c0 = arith.constant 0 : index
    %c0_0 = arith.constant 0 : index
    %0 = vector.load %arg1[%c0, %c0_0] : memref<16x128xbf16, #tpu.memory_space<vmem>>, vector<16x128xbf16>
    %1 = arith.extf %0 : vector<16x128xbf16> to vector<16x128xf32>
    %c0_1 = arith.constant 0 : index
    %c0_2 = arith.constant 0 : index
    %2 = vector.load %arg2[%c0_1, %c0_2] : memref<1x128xf32, #tpu.memory_space<vmem>>, vector<1x128xf32>
    %3 = vector.broadcast %2 : vector<1x128xf32> to vector<16x128xf32>
    %4 = arith.mulf %1, %3 : vector<16x128xf32>
    %c0_3 = arith.constant 0 : index
    %c0_4 = arith.constant 0 : index
    %5 = vector.load %arg3[%c0_3, %c0_4] : memref<1x128xf32, #tpu.memory_space<vmem>>, vector<1x128xf32>
    %6 = vector.broadcast %5 : vector<1x128xf32> to vector<16x128xf32>
    %7 = arith.addf %4, %6 : vector<16x128xf32>
    %cst = arith.constant 0.000000e+00 : f32
    %8 = vector.broadcast %cst : f32 to vector<16x128xf32>
    %9 = arith.maximumf %7, %8 : vector<16x128xf32>
    %c0_5 = arith.constant 0 : index
    %c0_6 = arith.constant 0 : index
    %10 = vector.load %arg4[%c0_5, %c0_6] : memref<16x128xf32, #tpu.memory_space<vmem>>, vector<16x128xf32>
    tpu.vector_store %arg4[%c0_5, %c0_6], %9 {strides = array<i32>} : memref<16x128xf32, #tpu.memory_space<vmem>>, vector<16x128xf32>,
    return
  }
  func.func @transform_0(%arg0: i32) -> (i32, i32) {
    %c0_i32 = arith.constant 0 : i32
    %c0_i32_0 = arith.constant 0 : i32
    return %arg0, %c0_i32 : i32, i32
  }
  func.func @transform_1(%arg0: i32) -> (i32, i32) {
    %c0_i32 = arith.constant 0 : i32
    %c0_i32_0 = arith.constant 0 : i32
    %c0_i32_1 = arith.constant 0 : i32
    return %c0_i32, %c0_i32_0 : i32, i32
  }
  func.func @transform_2(%arg0: i32) -> (i32, i32) {
    %c0_i32 = arith.constant 0 : i32
    %c0_i32_0 = arith.constant 0 : i32
    %c0_i32_1 = arith.constant 0 : i32
    return %c0_i32, %c0_i32_0 : i32, i32
  }
  func.func @transform_3(%arg0: i32) -> (i32, i32) {
    %c0_i32 = arith.constant 0 : i32
    %c0_i32_0 = arith.constant 0 : i32
    return %arg0, %c0_i32 : i32, i32
  }
}

</mosaic_0001>

<llo_original>
// kernel: svhn_feature_extractor.6
$region0: #{svhn_feature_extractor.6}
  #allocation0 [shape = 'u32[]', space=smem, size = 0x4, offset = 0x4, fixed_abs, tag = 'smem constant byte address 0x4 - core index']
  #allocation1 [shape = 'u32[72,128]{1,0:T(1,128)}', space=vmem, size = 0x9000, scoped, tag = 'internal scratch']
  %s0 = inlined_call_operand.vmem [shape: bf16[4,144,50], index: 0, kind: input, shape index: {}]
  %s1 = inlined_call_operand.vmem [shape: bf16[50,128], index: 1, kind: input, shape index: {}]
  %s2 = inlined_call_operand.vmem [shape: f32[1,128], index: 2, kind: input, shape index: {}]
  %s3 = inlined_call_operand.vmem [shape: f32[1,128], index: 3, kind: input, shape index: {}]
  %s4 = inlined_call_operand.vmem [shape: bf16[144,128], index: 4, kind: output, shape index: {}]
  %s5 = sld [smem:[#allocation0]]
  $region90: #{svhn_feature_extractor.6} parent=0
    _
  %s7 = ssub.s32 1, %s5
  %s8 = scalar_select 0, %s7, %s5
  $region1: #{svhn_feature_extractor.6} parent=0
    #allocation2 [shape = 'u8[147456]{0}', space=vmem, size = 0x24000, scoped, tag = 'input window, operand 0']
    loop: start=0, step=1, limit=4
    $region2: #{svhn_feature_extractor.6} parent=1 // loop_pre_header
      _
    $region3: #{svhn_feature_extractor.6} parent=1 // loop_header
      %s10 = sphi 0, %s14
      %p11 = scmp.ge.s32.totalorder %s10, 4
      %s20 = sphi 0, %s22
      %s23 = sphi 0, %s20
      %s24 = sphi 0, %s23
      %s40 = sphi 0, %s24
      %s44 = sphi 0, %s44
      %s46 = sphi 0, %s44
      %s47 = sphi 0, %s46
      %s61 = sphi 0, %s47
      %s65 = sphi 0, %s65
      %s67 = sphi 0, %s65
      %s68 = sphi 0, %s67
      %s82 = sphi 0, %s68
      %s86 = sphi 0, %s86
      %s88 = sphi 0, %s86
      %s89 = sphi 0, %s88
      %s103 = sphi 0, %s89
      %s109 = sphi 0, %s111
      %s112 = sphi 0, %s109
      %s113 = sphi 0, %s112
      %s129 = sphi 0, %s113
    $region4: #{svhn_feature_extractor.6} parent=1 // loop_header_branch
      %13 = sbr.rel (%p11) target = $region8
    $region5: #{svhn_feature_extractor.6} parent=1 // loop_body
      %s15 = ssub.s32 %s10, 1
      %s16 = ssub.s32 %s10, 2
      %s17 = sadd.s32 %s10, 1
      %s18 = ssub.s32 %s10, %s17
      %p19 = scmp.eq.s32.totalorder %s18, 0
      %s21 = sadd.s32 %s20, 1
      %s22 = scalar_select %p19, %s20, %s21
      %p25 = pneg %p19
      %p26 = scmp.eq.s32.totalorder %s10, 1
      %p27 = por %p25, %p26
      %p28 = scmp.ne.s32.totalorder %s20, %s23
      %p29 = scmp.eq.s32.totalorder %s10, 0
      %p30 = por %p28, %p29
      %p31 = scmp.ne.s32.totalorder %s20, %s23
      %p32 = scmp.eq.s32.totalorder %s15, 1
      %p33 = por %p31, %p32
      %p34 = scmp.ne.s32.totalorder %s23, %s24
      %p35 = scmp.eq.s32.totalorder %s15, 0
      %p36 = por %p34, %p35
      %p37 = scmp.ne.s32.totalorder %s23, %s24
      %p38 = scmp.eq.s32.totalorder %s16, 1
      %p39 = por %p37, %p38
      %p41 = scmp.ne.s32.totalorder %s24, %s40
      %p42 = scmp.eq.s32.totalorder %s16, 0
      %p43 = por %p41, %p42
      %s45 = sadd.s32 %s44, 1
      %p48 = scmp.eq.s32.totalorder %s10, 1
      %p49 = scmp.ne.s32.totalorder %s44, %s46
      %p50 = scmp.eq.s32.totalorder %s10, 0
      %p51 = por %p49, %p50
      %p52 = scmp.ne.s32.totalorder %s44, %s46
      %p53 = scmp.eq.s32.totalorder %s15, 1
      %p54 = por %p52, %p53
      %p55 = scmp.ne.s32.totalorder %s46, %s47
      %p56 = scmp.eq.s32.totalorder %s15, 0
      %p57 = por %p55, %p56
      %p58 = scmp.ne.s32.totalorder %s46, %s47
      %p59 = scmp.eq.s32.totalorder %s16, 1
      %p60 = por %p58, %p59
      %p62 = scmp.ne.s32.totalorder %s47, %s61
      %p63 = scmp.eq.s32.totalorder %s16, 0
      %p64 = por %p62, %p63
      %s66 = sadd.s32 %s65, 1
      %p69 = scmp.eq.s32.totalorder %s10, 1
      %p70 = scmp.ne.s32.totalorder %s65, %s67
      %p71 = scmp.eq.s32.totalorder %s10, 0
      %p72 = por %p70, %p71
      %p73 = scmp.ne.s32.totalorder %s65, %s67
      %p74 = scmp.eq.s32.totalorder %s15, 1
      %p75 = por %p73, %p74
      %p76 = scmp.ne.s32.totalorder %s67, %s68
      %p77 = scmp.eq.s32.totalorder %s15, 0
      %p78 = por %p76, %p77
      %p79 = scmp.ne.s32.totalorder %s67, %s68
      %p80 = scmp.eq.s32.totalorder %s16, 1
      %p81 = por %p79, %p80
      %p83 = scmp.ne.s32.totalorder %s68, %s82
      %p84 = scmp.eq.s32.totalorder %s16, 0
      %p85 = por %p83, %p84
      %s87 = sadd.s32 %s86, 1
      %p90 = scmp.eq.s32.totalorder %s10, 1
      %p91 = scmp.ne.s32.totalorder %s86, %s88
      %p92 = scmp.eq.s32.totalorder %s10, 0
      %p93 = por %p91, %p92
      %p94 = scmp.ne.s32.totalorder %s86, %s88
      %p95 = scmp.eq.s32.totalorder %s15, 1
      %p96 = por %p94, %p95
      %p97 = scmp.ne.s32.totalorder %s88, %s89
      %p98 = scmp.eq.s32.totalorder %s15, 0
      %p99 = por %p97, %p98
      %p100 = scmp.ne.s32.totalorder %s88, %s89
      %p101 = scmp.eq.s32.totalorder %s16, 1
      %p102 = por %p100, %p101
      %p104 = scmp.ne.s32.totalorder %s89, %s103
      %p105 = scmp.eq.s32.totalorder %s16, 0
      %p106 = por %p104, %p105
      %s107 = ssub.s32 %s10, %s17
      %p108 = scmp.eq.s32.totalorder %s107, 0
      %s110 = sadd.s32 %s109, 1
      %s111 = scalar_select %p108, %s109, %s110
      %p114 = pneg %p108
      %p115 = scmp.eq.s32.totalorder %s10, 1
      %p116 = por %p114, %p115
      %p117 = scmp.ne.s32.totalorder %s109, %s112
      %p118 = scmp.eq.s32.totalorder %s10, 0
      %p119 = por %p117, %p118
      %p120 = scmp.ne.s32.totalorder %s109, %s112
      %p121 = scmp.eq.s32.totalorder %s15, 1
      %p122 = por %p120, %p121
      %p123 = scmp.ne.s32.totalorder %s112, %s113
      %p124 = scmp.eq.s32.totalorder %s15, 0
      %p125 = por %p123, %p124
      %p126 = scmp.ne.s32.totalorder %s112, %s113
      %p127 = scmp.eq.s32.totalorder %s16, 1
      %p128 = por %p126, %p127
      %p130 = scmp.ne.s32.totalorder %s113, %s129
      %p131 = scmp.eq.s32.totalorder %s16, 0
      %p132 = por %p130, %p131
      %p133 = scmp.le.s32.totalorder 1, %s10
      %p134 = scmp.lt.s32.totalorder %s10, 3
      %p135 = pnand %p133, %p134
      %p136 = pneg %p135
      // Predicated region
      $region9: #{svhn_feature_extractor.6} parent=5 // pred_check
        _
      $region10: #{svhn_feature_extractor.6} parent=5 // pred_check_branch
        %138 = sbr.rel (%p135) target = $region12
      $region11: #{svhn_feature_extractor.6} parent=5 // pred_region
        %s139 = ssub.s32 %s10, 1
        // Predicated region
        $region13: #{svhn_feature_extractor.6} parent=11 // pred_check
          %p140 = pneg %p57
        $region14: #{svhn_feature_extractor.6} parent=11 // pred_check_branch
          %142 = sbr.rel (%p140) target = $region16
        $region15: #{svhn_feature_extractor.6} parent=11 // pred_region
          _
        $region16: #{svhn_feature_extractor.6} parent=11 // pred_fallthru
          _
        // Predicated region
        $region17: #{svhn_feature_extractor.6} parent=11 // pred_check
          %p143 = pneg %p78
        $region18: #{svhn_feature_extractor.6} parent=11 // pred_check_branch
          %145 = sbr.rel (%p143) target = $region20
        $region19: #{svhn_feature_extractor.6} parent=11 // pred_region
          _
        $region20: #{svhn_feature_extractor.6} parent=11 // pred_fallthru
          _
        // Predicated region
        $region21: #{svhn_feature_extractor.6} parent=11 // pred_check
          %p146 = pneg %p99
        $region22: #{svhn_feature_extractor.6} parent=11 // pred_check_branch
          %148 = sbr.rel (%p146) target = $region24
        $region23: #{svhn_feature_extractor.6} parent=11 // pred_region
          _
        $region24: #{svhn_feature_extractor.6} parent=11 // pred_fallthru
          _
      $region12: #{svhn_feature_extractor.6} parent=5 // pred_fallthru
        _
      %p149 = scmp.lt.s32.totalorder %s10, 2
      // Predicated region
      $region25: #{svhn_feature_extractor.6} parent=5 // pred_check
        %p150 = pneg %p149
      $region26: #{svhn_feature_extractor.6} parent=5 // pred_check_branch
        %152 = sbr.rel (%p150) target = $region28
      $region27: #{svhn_feature_extractor.6} parent=5 // pred_region
        // Predicated region
        $region29: #{svhn_feature_extractor.6} parent=27 // pred_check
          %p153 = pneg %p30
        $region30: #{svhn_feature_extractor.6} parent=27 // pred_check_branch
          %155 = sbr.rel (%p153) target = $region32
        $region31: #{svhn_feature_extractor.6} parent=27 // pred_region
          %s156 = sand.u32 %s20, 1
          %s157 = sand.u32 %s20, 1
          %s158 = smul.addr %s157, 144
          %s159 = scalar_lea.vmem [#allocation2], %s158
          %s160 = smul.u32 9, %s10
          %s161 = smul.addr %s160, 4
          %s162 = scalar_lea.vmem %s0, %s161
          // Predicated region
          $region33: #{svhn_feature_extractor.6} parent=31 // pred_check
            _
          $region34: #{svhn_feature_extractor.6} parent=31 // pred_check_branch
            %164 = sbr.rel (0) target = $region36
          $region35: #{svhn_feature_extractor.6} parent=31 // pred_region
            // Predicated region
            $region37: #{svhn_feature_extractor.6} parent=35 // pred_check
              _
            $region38: #{svhn_feature_extractor.6} parent=35 // pred_check_branch
              %166 = sbr.rel target = $region40
            $region39: #{svhn_feature_extractor.6} parent=35 // pred_region
              // Predicated region
              $region52: #{svhn_feature_extractor.6} parent=39 // pred_check
                _
              $region53: #{svhn_feature_extractor.6} parent=39 // pred_check_branch
                %252 = sbr.rel (0) target = $region55
              $region54: #{svhn_feature_extractor.6} parent=39 // pred_region
                loop: start=0, step=1, limit=1
                $region56: #{svhn_feature_extractor.6} parent=54 // loop_pre_header
                  _
                $region57: #{svhn_feature_extractor.6} parent=54 // loop_header
                  %s254 = sphi 0, %s258
                  %p255 = scmp.ge.s32.totalorder %s254, 1
                  %s259 = sphi %s162, %s162
                  %s260 = sphi %s159, %s159
                $region58: #{svhn_feature_extractor.6} parent=54 // loop_header_branch
                  %257 = sbr.rel (%p255) target = $region62
                $region59: #{svhn_feature_extractor.6} parent=54 // loop_body
                  _
                $region60: #{svhn_feature_extractor.6} parent=54 // loop_footer
                  %s258 = sadd.s32 1, %s254
                $region61: #{svhn_feature_extractor.6} parent=54 // loop_footer_branch
                  %253 = sbr.rel target = $region57
                $region62: #{svhn_feature_extractor.6} parent=54 // loop_exit
                  _
                %s262 = ssub.s32 16, 1
                loop: start=0, step=1, limit=1
                $region63: #{svhn_feature_extractor.6} parent=54 // loop_pre_header
                  _
                $region64: #{svhn_feature_extractor.6} parent=54 // loop_header
                  %s264 = sphi 0, %s268
                  %p265 = scmp.ge.s32.totalorder %s264, 1
                  %s269 = sphi %s162, %s162
                  %s270 = sphi %s159, %s159
                $region65: #{svhn_feature_extractor.6} parent=54 // loop_header_branch
                  %267 = sbr.rel (%p265) target = $region69
                $region66: #{svhn_feature_extractor.6} parent=54 // loop_body
                  %v271 = vld [vmem:[%s269] sm:%s262]
                  %272 = vst [vmem:[%s270] sm:%s262] %v271
                  %v273 = vld [vmem:[%s269 + $0x4] sm:%s262]
                  %274 = vst [vmem:[%s270 + $0x4] sm:%s262] %v273
                  %v275 = vld [vmem:[%s269 + $0x8] sm:%s262]
                  %276 = vst [vmem:[%s270 + $0x8] sm:%s262] %v275
                  %v277 = vld [vmem:[%s269 + $0xc] sm:%s262]
                  %278 = vst [vmem:[%s270 + $0xc] sm:%s262] %v277
                  %v279 = vld [vmem:[%s269 + $0x10] sm:%s262]
                  %280 = vst [vmem:[%s270 + $0x10] sm:%s262] %v279
                  %v281 = vld [vmem:[%s269 + $0x14] sm:%s262]
                  %282 = vst [vmem:[%s270 + $0x14] sm:%s262] %v281
                  %v283 = vld [vmem:[%s269 + $0x18] sm:%s262]
                  %284 = vst [vmem:[%s270 + $0x18] sm:%s262] %v283
                  %v285 = vld [vmem:[%s269 + $0x1c] sm:%s262]
                  %286 = vst [vmem:[%s270 + $0x1c] sm:%s262] %v285
                  %v287 = vld [vmem:[%s269 + $0x20] sm:%s262]
                  %288 = vst [vmem:[%s270 + $0x20] sm:%s262] %v287
                  %v289 = vld [vmem:[%s269 + $0x48] sm:%s262]
                  %290 = vst [vmem:[%s270 + $0x24] sm:%s262] %v289
                  %v291 = vld [vmem:[%s269 + $0x4c] sm:%s262]
                  %292 = vst [vmem:[%s270 + $0x28] sm:%s262] %v291
                  %v293 = vld [vmem:[%s269 + $0x50] sm:%s262]
                  %294 = vst [vmem:[%s270 + $0x2c] sm:%s262] %v293
                  %v295 = vld [vmem:[%s269 + $0x54] sm:%s262]
                  %296 = vst [vmem:[%s270 + $0x30] sm:%s262] %v295
                  %v297 = vld [vmem:[%s269 + $0x58] sm:%s262]
                  %298 = vst [vmem:[%s270 + $0x34] sm:%s262] %v297
                  %v299 = vld [vmem:[%s269 + $0x5c] sm:%s262]
                  %300 = vst [vmem:[%s270 + $0x38] sm:%s262] %v299
                  %v301 = vld [vmem:[%s269 + $0x60] sm:%s262]
                  %302 = vst [vmem:[%s270 + $0x3c] sm:%s262] %v301
                  %v303 = vld [vmem:[%s269 + $0x64] sm:%s262]
                  %304 = vst [vmem:[%s270 + $0x40] sm:%s262] %v303
                  %v305 = vld [vmem:[%s269 + $0x68] sm:%s262]
                  %306 = vst [vmem:[%s270 + $0x44] sm:%s262] %v305
                  %v307 = vld [vmem:[%s269 + $0x90] sm:%s262]
                  %308 = vst [vmem:[%s270 + $0x48] sm:%s262] %v307
                  %v309 = vld [vmem:[%s269 + $0x94] sm:%s262]
                  %310 = vst [vmem:[%s270 + $0x4c] sm:%s262] %v309
                  %v311 = vld [vmem:[%s269 + $0x98] sm:%s262]
                  %312 = vst [vmem:[%s270 + $0x50] sm:%s262] %v311
                  %v313 = vld [vmem:[%s269 + $0x9c] sm:%s262]
                  %314 = vst [vmem:[%s270 + $0x54] sm:%s262] %v313
                  %v315 = vld [vmem:[%s269 + $0xa0] sm:%s262]
                  %316 = vst [vmem:[%s270 + $0x58] sm:%s262] %v315
                  %v317 = vld [vmem:[%s269 + $0xa4] sm:%s262]
                  %318 = vst [vmem:[%s270 + $0x5c] sm:%s262] %v317
                  %v319 = vld [vmem:[%s269 + $0xa8] sm:%s262]
                  %320 = vst [vmem:[%s270 + $0x60] sm:%s262] %v319
                  %v321 = vld [vmem:[%s269 + $0xac] sm:%s262]
                  %322 = vst [vmem:[%s270 + $0x64] sm:%s262] %v321
                  %v323 = vld [vmem:[%s269 + $0xb0] sm:%s262]
                  %324 = vst [vmem:[%s270 + $0x68] sm:%s262] %v323
                  %v325 = vld [vmem:[%s269 + $0xd8] sm:%s262]
                  %326 = vst [vmem:[%s270 + $0x6c] sm:%s262] %v325
                  %v327 = vld [vmem:[%s269 + $0xdc] sm:%s262]
                  %328 = vst [vmem:[%s270 + $0x70] sm:%s262] %v327
                  %v329 = vld [vmem:[%s269 + $0xe0] sm:%s262]
                  %330 = vst [vmem:[%s270 + $0x74] sm:%s262] %v329
                  %v331 = vld [vmem:[%s269 + $0xe4] sm:%s262]
                  %332 = vst [vmem:[%s270 + $0x78] sm:%s262] %v331
                  %v333 = vld [vmem:[%s269 + $0xe8] sm:%s262]
                  %334 = vst [vmem:[%s270 + $0x7c] sm:%s262] %v333
                  %v335 = vld [vmem:[%s269 + $0xec] sm:%s262]
                  %336 = vst [vmem:[%s270 + $0x80] sm:%s262] %v335
                  %v337 = vld [vmem:[%s269 + $0xf0] sm:%s262]
                  %338 = vst [vmem:[%s270 + $0x84] sm:%s262] %v337
                  %v339 = vld [vmem:[%s269 + $0xf4] sm:%s262]
                  %340 = vst [vmem:[%s270 + $0x88] sm:%s262] %v339
                  %v341 = vld [vmem:[%s269 + $0xf8] sm:%s262]
                  %342 = vst [vmem:[%s270 + $0x8c] sm:%s262] %v341
                $region67: #{svhn_feature_extractor.6} parent=54 // loop_footer
                  %s268 = sadd.s32 1, %s264
                $region68: #{svhn_feature_extractor.6} parent=54 // loop_footer_branch
                  %263 = sbr.rel target = $region64
                $region69: #{svhn_feature_extractor.6} parent=54 // loop_exit
                  _
              $region55: #{svhn_feature_extractor.6} parent=39 // pred_fallthru
                _
            $region40: #{svhn_feature_extractor.6} parent=35 // pred_fallthru
              _
            // Predicated region
            $region41: #{svhn_feature_extractor.6} parent=35 // pred_check
              _
            $region42: #{svhn_feature_extractor.6} parent=35 // pred_check_branch
              %168 = sbr.rel (0) target = $region44
            $region43: #{svhn_feature_extractor.6} parent=35 // pred_region
              %s170 = ssub.s32 16, 1
              loop: start=0, step=1, limit=1
              $region45: #{svhn_feature_extractor.6} parent=43 // loop_pre_header
                _
              $region46: #{svhn_feature_extractor.6} parent=43 // loop_header
                %s172 = sphi 0, %s176
                %p173 = scmp.ge.s32.totalorder %s172, 1
                %s177 = sphi %s162, %s162
                %s178 = sphi %s159, %s159
              $region47: #{svhn_feature_extractor.6} parent=43 // loop_header_branch
                %175 = sbr.rel (%p173) target = $region51
              $region48: #{svhn_feature_extractor.6} parent=43 // loop_body
                %v179 = vld [vmem:[%s177] sm:%s170]
                %180 = vst [vmem:[%s178] sm:%s170] %v179
                %v181 = vld [vmem:[%s177 + $0x4] sm:%s170]
                %182 = vst [vmem:[%s178 + $0x4] sm:%s170] %v181
                %v183 = vld [vmem:[%s177 + $0x8] sm:%s170]
                %184 = vst [vmem:[%s178 + $0x8] sm:%s170] %v183
                %v185 = vld [vmem:[%s177 + $0xc] sm:%s170]
                %186 = vst [vmem:[%s178 + $0xc] sm:%s170] %v185
                %v187 = vld [vmem:[%s177 + $0x10] sm:%s170]
                %188 = vst [vmem:[%s178 + $0x10] sm:%s170] %v187
                %v189 = vld [vmem:[%s177 + $0x14] sm:%s170]
                %190 = vst [vmem:[%s178 + $0x14] sm:%s170] %v189
                %v191 = vld [vmem:[%s177 + $0x18] sm:%s170]
                %192 = vst [vmem:[%s178 + $0x18] sm:%s170] %v191
                %v193 = vld [vmem:[%s177 + $0x1c] sm:%s170]
                %194 = vst [vmem:[%s178 + $0x1c] sm:%s170] %v193
                %v195 = vld [vmem:[%s177 + $0x20] sm:%s170]
                %196 = vst [vmem:[%s178 + $0x20] sm:%s170] %v195
                %v197 = vld [vmem:[%s177 + $0x48] sm:%s170]
                %198 = vst [vmem:[%s178 + $0x24] sm:%s170] %v197
                %v199 = vld [vmem:[%s177 + $0x4c] sm:%s170]
                %200 = vst [vmem:[%s178 + $0x28] sm:%s170] %v199
                %v201 = vld [vmem:[%s177 + $0x50] sm:%s170]
                %202 = vst [vmem:[%s178 + $0x2c] sm:%s170] %v201
                %v203 = vld [vmem:[%s177 + $0x54] sm:%s170]
                %204 = vst [vmem:[%s178 + $0x30] sm:%s170] %v203
                %v205 = vld [vmem:[%s177 + $0x58] sm:%s170]
                %206 = vst [vmem:[%s178 + $0x34] sm:%s170] %v205
                %v207 = vld [vmem:[%s177 + $0x5c] sm:%s170]
                %208 = vst [vmem:[%s178 + $0x38] sm:%s170] %v207
                %v209 = vld [vmem:[%s177 + $0x60] sm:%s170]
                %210 = vst [vmem:[%s178 + $0x3c] sm:%s170] %v209
                %v211 = vld [vmem:[%s177 + $0x64] sm:%s170]
                %212 = vst [vmem:[%s178 + $0x40] sm:%s170] %v211
                %v213 = vld [vmem:[%s177 + $0x68] sm:%s170]
                %214 = vst [vmem:[%s178 + $0x44] sm:%s170] %v213
                %v215 = vld [vmem:[%s177 + $0x90] sm:%s170]
                %216 = vst [vmem:[%s178 + $0x48] sm:%s170] %v215
                %v217 = vld [vmem:[%s177 + $0x94] sm:%s170]
                %218 = vst [vmem:[%s178 + $0x4c] sm:%s170] %v217
                %v219 = vld [vmem:[%s177 + $0x98] sm:%s170]
                %220 = vst [vmem:[%s178 + $0x50] sm:%s170] %v219
                %v221 = vld [vmem:[%s177 + $0x9c] sm:%s170]
                %222 = vst [vmem:[%s178 + $0x54] sm:%s170] %v221
                %v223 = vld [vmem:[%s177 + $0xa0] sm:%s170]
                %224 = vst [vmem:[%s178 + $0x58] sm:%s170] %v223
                %v225 = vld [vmem:[%s177 + $0xa4] sm:%s170]
                %226 = vst [vmem:[%s178 + $0x5c] sm:%s170] %v225
                %v227 = vld [vmem:[%s177 + $0xa8] sm:%s170]
                %228 = vst [vmem:[%s178 + $0x60] sm:%s170] %v227
                %v229 = vld [vmem:[%s177 + $0xac] sm:%s170]
                %230 = vst [vmem:[%s178 + $0x64] sm:%s170] %v229
                %v231 = vld [vmem:[%s177 + $0xb0] sm:%s170]
                %232 = vst [vmem:[%s178 + $0x68] sm:%s170] %v231
                %v233 = vld [vmem:[%s177 + $0xd8] sm:%s170]
                %234 = vst [vmem:[%s178 + $0x6c] sm:%s170] %v233
                %v235 = vld [vmem:[%s177 + $0xdc] sm:%s170]
                %236 = vst [vmem:[%s178 + $0x70] sm:%s170] %v235
                %v237 = vld [vmem:[%s177 + $0xe0] sm:%s170]
                %238 = vst [vmem:[%s178 + $0x74] sm:%s170] %v237
                %v239 = vld [vmem:[%s177 + $0xe4] sm:%s170]
                %240 = vst [vmem:[%s178 + $0x78] sm:%s170] %v239
                %v241 = vld [vmem:[%s177 + $0xe8] sm:%s170]
                %242 = vst [vmem:[%s178 + $0x7c] sm:%s170] %v241
                %v243 = vld [vmem:[%s177 + $0xec] sm:%s170]
                %244 = vst [vmem:[%s178 + $0x80] sm:%s170] %v243
                %v245 = vld [vmem:[%s177 + $0xf0] sm:%s170]
                %246 = vst [vmem:[%s178 + $0x84] sm:%s170] %v245
                %v247 = vld [vmem:[%s177 + $0xf4] sm:%s170]
                %248 = vst [vmem:[%s178 + $0x88] sm:%s170] %v247
                %v249 = vld [vmem:[%s177 + $0xf8] sm:%s170]
                %250 = vst [vmem:[%s178 + $0x8c] sm:%s170] %v249
              $region49: #{svhn_feature_extractor.6} parent=43 // loop_footer
                %s176 = sadd.s32 1, %s172
              $region50: #{svhn_feature_extractor.6} parent=43 // loop_footer_branch
                %171 = sbr.rel target = $region46
              $region51: #{svhn_feature_extractor.6} parent=43 // loop_exit
                _
            $region44: #{svhn_feature_extractor.6} parent=35 // pred_fallthru
              _
          $region36: #{svhn_feature_extractor.6} parent=31 // pred_fallthru
            _
          %343 = vnop
        $region32: #{svhn_feature_extractor.6} parent=27 // pred_fallthru
          _
      $region28: #{svhn_feature_extractor.6} parent=5 // pred_fallthru
        _
      %p344 = scmp.le.s32.totalorder 1, %s10
      %p345 = scmp.lt.s32.totalorder %s10, 3
      %p346 = pnand %p344, %p345
      %p347 = pneg %p346
      // Predicated region
      $region70: #{svhn_feature_extractor.6} parent=5 // pred_check
        _
      $region71: #{svhn_feature_extractor.6} parent=5 // pred_check_branch
        %349 = sbr.rel (%p346) target = $region73
      $region72: #{svhn_feature_extractor.6} parent=5 // pred_region
        %s350 = ssub.s32 %s10, 1
        %s351 = sand.u32 %s23, 1
        %s352 = sand.u32 %s23, 1
        %s353 = smul.addr %s352, 144
        %s354 = scalar_lea.vmem [#allocation2], %s353
        // Predicated region
        $region74: #{svhn_feature_extractor.6} parent=72 // pred_check
          %p355 = pneg %p36
        $region75: #{svhn_feature_extractor.6} parent=72 // pred_check_branch
          %357 = sbr.rel (%p355) target = $region77
        $region76: #{svhn_feature_extractor.6} parent=72 // pred_region
          _
        $region77: #{svhn_feature_extractor.6} parent=72 // pred_fallthru
          _
        %s358 = sand.u32 %s23, 1
        %s359 = sand.u32 %s23, 1
        %s360 = smul.addr %s359, 144
        %s361 = scalar_lea.vmem [#allocation2], %s360
        %p362 = pneg %p36
        %p363 = pneg %p33
        %p364 = pneg %p57
        %p365 = pneg %p54
        %p366 = pneg %p78
        %p367 = pneg %p75
        %p368 = pneg %p99
        %p369 = pneg %p96
        %p370 = pneg %p125
        %p371 = pneg %p122
        %s372 = smul.u32 9, %s15
        %p373 = scmp.lt.s32.totalorder %s372, 17
        %s374 = scalar_select %p373, %s372, 17
        %s375 = smul.addr %s374, 4
        %s376 = scalar_lea.vmem %s4, %s375
        %s377 = smul.u32 9, %s15
        %s378 = smul.u32 9, %s15
        %p379 = scmp.lt.s32.totalorder %s378, 17
        %s380 = scalar_select %p379, %s378, 17
        %s381 = smul.addr %s380, 4
        %s382 = scalar_lea.vmem %s4, %s381
        %s383 = smul.u32 9, %s15
        %v385 = vld [vmem:[%s354] sm:$0xf]
        %v386 = vld [vmem:[%s354 + $0x4] sm:$0xf]
        %v387 = vld [vmem:[%s354 + $0x8] sm:$0xf]
        %v388 = vld [vmem:[%s354 + $0xc] sm:$0xf]
        %v389 = vld [vmem:[%s354 + $0x10] sm:$0xf]
        %v390 = vld [vmem:[%s354 + $0x14] sm:$0xf]
        %v391 = vld [vmem:[%s354 + $0x18] sm:$0xf]
        %v392 = vld [vmem:[%s354 + $0x1c] sm:$0xf]
        %v393 = vld [vmem:[%s354 + $0x20] sm:$0xf]
        %v394 = vld [vmem:[%s354 + $0x24] sm:$0xf]
        %v395 = vld [vmem:[%s354 + $0x28] sm:$0xf]
        %v396 = vld [vmem:[%s354 + $0x2c] sm:$0xf]
        %v397 = vld [vmem:[%s354 + $0x30] sm:$0xf]
        %v398 = vld [vmem:[%s354 + $0x34] sm:$0xf]
        %v399 = vld [vmem:[%s354 + $0x38] sm:$0xf]
        %v400 = vld [vmem:[%s354 + $0x3c] sm:$0xf]
        %v401 = vld [vmem:[%s354 + $0x40] sm:$0xf]
        %v402 = vld [vmem:[%s354 + $0x44] sm:$0xf]
        %v403 = vld [vmem:[%s354 + $0x48] sm:$0xf]
        %v404 = vld [vmem:[%s354 + $0x4c] sm:$0xf]
        %v405 = vld [vmem:[%s354 + $0x50] sm:$0xf]
        %v406 = vld [vmem:[%s354 + $0x54] sm:$0xf]
        %v407 = vld [vmem:[%s354 + $0x58] sm:$0xf]
        %v408 = vld [vmem:[%s354 + $0x5c] sm:$0xf]
        %v409 = vld [vmem:[%s354 + $0x60] sm:$0xf]
        %v410 = vld [vmem:[%s354 + $0x64] sm:$0xf]
        %v411 = vld [vmem:[%s354 + $0x68] sm:$0xf]
        %v412 = vld [vmem:[%s354 + $0x6c] sm:$0xf]
        %v413 = vld [vmem:[%s354 + $0x70] sm:$0xf]
        %v414 = vld [vmem:[%s354 + $0x74] sm:$0xf]
        %v415 = vld [vmem:[%s354 + $0x78] sm:$0xf]
        %v416 = vld [vmem:[%s354 + $0x7c] sm:$0xf]
        %v417 = vld [vmem:[%s354 + $0x80] sm:$0xf]
        %v418 = vld [vmem:[%s354 + $0x84] sm:$0xf]
        %v419 = vld [vmem:[%s354 + $0x88] sm:$0xf]
        %v420 = vld [vmem:[%s354 + $0x8c] sm:$0xf]
        %v421 = vld [vmem:[%s1] sm:$0xf]
        %v422 = vld [vmem:[%s1 + $0x4] sm:$0xf]
        %v423 = vld [vmem:[%s1 + $0x8] sm:$0xf]
        %v424 = vld [vmem:[%s1 + $0xc] sm:$0xf]
        %v425 = vld [vmem:[%s1 + $0x10] sm:$0xf]
        %v426 = vld [vmem:[%s1 + $0x14] sm:$0xf]
        %v427 = vld [vmem:[%s1 + $0x18] sm:$0x1]
        %v464 = vunpack.c.l.b16 %v385
        %v465 = vunpack.c.l.b16 %v386
        %v466 = vunpack.c.l.b16 %v387
        %v467 = vunpack.c.l.b16 %v388
        %v468 = vunpack.c.l.b16 %v389
        %v469 = vunpack.c.l.b16 %v390
        %v470 = vunpack.c.l.b16 %v391
        %v471 = vunpack.c.l.b16 %v392
        %v472 = vunpack.c.l.b16 %v393
        %v473 = vunpack.c.l.b16 %v394
        %v474 = vunpack.c.l.b16 %v395
        %v475 = vunpack.c.l.b16 %v396
        %v476 = vunpack.c.l.b16 %v397
        %v477 = vunpack.c.l.b16 %v398
        %v478 = vunpack.c.l.b16 %v399
        %v479 = vunpack.c.l.b16 %v400
        %v480 = vunpack.c.l.b16 %v401
        %v481 = vunpack.c.l.b16 %v402
        %v482 = vunpack.c.l.b16 %v403
        %v483 = vunpack.c.l.b16 %v404
        %v484 = vunpack.c.l.b16 %v405
        %v485 = vunpack.c.l.b16 %v406
        %v486 = vunpack.c.l.b16 %v407
        %v487 = vunpack.c.l.b16 %v408
        %v488 = vunpack.c.l.b16 %v409
        %v489 = vunpack.c.l.b16 %v410
        %v490 = vunpack.c.l.b16 %v411
        %v491 = vunpack.c.l.b16 %v412
        %v492 = vunpack.c.l.b16 %v413
        %v493 = vunpack.c.l.b16 %v414
        %v494 = vunpack.c.l.b16 %v415
        %v495 = vunpack.c.l.b16 %v416
        %v496 = vunpack.c.l.b16 %v417
        %v497 = vunpack.c.l.b16 %v418
        %v498 = vunpack.c.l.b16 %v419
        %v499 = vunpack.c.l.b16 %v420
        %v500 = vpack.c.b16 %v465, %v464
        %v501 = vpack.c.b16 %v467, %v466
        %v502 = vpack.c.b16 %v469, %v468
        %v503 = vpack.c.b16 %v471, %v470
        %v504 = vpack.c.b16 %v473, %v472
        %v505 = vpack.c.b16 %v475, %v474
        %v506 = vpack.c.b16 %v477, %v476
        %v507 = vpack.c.b16 %v479, %v478
        %v508 = vpack.c.b16 %v481, %v480
        %v509 = vpack.c.b16 %v483, %v482
        %v510 = vpack.c.b16 %v485, %v484
        %v511 = vpack.c.b16 %v487, %v486
        %v512 = vpack.c.b16 %v489, %v488
        %v513 = vpack.c.b16 %v491, %v490
        %v514 = vpack.c.b16 %v493, %v492
        %v515 = vpack.c.b16 %v495, %v494
        %v516 = vpack.c.b16 %v497, %v496
        %v517 = vpack.c.b16 %v499, %v498
        %v525 = vunpack.c.l.b16 %v421
        %v526 = vunpack.c.l.b16 %v422
        %v527 = vunpack.c.l.b16 %v423
        %v528 = vunpack.c.l.b16 %v424
        %v529 = vunpack.c.l.b16 %v425
        %v530 = vunpack.c.l.b16 %v426
        %v531 = vunpack.c.l.b16 %v427
        %v532 = vpack.c.b16 %v526, %v525
        %v533 = vpack.c.b16 %v528, %v527
        %v534 = vpack.c.b16 %v530, %v529
        %v535 = vpack.c.b16 %v531, %v531
        %vm539 = vcmask 408576
        %v541 = vsel %vm539, %v500, 0
        %v544 = vsel %vm539, %v501, 0
        %v547 = vsel %vm539, %v502, 0
        %v550 = vsel %vm539, %v503, 0
        %v553 = vsel %vm539, %v504, 0
        %v556 = vsel %vm539, %v505, 0
        %v559 = vsel %vm539, %v506, 0
        %v562 = vsel %vm539, %v507, 0
        %v565 = vsel %vm539, %v508, 0
        %v568 = vsel %vm539, %v509, 0
        %v571 = vsel %vm539, %v510, 0
        %v574 = vsel %vm539, %v511, 0
        %v577 = vsel %vm539, %v512, 0
        %v580 = vsel %vm539, %v513, 0
        %v583 = vsel %vm539, %v514, 0
        %v586 = vsel %vm539, %v515, 0
        %v589 = vsel %vm539, %v516, 0
        %v592 = vsel %vm539, %v517, 0
        %vm594 = vcmask 1040384
        %v596 = vsel %vm594, %v535, 0
        %598 = vmatpush.bf16.msra.mxu0 0
        %599 = vmatpush.bf16.msra.mxu0 0
        %600 = vmatpush.bf16.msra.mxu0 0
        %601 = vmatpush.bf16.msra.mxu0 0
        %602 = vmatpush.bf16.msra.mxu0 %v596
        %603 = vmatpush.bf16.msra.mxu0 %v534
        %604 = vmatpush.bf16.msra.mxu0 %v533
        %605 = vmatpush.bf16.msra.mxu0 %v532
        %606 = vmatmul.bf16.gmra.mxu0 %v541
        %v607 = vpop.f32.mrf.mxu0
        %v608 = vadd.f32 0.0, %v607
        %v609 = vpop.f32.mrf.mxu0
        %v610 = vadd.f32 0.0, %v609
        %611 = vmatmul.bf16.gmra.mxu0 %v544
        %v612 = vpop.f32.mrf.mxu0
        %v613 = vadd.f32 0.0, %v612
        %v614 = vpop.f32.mrf.mxu0
        %v615 = vadd.f32 0.0, %v614
        %616 = vmatmul.bf16.gmra.mxu0 %v547
        %v617 = vpop.f32.mrf.mxu0
        %v618 = vadd.f32 0.0, %v617
        %v619 = vpop.f32.mrf.mxu0
        %v620 = vadd.f32 0.0, %v619
        %621 = vmatmul.bf16.gmra.mxu0 %v550
        %v622 = vpop.f32.mrf.mxu0
        %v623 = vadd.f32 0.0, %v622
        %v624 = vpop.f32.mrf.mxu0
        %v625 = vadd.f32 0.0, %v624
        %626 = vmatmul.bf16.gmra.mxu0 %v553
        %v627 = vpop.f32.mrf.mxu0
        %v628 = vadd.f32 0.0, %v627
        %v629 = vpop.f32.mrf.mxu0
        %v630 = vadd.f32 0.0, %v629
        %631 = vmatmul.bf16.gmra.mxu0 %v556
        %v632 = vpop.f32.mrf.mxu0
        %v633 = vadd.f32 0.0, %v632
        %v634 = vpop.f32.mrf.mxu0
        %v635 = vadd.f32 0.0, %v634
        %636 = vmatmul.bf16.gmra.mxu0 %v559
        %v637 = vpop.f32.mrf.mxu0
        %v638 = vadd.f32 0.0, %v637
        %v639 = vpop.f32.mrf.mxu0
        %v640 = vadd.f32 0.0, %v639
        %641 = vmatmul.bf16.gmra.mxu0 %v562
        %v642 = vpop.f32.mrf.mxu0
        %v643 = vadd.f32 0.0, %v642
        %v644 = vpop.f32.mrf.mxu0
        %v645 = vadd.f32 0.0, %v644
        %646 = vmatmul.bf16.gmra.mxu0 %v565
        %v647 = vpop.f32.mrf.mxu0
        %v648 = vadd.f32 0.0, %v647
        %v649 = vpop.f32.mrf.mxu0
        %v650 = vadd.f32 0.0, %v649
        %651 = vmatmul.bf16.gmra.mxu0 %v568
        %v652 = vpop.f32.mrf.mxu0
        %v653 = vadd.f32 0.0, %v652
        %v654 = vpop.f32.mrf.mxu0
        %v655 = vadd.f32 0.0, %v654
        %656 = vmatmul.bf16.gmra.mxu0 %v571
        %v657 = vpop.f32.mrf.mxu0
        %v658 = vadd.f32 0.0, %v657
        %v659 = vpop.f32.mrf.mxu0
        %v660 = vadd.f32 0.0, %v659
        %661 = vmatmul.bf16.gmra.mxu0 %v574
        %v662 = vpop.f32.mrf.mxu0
        %v663 = vadd.f32 0.0, %v662
        %v664 = vpop.f32.mrf.mxu0
        %v665 = vadd.f32 0.0, %v664
        %666 = vmatmul.bf16.gmra.mxu0 %v577
        %v667 = vpop.f32.mrf.mxu0
        %v668 = vadd.f32 0.0, %v667
        %v669 = vpop.f32.mrf.mxu0
        %v670 = vadd.f32 0.0, %v669
        %671 = vmatmul.bf16.gmra.mxu0 %v580
        %v672 = vpop.f32.mrf.mxu0
        %v673 = vadd.f32 0.0, %v672
        %v674 = vpop.f32.mrf.mxu0
        %v675 = vadd.f32 0.0, %v674
        %676 = vmatmul.bf16.gmra.mxu0 %v583
        %v677 = vpop.f32.mrf.mxu0
        %v678 = vadd.f32 0.0, %v677
        %v679 = vpop.f32.mrf.mxu0
        %v680 = vadd.f32 0.0, %v679
        %681 = vmatmul.bf16.gmra.mxu0 %v586
        %v682 = vpop.f32.mrf.mxu0
        %v683 = vadd.f32 0.0, %v682
        %v684 = vpop.f32.mrf.mxu0
        %v685 = vadd.f32 0.0, %v684
        %686 = vmatmul.bf16.gmra.mxu0 %v589
        %v687 = vpop.f32.mrf.mxu0
        %v688 = vadd.f32 0.0, %v687
        %v689 = vpop.f32.mrf.mxu0
        %v690 = vadd.f32 0.0, %v689
        %691 = vmatmul.bf16.gmra.mxu0 %v592
        %v692 = vpop.f32.mrf.mxu0
        %v693 = vadd.f32 0.0, %v692
        %v694 = vpop.f32.mrf.mxu0
        %v695 = vadd.f32 0.0, %v694
        %696 = vdwg.mxu0
        %v697 = vld [vmem:[%s2] sm:$0x1]
        %v699 = vperm.slane %v697, 0
        %v701 = vmul.f32 %v608, %v699
        %v702 = vmul.f32 %v610, %v699
        %v703 = vmul.f32 %v613, %v699
        %v704 = vmul.f32 %v615, %v699
        %v705 = vmul.f32 %v618, %v699
        %v706 = vmul.f32 %v620, %v699
        %v707 = vmul.f32 %v623, %v699
        %v708 = vmul.f32 %v625, %v699
        %v709 = vmul.f32 %v628, %v699
        %v710 = vmul.f32 %v630, %v699
        %v711 = vmul.f32 %v633, %v699
        %v712 = vmul.f32 %v635, %v699
        %v713 = vmul.f32 %v638, %v699
        %v714 = vmul.f32 %v640, %v699
        %v715 = vmul.f32 %v643, %v699
        %v716 = vmul.f32 %v645, %v699
        %v717 = vmul.f32 %v648, %v699
        %v718 = vmul.f32 %v650, %v699
        %v719 = vmul.f32 %v653, %v699
        %v720 = vmul.f32 %v655, %v699
        %v721 = vmul.f32 %v658, %v699
        %v722 = vmul.f32 %v660, %v699
        %v723 = vmul.f32 %v663, %v699
        %v724 = vmul.f32 %v665, %v699
        %v725 = vmul.f32 %v668, %v699
        %v726 = vmul.f32 %v670, %v699
        %v727 = vmul.f32 %v673, %v699
        %v728 = vmul.f32 %v675, %v699
        %v729 = vmul.f32 %v678, %v699
        %v730 = vmul.f32 %v680, %v699
        %v731 = vmul.f32 %v683, %v699
        %v732 = vmul.f32 %v685, %v699
        %v733 = vmul.f32 %v688, %v699
        %v734 = vmul.f32 %v690, %v699
        %v735 = vmul.f32 %v693, %v699
        %v736 = vmul.f32 %v695, %v699
        %v737 = vld [vmem:[%s3] sm:$0x1]
        %v739 = vperm.slane %v737, 0
        %v741 = vadd.f32 %v701, %v739
        %v742 = vadd.f32 %v702, %v739
        %v743 = vadd.f32 %v703, %v739
        %v744 = vadd.f32 %v704, %v739
        %v745 = vadd.f32 %v705, %v739
        %v746 = vadd.f32 %v706, %v739
        %v747 = vadd.f32 %v707, %v739
        %v748 = vadd.f32 %v708, %v739
        %v749 = vadd.f32 %v709, %v739
        %v750 = vadd.f32 %v710, %v739
        %v751 = vadd.f32 %v711, %v739
        %v752 = vadd.f32 %v712, %v739
        %v753 = vadd.f32 %v713, %v739
        %v754 = vadd.f32 %v714, %v739
        %v755 = vadd.f32 %v715, %v739
        %v756 = vadd.f32 %v716, %v739
        %v757 = vadd.f32 %v717, %v739
        %v758 = vadd.f32 %v718, %v739
        %v759 = vadd.f32 %v719, %v739
        %v760 = vadd.f32 %v720, %v739
        %v761 = vadd.f32 %v721, %v739
        %v762 = vadd.f32 %v722, %v739
        %v763 = vadd.f32 %v723, %v739
        %v764 = vadd.f32 %v724, %v739
        %v765 = vadd.f32 %v725, %v739
        %v766 = vadd.f32 %v726, %v739
        %v767 = vadd.f32 %v727, %v739
        %v768 = vadd.f32 %v728, %v739
        %v769 = vadd.f32 %v729, %v739
        %v770 = vadd.f32 %v730, %v739
        %v771 = vadd.f32 %v731, %v739
        %v772 = vadd.f32 %v732, %v739
        %v773 = vadd.f32 %v733, %v739
        %v774 = vadd.f32 %v734, %v739
        %v775 = vadd.f32 %v735, %v739
        %v776 = vadd.f32 %v736, %v739
        %v777 = vmax.f32 %v741, %v750
        %v778 = vmax.f32 %v777, %v759
        %v779 = vmax.f32 %v778, %v768
        %v780 = vmax.f32 %v742, %v751
        %v781 = vmax.f32 %v780, %v760
        %v782 = vmax.f32 %v781, %v769
        %v783 = vmax.f32 %v743, %v752
        %v784 = vmax.f32 %v783, %v761
        %v785 = vmax.f32 %v784, %v770
        %v786 = vmax.f32 %v744, %v753
        %v787 = vmax.f32 %v786, %v762
        %v788 = vmax.f32 %v787, %v771
        %v789 = vmax.f32 %v745, %v754
        %v790 = vmax.f32 %v789, %v763
        %v791 = vmax.f32 %v790, %v772
        %v792 = vmax.f32 %v746, %v755
        %v793 = vmax.f32 %v792, %v764
        %v794 = vmax.f32 %v793, %v773
        %v795 = vmax.f32 %v747, %v756
        %v796 = vmax.f32 %v795, %v765
        %v797 = vmax.f32 %v796, %v774
        %v798 = vmax.f32 %v748, %v757
        %v799 = vmax.f32 %v798, %v766
        %v800 = vmax.f32 %v799, %v775
        %v801 = vmax.f32 %v749, %v758
        %v802 = vmax.f32 %v801, %v767
        %v803 = vmax.f32 %v802, %v776
        %v804 = vmax.f32 %v779, 0.0
        %v805 = vmax.f32 %v782, 0.0
        %v806 = vmax.f32 %v785, 0.0
        %v807 = vmax.f32 %v788, 0.0
        %v808 = vmax.f32 %v791, 0.0
        %v809 = vmax.f32 %v794, 0.0
        %v810 = vmax.f32 %v797, 0.0
        %v811 = vmax.f32 %v800, 0.0
        %v812 = vmax.f32 %v803, 0.0
        %v813 = vpack.c.bf16 %v804, %v804
        %v814 = vpack.c.bf16 %v805, %v805
        %v815 = vpack.c.bf16 %v806, %v806
        %v816 = vpack.c.bf16 %v807, %v807
        %v817 = vpack.c.bf16 %v808, %v808
        %v818 = vpack.c.bf16 %v809, %v809
        %v819 = vpack.c.bf16 %v810, %v810
        %v820 = vpack.c.bf16 %v811, %v811
        %v821 = vpack.c.bf16 %v812, %v812
        %822 = vst [vmem:[%s382] sm:$0xf] %v813
        %823 = vst [vmem:[%s382 + $0x4] sm:$0xf] %v814
        %824 = vst [vmem:[%s382 + $0x8] sm:$0xf] %v815
        %825 = vst [vmem:[%s382 + $0xc] sm:$0xf] %v816
        %826 = vst [vmem:[%s382 + $0x10] sm:$0xf] %v817
        %827 = vst [vmem:[%s382 + $0x14] sm:$0xf] %v818
        %828 = vst [vmem:[%s382 + $0x18] sm:$0xf] %v819
        %829 = vst [vmem:[%s382 + $0x1c] sm:$0xf] %v820
        %830 = vst [vmem:[%s382 + $0x20] sm:$0xf] %v821
        %s831 = smul.u32 9, %s15
        %p832 = scmp.lt.s32.totalorder %s831, 17
        %s833 = scalar_select %p832, %s831, 17
        %s834 = smul.addr %s833, 4
        %s835 = scalar_lea.vmem %s4, %s834
        // Predicated region
        $region78: #{svhn_feature_extractor.6} parent=72 // pred_check
          %p836 = pneg %p122
        $region79: #{svhn_feature_extractor.6} parent=72 // pred_check_branch
          %838 = sbr.rel (%p836) target = $region81
        $region80: #{svhn_feature_extractor.6} parent=72 // pred_region
          %s839 = smul.u32 9, %s15
        $region81: #{svhn_feature_extractor.6} parent=72 // pred_fallthru
          _
      $region73: #{svhn_feature_extractor.6} parent=5 // pred_fallthru
        _
      %p840 = scmp.le.s32.totalorder 2, %s10
      // Predicated region
      $region82: #{svhn_feature_extractor.6} parent=5 // pred_check
        %p841 = pneg %p840
      $region83: #{svhn_feature_extractor.6} parent=5 // pred_check_branch
        %843 = sbr.rel (%p841) target = $region85
      $region84: #{svhn_feature_extractor.6} parent=5 // pred_region
        %s844 = ssub.s32 %s10, 2
        // Predicated region
        $region86: #{svhn_feature_extractor.6} parent=84 // pred_check
          %p845 = pneg %p128
        $region87: #{svhn_feature_extractor.6} parent=84 // pred_check_branch
          %847 = sbr.rel (%p845) target = $region89
        $region88: #{svhn_feature_extractor.6} parent=84 // pred_region
          %s848 = smul.u32 9, %s16
          %p849 = scmp.lt.s32.totalorder %s848, 17
          %s850 = scalar_select %p849, %s848, 17
          %s851 = smul.addr %s850, 4
          %s852 = scalar_lea.vmem %s4, %s851
        $region89: #{svhn_feature_extractor.6} parent=84 // pred_fallthru
          _
      $region85: #{svhn_feature_extractor.6} parent=5 // pred_fallthru
        _
    $region6: #{svhn_feature_extractor.6} parent=1 // loop_footer
      %s14 = sadd.s32 1, %s10
    $region7: #{svhn_feature_extractor.6} parent=1 // loop_footer_branch
      %9 = sbr.rel target = $region3
    $region8: #{svhn_feature_extractor.6} parent=1 // loop_exit
      _

// kernel: svhn_feature_extractor.5
$region0: #{svhn_feature_extractor.5}
  #allocation0 [shape = 'u32[]', space=smem, size = 0x4, offset = 0x4, fixed_abs, tag = 'smem constant byte address 0x4 - core index']
  #allocation1 [shape = 'u32[72,128]{1,0:T(1,128)}', space=vmem, size = 0x9000, scoped, tag = 'internal scratch']
  %s0 = inlined_call_operand.vmem [shape: bf16[576,50], index: 0, kind: input, shape index: {}]
  %s1 = inlined_call_operand.vmem [shape: bf16[50,128], index: 1, kind: input, shape index: {}]
  %s2 = inlined_call_operand.vmem [shape: f32[1,128], index: 2, kind: input, shape index: {}]
  %s3 = inlined_call_operand.vmem [shape: f32[2,1,256], index: 3, kind: output, shape index: {}]
  %s4 = sld [smem:[#allocation0]]
  $region45: #{svhn_feature_extractor.5} parent=0
    _
  %s6 = ssub.s32 1, %s4
  %s7 = scalar_select 0, %s6, %s4
  loop: start=0, step=1, limit=4
  $region2: #{svhn_feature_extractor.5} parent=0 // loop_pre_header
    _
  $region3: #{svhn_feature_extractor.5} parent=0 // loop_header
    %s9 = sphi 0, %s13
    %p10 = scmp.ge.s32.totalorder %s9, 4
    %s19 = sphi 0, %s21
    %s22 = sphi 0, %s19
    %s23 = sphi 0, %s22
    %s39 = sphi 0, %s23
    %s43 = sphi 0, %s43
    %s45 = sphi 0, %s43
    %s46 = sphi 0, %s45
    %s60 = sphi 0, %s46
    %s64 = sphi 0, %s64
    %s66 = sphi 0, %s64
    %s67 = sphi 0, %s66
    %s81 = sphi 0, %s67
    %s87 = sphi 0, %s89
    %s90 = sphi 0, %s87
    %s91 = sphi 0, %s90
    %s107 = sphi 0, %s91
  $region4: #{svhn_feature_extractor.5} parent=0 // loop_header_branch
    %12 = sbr.rel (%p10) target = $region8
  $region5: #{svhn_feature_extractor.5} parent=0 // loop_body
    %s14 = ssub.s32 %s9, 1
    %s15 = ssub.s32 %s9, 2
    %s16 = sadd.s32 %s9, 1
    %s17 = ssub.s32 %s9, %s16
    %p18 = scmp.eq.s32.totalorder %s17, 0
    %s20 = sadd.s32 %s19, 1
    %s21 = scalar_select %p18, %s19, %s20
    %p24 = pneg %p18
    %p25 = scmp.eq.s32.totalorder %s9, 1
    %p26 = por %p24, %p25
    %p27 = scmp.ne.s32.totalorder %s19, %s22
    %p28 = scmp.eq.s32.totalorder %s9, 0
    %p29 = por %p27, %p28
    %p30 = scmp.ne.s32.totalorder %s19, %s22
    %p31 = scmp.eq.s32.totalorder %s14, 1
    %p32 = por %p30, %p31
    %p33 = scmp.ne.s32.totalorder %s22, %s23
    %p34 = scmp.eq.s32.totalorder %s14, 0
    %p35 = por %p33, %p34
    %p36 = scmp.ne.s32.totalorder %s22, %s23
    %p37 = scmp.eq.s32.totalorder %s15, 1
    %p38 = por %p36, %p37
    %p40 = scmp.ne.s32.totalorder %s23, %s39
    %p41 = scmp.eq.s32.totalorder %s15, 0
    %p42 = por %p40, %p41
    %s44 = sadd.s32 %s43, 1
    %p47 = scmp.eq.s32.totalorder %s9, 1
    %p48 = scmp.ne.s32.totalorder %s43, %s45
    %p49 = scmp.eq.s32.totalorder %s9, 0
    %p50 = por %p48, %p49
    %p51 = scmp.ne.s32.totalorder %s43, %s45
    %p52 = scmp.eq.s32.totalorder %s14, 1
    %p53 = por %p51, %p52
    %p54 = scmp.ne.s32.totalorder %s45, %s46
    %p55 = scmp.eq.s32.totalorder %s14, 0
    %p56 = por %p54, %p55
    %p57 = scmp.ne.s32.totalorder %s45, %s46
    %p58 = scmp.eq.s32.totalorder %s15, 1
    %p59 = por %p57, %p58
    %p61 = scmp.ne.s32.totalorder %s46, %s60
    %p62 = scmp.eq.s32.totalorder %s15, 0
    %p63 = por %p61, %p62
    %s65 = sadd.s32 %s64, 1
    %p68 = scmp.eq.s32.totalorder %s9, 1
    %p69 = scmp.ne.s32.totalorder %s64, %s66
    %p70 = scmp.eq.s32.totalorder %s9, 0
    %p71 = por %p69, %p70
    %p72 = scmp.ne.s32.totalorder %s64, %s66
    %p73 = scmp.eq.s32.totalorder %s14, 1
    %p74 = por %p72, %p73
    %p75 = scmp.ne.s32.totalorder %s66, %s67
    %p76 = scmp.eq.s32.totalorder %s14, 0
    %p77 = por %p75, %p76
    %p78 = scmp.ne.s32.totalorder %s66, %s67
    %p79 = scmp.eq.s32.totalorder %s15, 1
    %p80 = por %p78, %p79
    %p82 = scmp.ne.s32.totalorder %s67, %s81
    %p83 = scmp.eq.s32.totalorder %s15, 0
    %p84 = por %p82, %p83
    %s85 = ssub.s32 %s9, %s16
    %p86 = scmp.eq.s32.totalorder %s85, 0
    %s88 = sadd.s32 %s87, 1
    %s89 = scalar_select %p86, %s87, %s88
    %p92 = pneg %p86
    %p93 = scmp.eq.s32.totalorder %s9, 1
    %p94 = por %p92, %p93
    %p95 = scmp.ne.s32.totalorder %s87, %s90
    %p96 = scmp.eq.s32.totalorder %s9, 0
    %p97 = por %p95, %p96
    %p98 = scmp.ne.s32.totalorder %s87, %s90
    %p99 = scmp.eq.s32.totalorder %s14, 1
    %p100 = por %p98, %p99
    %p101 = scmp.ne.s32.totalorder %s90, %s91
    %p102 = scmp.eq.s32.totalorder %s14, 0
    %p103 = por %p101, %p102
    %p104 = scmp.ne.s32.totalorder %s90, %s91
    %p105 = scmp.eq.s32.totalorder %s15, 1
    %p106 = por %p104, %p105
    %p108 = scmp.ne.s32.totalorder %s91, %s107
    %p109 = scmp.eq.s32.totalorder %s15, 0
    %p110 = por %p108, %p109
    %p111 = scmp.le.s32.totalorder 1, %s9
    %p112 = scmp.lt.s32.totalorder %s9, 3
    %p113 = pnand %p111, %p112
    %p114 = pneg %p113
    // Predicated region
    $region9: #{svhn_feature_extractor.5} parent=5 // pred_check
      _
    $region10: #{svhn_feature_extractor.5} parent=5 // pred_check_branch
      %116 = sbr.rel (%p113) target = $region12
    $region11: #{svhn_feature_extractor.5} parent=5 // pred_region
      %s117 = ssub.s32 %s9, 1
      // Predicated region
      $region13: #{svhn_feature_extractor.5} parent=11 // pred_check
        %p118 = pneg %p56
      $region14: #{svhn_feature_extractor.5} parent=11 // pred_check_branch
        %120 = sbr.rel (%p118) target = $region16
      $region15: #{svhn_feature_extractor.5} parent=11 // pred_region
        _
      $region16: #{svhn_feature_extractor.5} parent=11 // pred_fallthru
        _
      // Predicated region
      $region17: #{svhn_feature_extractor.5} parent=11 // pred_check
        %p121 = pneg %p77
      $region18: #{svhn_feature_extractor.5} parent=11 // pred_check_branch
        %123 = sbr.rel (%p121) target = $region20
      $region19: #{svhn_feature_extractor.5} parent=11 // pred_region
        _
      $region20: #{svhn_feature_extractor.5} parent=11 // pred_fallthru
        _
    $region12: #{svhn_feature_extractor.5} parent=5 // pred_fallthru
      _
    %p124 = scmp.lt.s32.totalorder %s9, 2
    // Predicated region
    $region21: #{svhn_feature_extractor.5} parent=5 // pred_check
      %p125 = pneg %p124
    $region22: #{svhn_feature_extractor.5} parent=5 // pred_check_branch
      %127 = sbr.rel (%p125) target = $region24
    $region23: #{svhn_feature_extractor.5} parent=5 // pred_region
      // Predicated region
      $region25: #{svhn_feature_extractor.5} parent=23 // pred_check
        %p128 = pneg %p29
      $region26: #{svhn_feature_extractor.5} parent=23 // pred_check_branch
        %130 = sbr.rel (%p128) target = $region28
      $region27: #{svhn_feature_extractor.5} parent=23 // pred_region
        %s131 = smul.u32 36, %s9
        %p132 = scmp.lt.s32.totalorder %s131, 71
        %s133 = scalar_select %p132, %s131, 71
        %s134 = smul.addr %s133, 4
        %s135 = scalar_lea.vmem %s0, %s134
        %s136 = smul.u32 36, %s9
      $region28: #{svhn_feature_extractor.5} parent=23 // pred_fallthru
        _
    $region24: #{svhn_feature_extractor.5} parent=5 // pred_fallthru
      _
    %p137 = scmp.le.s32.totalorder 1, %s9
    %p138 = scmp.lt.s32.totalorder %s9, 3
    %p139 = pnand %p137, %p138
    %p140 = pneg %p139
    // Predicated region
    $region29: #{svhn_feature_extractor.5} parent=5 // pred_check
      _
    $region30: #{svhn_feature_extractor.5} parent=5 // pred_check_branch
      %142 = sbr.rel (%p139) target = $region32
    $region31: #{svhn_feature_extractor.5} parent=5 // pred_region
      %s143 = ssub.s32 %s9, 1
      %s144 = smul.u32 36, %s14
      %p145 = scmp.lt.s32.totalorder %s144, 71
      %s146 = scalar_select %p145, %s144, 71
      %s147 = smul.addr %s146, 4
      %s148 = scalar_lea.vmem %s0, %s147
      %p149 = pneg %p35
      %p150 = pneg %p32
      %p151 = pneg %p56
      %p152 = pneg %p53
      %p153 = pneg %p77
      %p154 = pneg %p74
      %p155 = pneg %p103
      %p156 = pneg %p100
      %p157 = scmp.lt.s32.totalorder %s14, 1
      %s158 = scalar_select %p157, %s14, 1
      %s159 = smul.addr %s158, 2
      %s160 = scalar_lea.vmem %s3, %s159
      %s161 = smul.u32 36, %s14
      %p162 = scmp.lt.s32.totalorder %s161, 71
      %s163 = scalar_select %p162, %s161, 71
      %s164 = smul.addr %s163, 4
      %s165 = scalar_lea.vmem %s0, %s164
      %s166 = smul.u32 36, %s14
      %p167 = scmp.lt.s32.totalorder %s14, 1
      %s168 = scalar_select %p167, %s14, 1
      %s169 = smul.addr %s168, 2
      %s170 = scalar_lea.vmem %s3, %s169
      %v172 = vld [vmem:[%s165] sm:$0xf]
      %v173 = vld [vmem:[%s165 + $0x4] sm:$0xf]
      %v174 = vld [vmem:[%s165 + $0x8] sm:$0xf]
      %v175 = vld [vmem:[%s165 + $0xc] sm:$0xf]
      %v176 = vld [vmem:[%s165 + $0x10] sm:$0xf]
      %v177 = vld [vmem:[%s165 + $0x14] sm:$0xf]
      %v178 = vld [vmem:[%s165 + $0x18] sm:$0xf]
      %v179 = vld [vmem:[%s165 + $0x1c] sm:$0xf]
      %v180 = vld [vmem:[%s165 + $0x20] sm:$0xf]
      %v181 = vld [vmem:[%s165 + $0x24] sm:$0xf]
      %v182 = vld [vmem:[%s165 + $0x28] sm:$0xf]
      %v183 = vld [vmem:[%s165 + $0x2c] sm:$0xf]
      %v184 = vld [vmem:[%s165 + $0x30] sm:$0xf]
      %v185 = vld [vmem:[%s165 + $0x34] sm:$0xf]
      %v186 = vld [vmem:[%s165 + $0x38] sm:$0xf]
      %v187 = vld [vmem:[%s165 + $0x3c] sm:$0xf]
      %v188 = vld [vmem:[%s165 + $0x40] sm:$0xf]
      %v189 = vld [vmem:[%s165 + $0x44] sm:$0xf]
      %v190 = vld [vmem:[%s165 + $0x48] sm:$0xf]
      %v191 = vld [vmem:[%s165 + $0x4c] sm:$0xf]
      %v192 = vld [vmem:[%s165 + $0x50] sm:$0xf]
      %v193 = vld [vmem:[%s165 + $0x54] sm:$0xf]
      %v194 = vld [vmem:[%s165 + $0x58] sm:$0xf]
      %v195 = vld [vmem:[%s165 + $0x5c] sm:$0xf]
      %v196 = vld [vmem:[%s165 + $0x60] sm:$0xf]
      %v197 = vld [vmem:[%s165 + $0x64] sm:$0xf]
      %v198 = vld [vmem:[%s165 + $0x68] sm:$0xf]
      %v199 = vld [vmem:[%s165 + $0x6c] sm:$0xf]
      %v200 = vld [vmem:[%s165 + $0x70] sm:$0xf]
      %v201 = vld [vmem:[%s165 + $0x74] sm:$0xf]
      %v202 = vld [vmem:[%s165 + $0x78] sm:$0xf]
      %v203 = vld [vmem:[%s165 + $0x7c] sm:$0xf]
      %v204 = vld [vmem:[%s165 + $0x80] sm:$0xf]
      %v205 = vld [vmem:[%s165 + $0x84] sm:$0xf]
      %v206 = vld [vmem:[%s165 + $0x88] sm:$0xf]
      %v207 = vld [vmem:[%s165 + $0x8c] sm:$0xf]
      %v208 = vld [vmem:[%s1] sm:$0xf]
      %v209 = vld [vmem:[%s1 + $0x4] sm:$0xf]
      %v210 = vld [vmem:[%s1 + $0x8] sm:$0xf]
      %v211 = vld [vmem:[%s1 + $0xc] sm:$0xf]
      %v212 = vld [vmem:[%s1 + $0x10] sm:$0xf]
      %v213 = vld [vmem:[%s1 + $0x14] sm:$0xf]
      %v214 = vld [vmem:[%s1 + $0x18] sm:$0x1]
      %v215 = vld [vmem:[%s2] sm:$0x1]
      %v217 = vperm.slane %v215, 0
      %v255 = vunpack.c.l.b16 %v172
      %v256 = vunpack.c.l.b16 %v173
      %v257 = vunpack.c.l.b16 %v174
      %v258 = vunpack.c.l.b16 %v175
      %v259 = vunpack.c.l.b16 %v176
      %v260 = vunpack.c.l.b16 %v177
      %v261 = vunpack.c.l.b16 %v178
      %v262 = vunpack.c.l.b16 %v179
      %v263 = vunpack.c.l.b16 %v180
      %v264 = vunpack.c.l.b16 %v181
      %v265 = vunpack.c.l.b16 %v182
      %v266 = vunpack.c.l.b16 %v183
      %v267 = vunpack.c.l.b16 %v184
      %v268 = vunpack.c.l.b16 %v185
      %v269 = vunpack.c.l.b16 %v186
      %v270 = vunpack.c.l.b16 %v187
      %v271 = vunpack.c.l.b16 %v188
      %v272 = vunpack.c.l.b16 %v189
      %v273 = vunpack.c.l.b16 %v190
      %v274 = vunpack.c.l.b16 %v191
      %v275 = vunpack.c.l.b16 %v192
      %v276 = vunpack.c.l.b16 %v193
      %v277 = vunpack.c.l.b16 %v194
      %v278 = vunpack.c.l.b16 %v195
      %v279 = vunpack.c.l.b16 %v196
      %v280 = vunpack.c.l.b16 %v197
      %v281 = vunpack.c.l.b16 %v198
      %v282 = vunpack.c.l.b16 %v199
      %v283 = vunpack.c.l.b16 %v200
      %v284 = vunpack.c.l.b16 %v201
      %v285 = vunpack.c.l.b16 %v202
      %v286 = vunpack.c.l.b16 %v203
      %v287 = vunpack.c.l.b16 %v204
      %v288 = vunpack.c.l.b16 %v205
      %v289 = vunpack.c.l.b16 %v206
      %v290 = vunpack.c.l.b16 %v207
      %v291 = vpack.c.b16 %v256, %v255
      %v292 = vpack.c.b16 %v258, %v257
      %v293 = vpack.c.b16 %v260, %v259
      %v294 = vpack.c.b16 %v262, %v261
      %v295 = vpack.c.b16 %v264, %v263
      %v296 = vpack.c.b16 %v266, %v265
      %v297 = vpack.c.b16 %v268, %v267
      %v298 = vpack.c.b16 %v270, %v269
      %v299 = vpack.c.b16 %v272, %v271
      %v300 = vpack.c.b16 %v274, %v273
      %v301 = vpack.c.b16 %v276, %v275
      %v302 = vpack.c.b16 %v278, %v277
      %v303 = vpack.c.b16 %v280, %v279
      %v304 = vpack.c.b16 %v282, %v281
      %v305 = vpack.c.b16 %v284, %v283
      %v306 = vpack.c.b16 %v286, %v285
      %v307 = vpack.c.b16 %v288, %v287
      %v308 = vpack.c.b16 %v290, %v289
      %v316 = vunpack.c.l.b16 %v208
      %v317 = vunpack.c.l.b16 %v209
      %v318 = vunpack.c.l.b16 %v210
      %v319 = vunpack.c.l.b16 %v211
      %v320 = vunpack.c.l.b16 %v212
      %v321 = vunpack.c.l.b16 %v213
      %v322 = vunpack.c.l.b16 %v214
      %v323 = vpack.c.b16 %v317, %v316
      %v324 = vpack.c.b16 %v319, %v318
      %v325 = vpack.c.b16 %v321, %v320
      %v326 = vpack.c.b16 %v322, %v322
      %vm330 = vcmask 408576
      %v332 = vsel %vm330, %v291, 0
      %v335 = vsel %vm330, %v292, 0
      %v338 = vsel %vm330, %v293, 0
      %v341 = vsel %vm330, %v294, 0
      %v344 = vsel %vm330, %v295, 0
      %v347 = vsel %vm330, %v296, 0
      %v350 = vsel %vm330, %v297, 0
      %v353 = vsel %vm330, %v298, 0
      %v356 = vsel %vm330, %v299, 0
      %v359 = vsel %vm330, %v300, 0
      %v362 = vsel %vm330, %v301, 0
      %v365 = vsel %vm330, %v302, 0
      %v368 = vsel %vm330, %v303, 0
      %v371 = vsel %vm330, %v304, 0
      %v374 = vsel %vm330, %v305, 0
      %v377 = vsel %vm330, %v306, 0
      %v380 = vsel %vm330, %v307, 0
      %v383 = vsel %vm330, %v308, 0
      %vm385 = vcmask 1040384
      %v387 = vsel %vm385, %v326, 0
      %389 = vmatpush.bf16.msra.mxu0 0
      %390 = vmatpush.bf16.msra.mxu0 0
      %391 = vmatpush.bf16.msra.mxu0 0
      %392 = vmatpush.bf16.msra.mxu0 0
      %393 = vmatpush.bf16.msra.mxu0 %v387
      %394 = vmatpush.bf16.msra.mxu0 %v325
      %395 = vmatpush.bf16.msra.mxu0 %v324
      %396 = vmatpush.bf16.msra.mxu0 %v323
      %397 = vmatmul.bf16.gmra.mxu0 %v332
      %v398 = vpop.f32.mrf.mxu0
      %v399 = vadd.f32 %v217, %v398
      %v400 = vpop.f32.mrf.mxu0
      %v401 = vadd.f32 %v217, %v400
      %402 = vmatmul.bf16.gmra.mxu0 %v335
      %v403 = vpop.f32.mrf.mxu0
      %v404 = vadd.f32 %v217, %v403
      %v405 = vpop.f32.mrf.mxu0
      %v406 = vadd.f32 %v217, %v405
      %407 = vmatmul.bf16.gmra.mxu0 %v338
      %v408 = vpop.f32.mrf.mxu0
      %v409 = vadd.f32 %v217, %v408
      %v410 = vpop.f32.mrf.mxu0
      %v411 = vadd.f32 %v217, %v410
      %412 = vmatmul.bf16.gmra.mxu0 %v341
      %v413 = vpop.f32.mrf.mxu0
      %v414 = vadd.f32 %v217, %v413
      %v415 = vpop.f32.mrf.mxu0
      %v416 = vadd.f32 %v217, %v415
      %417 = vmatmul.bf16.gmra.mxu0 %v344
      %v418 = vpop.f32.mrf.mxu0
      %v419 = vadd.f32 %v217, %v418
      %v420 = vpop.f32.mrf.mxu0
      %v421 = vadd.f32 %v217, %v420
      %422 = vmatmul.bf16.gmra.mxu0 %v347
      %v423 = vpop.f32.mrf.mxu0
      %v424 = vadd.f32 %v217, %v423
      %v425 = vpop.f32.mrf.mxu0
      %v426 = vadd.f32 %v217, %v425
      %427 = vmatmul.bf16.gmra.mxu0 %v350
      %v428 = vpop.f32.mrf.mxu0
      %v429 = vadd.f32 %v217, %v428
      %v430 = vpop.f32.mrf.mxu0
      %v431 = vadd.f32 %v217, %v430
      %432 = vmatmul.bf16.gmra.mxu0 %v353
      %v433 = vpop.f32.mrf.mxu0
      %v434 = vadd.f32 %v217, %v433
      %v435 = vpop.f32.mrf.mxu0
      %v436 = vadd.f32 %v217, %v435
      %437 = vmatmul.bf16.gmra.mxu0 %v356
      %v438 = vpop.f32.mrf.mxu0
      %v439 = vadd.f32 %v217, %v438
      %v440 = vpop.f32.mrf.mxu0
      %v441 = vadd.f32 %v217, %v440
      %442 = vmatmul.bf16.gmra.mxu0 %v359
      %v443 = vpop.f32.mrf.mxu0
      %v444 = vadd.f32 %v217, %v443
      %v445 = vpop.f32.mrf.mxu0
      %v446 = vadd.f32 %v217, %v445
      %447 = vmatmul.bf16.gmra.mxu0 %v362
      %v448 = vpop.f32.mrf.mxu0
      %v449 = vadd.f32 %v217, %v448
      %v450 = vpop.f32.mrf.mxu0
      %v451 = vadd.f32 %v217, %v450
      %452 = vmatmul.bf16.gmra.mxu0 %v365
      %v453 = vpop.f32.mrf.mxu0
      %v454 = vadd.f32 %v217, %v453
      %v455 = vpop.f32.mrf.mxu0
      %v456 = vadd.f32 %v217, %v455
      %457 = vmatmul.bf16.gmra.mxu0 %v368
      %v458 = vpop.f32.mrf.mxu0
      %v459 = vadd.f32 %v217, %v458
      %v460 = vpop.f32.mrf.mxu0
      %v461 = vadd.f32 %v217, %v460
      %462 = vmatmul.bf16.gmra.mxu0 %v371
      %v463 = vpop.f32.mrf.mxu0
      %v464 = vadd.f32 %v217, %v463
      %v465 = vpop.f32.mrf.mxu0
      %v466 = vadd.f32 %v217, %v465
      %467 = vmatmul.bf16.gmra.mxu0 %v374
      %v468 = vpop.f32.mrf.mxu0
      %v469 = vadd.f32 %v217, %v468
      %v470 = vpop.f32.mrf.mxu0
      %v471 = vadd.f32 %v217, %v470
      %472 = vmatmul.bf16.gmra.mxu0 %v377
      %v473 = vpop.f32.mrf.mxu0
      %v474 = vadd.f32 %v217, %v473
      %v475 = vpop.f32.mrf.mxu0
      %v476 = vadd.f32 %v217, %v475
      %477 = vmatmul.bf16.gmra.mxu0 %v380
      %v478 = vpop.f32.mrf.mxu0
      %v479 = vadd.f32 %v217, %v478
      %v480 = vpop.f32.mrf.mxu0
      %v481 = vadd.f32 %v217, %v480
      %482 = vmatmul.bf16.gmra.mxu0 %v383
      %v483 = vpop.f32.mrf.mxu0
      %v484 = vadd.f32 %v217, %v483
      %v485 = vpop.f32.mrf.mxu0
      %v486 = vadd.f32 %v217, %v485
      %487 = vdwg.mxu0
      %s488 = smul.u32 %s14, 288
      %v489 = vlaneseq
      %v490 = vshrl.u32 %v489, 7
      %v491 = vadd.s32 %v490, 8
      %v492 = vadd.s32 %v490, 16
      %v493 = vadd.s32 %v490, 24
      %v494 = vadd.s32 %v490, 32
      %v495 = vadd.s32 %v490, 40
      %v496 = vadd.s32 %v490, 48
      %v497 = vadd.s32 %v490, 56
      %v498 = vadd.s32 %v490, 64
      %v499 = vadd.s32 %v490, 72
      %v500 = vadd.s32 %v490, 80
      %v501 = vadd.s32 %v490, 88
      %v502 = vadd.s32 %v490, 96
      %v503 = vadd.s32 %v490, 104
      %v504 = vadd.s32 %v490, 112
      %v505 = vadd.s32 %v490, 120
      %v506 = vadd.s32 %v490, 128
      %v507 = vadd.s32 %v490, 136
      %v508 = vadd.s32 %v490, 144
      %v509 = vadd.s32 %v490, 152
      %v510 = vadd.s32 %v490, 160
      %v511 = vadd.s32 %v490, 168
      %v512 = vadd.s32 %v490, 176
      %v513 = vadd.s32 %v490, 184
      %v514 = vadd.s32 %v490, 192
      %v515 = vadd.s32 %v490, 200
      %v516 = vadd.s32 %v490, 208
      %v517 = vadd.s32 %v490, 216
      %v518 = vadd.s32 %v490, 224
      %v519 = vadd.s32 %v490, 232
      %v520 = vadd.s32 %v490, 240
      %v521 = vadd.s32 %v490, 248
      %v522 = vadd.s32 %v490, 256
      %v523 = vadd.s32 %v490, 264
      %v524 = vadd.s32 %v490, 272
      %v525 = vadd.s32 %v490, 280
      %v526 = vstv %s488
      %v527 = vadd.s32 %v526, %v490
      %v528 = vadd.s32 %v526, %v491
      %v529 = vadd.s32 %v526, %v492
      %v530 = vadd.s32 %v526, %v493
      %v531 = vadd.s32 %v526, %v494
      %v532 = vadd.s32 %v526, %v495
      %v533 = vadd.s32 %v526, %v496
      %v534 = vadd.s32 %v526, %v497
      %v535 = vadd.s32 %v526, %v498
      %v536 = vadd.s32 %v526, %v499
      %v537 = vadd.s32 %v526, %v500
      %v538 = vadd.s32 %v526, %v501
      %v539 = vadd.s32 %v526, %v502
      %v540 = vadd.s32 %v526, %v503
      %v541 = vadd.s32 %v526, %v504
      %v542 = vadd.s32 %v526, %v505
      %v543 = vadd.s32 %v526, %v506
      %v544 = vadd.s32 %v526, %v507
      %v545 = vadd.s32 %v526, %v508
      %v546 = vadd.s32 %v526, %v509
      %v547 = vadd.s32 %v526, %v510
      %v548 = vadd.s32 %v526, %v511
      %v549 = vadd.s32 %v526, %v512
      %v550 = vadd.s32 %v526, %v513
      %v551 = vadd.s32 %v526, %v514
      %v552 = vadd.s32 %v526, %v515
      %v553 = vadd.s32 %v526, %v516
      %v554 = vadd.s32 %v526, %v517
      %v555 = vadd.s32 %v526, %v518
      %v556 = vadd.s32 %v526, %v519
      %v557 = vadd.s32 %v526, %v520
      %v558 = vadd.s32 %v526, %v521
      %v559 = vadd.s32 %v526, %v522
      %v560 = vadd.s32 %v526, %v523
      %v561 = vadd.s32 %v526, %v524
      %v562 = vadd.s32 %v526, %v525
      %vm563 = vcmp.lt.s32.totalorder %v527, 576
      %vm564 = vcmp.lt.s32.totalorder %v528, 576
      %vm565 = vcmp.lt.s32.totalorder %v529, 576
      %vm566 = vcmp.lt.s32.totalorder %v530, 576
      %vm567 = vcmp.lt.s32.totalorder %v531, 576
      %vm568 = vcmp.lt.s32.totalorder %v532, 576
      %vm569 = vcmp.lt.s32.totalorder %v533, 576
      %vm570 = vcmp.lt.s32.totalorder %v534, 576
      %vm571 = vcmp.lt.s32.totalorder %v535, 576
      %vm572 = vcmp.lt.s32.totalorder %v536, 576
      %vm573 = vcmp.lt.s32.totalorder %v537, 576
      %vm574 = vcmp.lt.s32.totalorder %v538, 576
      %vm575 = vcmp.lt.s32.totalorder %v539, 576
      %vm576 = vcmp.lt.s32.totalorder %v540, 576
      %vm577 = vcmp.lt.s32.totalorder %v541, 576
      %vm578 = vcmp.lt.s32.totalorder %v542, 576
      %vm579 = vcmp.lt.s32.totalorder %v543, 576
      %vm580 = vcmp.lt.s32.totalorder %v544, 576
      %vm581 = vcmp.lt.s32.totalorder %v545, 576
      %vm582 = vcmp.lt.s32.totalorder %v546, 576
      %vm583 = vcmp.lt.s32.totalorder %v547, 576
      %vm584 = vcmp.lt.s32.totalorder %v548, 576
      %vm585 = vcmp.lt.s32.totalorder %v549, 576
      %vm586 = vcmp.lt.s32.totalorder %v550, 576
      %vm587 = vcmp.lt.s32.totalorder %v551, 576
      %vm588 = vcmp.lt.s32.totalorder %v552, 576
      %vm589 = vcmp.lt.s32.totalorder %v553, 576
      %vm590 = vcmp.lt.s32.totalorder %v554, 576
      %vm591 = vcmp.lt.s32.totalorder %v555, 576
      %vm592 = vcmp.lt.s32.totalorder %v556, 576
      %vm593 = vcmp.lt.s32.totalorder %v557, 576
      %vm594 = vcmp.lt.s32.totalorder %v558, 576
      %vm595 = vcmp.lt.s32.totalorder %v559, 576
      %vm596 = vcmp.lt.s32.totalorder %v560, 576
      %vm597 = vcmp.lt.s32.totalorder %v561, 576
      %vm598 = vcmp.lt.s32.totalorder %v562, 576
      %v599 = vsel %vm563, 1, 0
      %v600 = vsel %vm564, 1, 0
      %v601 = vsel %vm565, 1, 0
      %v602 = vsel %vm566, 1, 0
      %v603 = vsel %vm567, 1, 0
      %v604 = vsel %vm568, 1, 0
      %v605 = vsel %vm569, 1, 0
      %v606 = vsel %vm570, 1, 0
      %v607 = vsel %vm571, 1, 0
      %v608 = vsel %vm572, 1, 0
      %v609 = vsel %vm573, 1, 0
      %v610 = vsel %vm574, 1, 0
      %v611 = vsel %vm575, 1, 0
      %v612 = vsel %vm576, 1, 0
      %v613 = vsel %vm577, 1, 0
      %v614 = vsel %vm578, 1, 0
      %v615 = vsel %vm579, 1, 0
      %v616 = vsel %vm580, 1, 0
      %v617 = vsel %vm581, 1, 0
      %v618 = vsel %vm582, 1, 0
      %v619 = vsel %vm583, 1, 0
      %v620 = vsel %vm584, 1, 0
      %v621 = vsel %vm585, 1, 0
      %v622 = vsel %vm586, 1, 0
      %v623 = vsel %vm587, 1, 0
      %v624 = vsel %vm588, 1, 0
      %v625 = vsel %vm589, 1, 0
      %v626 = vsel %vm590, 1, 0
      %v627 = vsel %vm591, 1, 0
      %v628 = vsel %vm592, 1, 0
      %v629 = vsel %vm593, 1, 0
      %v630 = vsel %vm594, 1, 0
      %v631 = vsel %vm595, 1, 0
      %v632 = vsel %vm596, 1, 0
      %v633 = vsel %vm597, 1, 0
      %v634 = vsel %vm598, 1, 0
      %vm635 = vcmp.eq.s32.totalorder %v599, 1
      %vm636 = vcmp.eq.s32.totalorder %v600, 1
      %vm637 = vcmp.eq.s32.totalorder %v601, 1
      %vm638 = vcmp.eq.s32.totalorder %v602, 1
      %vm639 = vcmp.eq.s32.totalorder %v603, 1
      %vm640 = vcmp.eq.s32.totalorder %v604, 1
      %vm641 = vcmp.eq.s32.totalorder %v605, 1
      %vm642 = vcmp.eq.s32.totalorder %v606, 1
      %vm643 = vcmp.eq.s32.totalorder %v607, 1
      %vm644 = vcmp.eq.s32.totalorder %v608, 1
      %vm645 = vcmp.eq.s32.totalorder %v609, 1
      %vm646 = vcmp.eq.s32.totalorder %v610, 1
      %vm647 = vcmp.eq.s32.totalorder %v611, 1
      %vm648 = vcmp.eq.s32.totalorder %v612, 1
      %vm649 = vcmp.eq.s32.totalorder %v613, 1
      %vm650 = vcmp.eq.s32.totalorder %v614, 1
      %vm651 = vcmp.eq.s32.totalorder %v615, 1
      %vm652 = vcmp.eq.s32.totalorder %v616, 1
      %vm653 = vcmp.eq.s32.totalorder %v617, 1
      %vm654 = vcmp.eq.s32.totalorder %v618, 1
      %vm655 = vcmp.eq.s32.totalorder %v619, 1
      %vm656 = vcmp.eq.s32.totalorder %v620, 1
      %vm657 = vcmp.eq.s32.totalorder %v621, 1
      %vm658 = vcmp.eq.s32.totalorder %v622, 1
      %vm659 = vcmp.eq.s32.totalorder %v623, 1
      %vm660 = vcmp.eq.s32.totalorder %v624, 1
      %vm661 = vcmp.eq.s32.totalorder %v625, 1
      %vm662 = vcmp.eq.s32.totalorder %v626, 1
      %vm663 = vcmp.eq.s32.totalorder %v627, 1
      %vm664 = vcmp.eq.s32.totalorder %v628, 1
      %vm665 = vcmp.eq.s32.totalorder %v629, 1
      %vm666 = vcmp.eq.s32.totalorder %v630, 1
      %vm667 = vcmp.eq.s32.totalorder %v631, 1
      %vm668 = vcmp.eq.s32.totalorder %v632, 1
      %vm669 = vcmp.eq.s32.totalorder %v633, 1
      %vm670 = vcmp.eq.s32.totalorder %v634, 1
      %v671 = vsel %vm635, %v399, 0.0
      %v672 = vsel %vm636, %v401, 0.0
      %v673 = vsel %vm637, %v404, 0.0
      %v674 = vsel %vm638, %v406, 0.0
      %v675 = vsel %vm639, %v409, 0.0
      %v676 = vsel %vm640, %v411, 0.0
      %v677 = vsel %vm641, %v414, 0.0
      %v678 = vsel %vm642, %v416, 0.0
      %v679 = vsel %vm643, %v419, 0.0
      %v680 = vsel %vm644, %v421, 0.0
      %v681 = vsel %vm645, %v424, 0.0
      %v682 = vsel %vm646, %v426, 0.0
      %v683 = vsel %vm647, %v429, 0.0
      %v684 = vsel %vm648, %v431, 0.0
      %v685 = vsel %vm649, %v434, 0.0
      %v686 = vsel %vm650, %v436, 0.0
      %v687 = vsel %vm651, %v439, 0.0
      %v688 = vsel %vm652, %v441, 0.0
      %v689 = vsel %vm653, %v444, 0.0
      %v690 = vsel %vm654, %v446, 0.0
      %v691 = vsel %vm655, %v449, 0.0
      %v692 = vsel %vm656, %v451, 0.0
      %v693 = vsel %vm657, %v454, 0.0
      %v694 = vsel %vm658, %v456, 0.0
      %v695 = vsel %vm659, %v459, 0.0
      %v696 = vsel %vm660, %v461, 0.0
      %v697 = vsel %vm661, %v464, 0.0
      %v698 = vsel %vm662, %v466, 0.0
      %v699 = vsel %vm663, %v469, 0.0
      %v700 = vsel %vm664, %v471, 0.0
      %v701 = vsel %vm665, %v474, 0.0
      %v702 = vsel %vm666, %v476, 0.0
      %v703 = vsel %vm667, %v479, 0.0
      %v704 = vsel %vm668, %v481, 0.0
      %v705 = vsel %vm669, %v484, 0.0
      %v706 = vsel %vm670, %v486, 0.0
      %v707 = vadd.f32 %v671, %v672
      %v708 = vadd.f32 %v707, %v673
      %v709 = vadd.f32 %v708, %v674
      %v710 = vadd.f32 %v709, %v675
      %v711 = vadd.f32 %v710, %v676
      %v712 = vadd.f32 %v711, %v677
      %v713 = vadd.f32 %v712, %v678
      %v714 = vadd.f32 %v713, %v679
      %v715 = vadd.f32 %v714, %v680
      %v716 = vadd.f32 %v715, %v681
      %v717 = vadd.f32 %v716, %v682
      %v718 = vadd.f32 %v717, %v683
      %v719 = vadd.f32 %v718, %v684
      %v720 = vadd.f32 %v719, %v685
      %v721 = vadd.f32 %v720, %v686
      %v722 = vadd.f32 %v721, %v687
      %v723 = vadd.f32 %v722, %v688
      %v724 = vadd.f32 %v723, %v689
      %v725 = vadd.f32 %v724, %v690
      %v726 = vadd.f32 %v725, %v691
      %v727 = vadd.f32 %v726, %v692
      %v728 = vadd.f32 %v727, %v693
      %v729 = vadd.f32 %v728, %v694
      %v730 = vadd.f32 %v729, %v695
      %v731 = vadd.f32 %v730, %v696
      %v732 = vadd.f32 %v731, %v697
      %v733 = vadd.f32 %v732, %v698
      %v734 = vadd.f32 %v733, %v699
      %v735 = vadd.f32 %v734, %v700
      %v736 = vadd.f32 %v735, %v701
      %v737 = vadd.f32 %v736, %v702
      %v738 = vadd.f32 %v737, %v703
      %v739 = vadd.f32 %v738, %v704
      %v740 = vadd.f32 %v739, %v705
      %v741 = vadd.f32 %v740, %v706
      %v742 = vrot.slane %v741, 4
      %v743 = vadd.f32 %v741, %v742
      %v744 = vrot.slane %v743, 2
      %v745 = vadd.f32 %v743, %v744
      %v746 = vrot.slane %v745, 1
      %v747 = vadd.f32 %v745, %v746
      %v748 = vmul.f32 %v671, %v671
      %v749 = vmul.f32 %v672, %v672
      %v750 = vmul.f32 %v673, %v673
      %v751 = vmul.f32 %v674, %v674
      %v752 = vmul.f32 %v675, %v675
      %v753 = vmul.f32 %v676, %v676
      %v754 = vmul.f32 %v677, %v677
      %v755 = vmul.f32 %v678, %v678
      %v756 = vmul.f32 %v679, %v679
      %v757 = vmul.f32 %v680, %v680
      %v758 = vmul.f32 %v681, %v681
      %v759 = vmul.f32 %v682, %v682
      %v760 = vmul.f32 %v683, %v683
      %v761 = vmul.f32 %v684, %v684
      %v762 = vmul.f32 %v685, %v685
      %v763 = vmul.f32 %v686, %v686
      %v764 = vmul.f32 %v687, %v687
      %v765 = vmul.f32 %v688, %v688
      %v766 = vmul.f32 %v689, %v689
      %v767 = vmul.f32 %v690, %v690
      %v768 = vmul.f32 %v691, %v691
      %v769 = vmul.f32 %v692, %v692
      %v770 = vmul.f32 %v693, %v693
      %v771 = vmul.f32 %v694, %v694
      %v772 = vmul.f32 %v695, %v695
      %v773 = vmul.f32 %v696, %v696
      %v774 = vmul.f32 %v697, %v697
      %v775 = vmul.f32 %v698, %v698
      %v776 = vmul.f32 %v699, %v699
      %v777 = vmul.f32 %v700, %v700
      %v778 = vmul.f32 %v701, %v701
      %v779 = vmul.f32 %v702, %v702
      %v780 = vmul.f32 %v703, %v703
      %v781 = vmul.f32 %v704, %v704
      %v782 = vmul.f32 %v705, %v705
      %v783 = vmul.f32 %v706, %v706
      %v784 = vadd.f32 %v748, %v749
      %v785 = vadd.f32 %v784, %v750
      %v786 = vadd.f32 %v785, %v751
      %v787 = vadd.f32 %v786, %v752
      %v788 = vadd.f32 %v787, %v753
      %v789 = vadd.f32 %v788, %v754
      %v790 = vadd.f32 %v789, %v755
      %v791 = vadd.f32 %v790, %v756
      %v792 = vadd.f32 %v791, %v757
      %v793 = vadd.f32 %v792, %v758
      %v794 = vadd.f32 %v793, %v759
      %v795 = vadd.f32 %v794, %v760
      %v796 = vadd.f32 %v795, %v761
      %v797 = vadd.f32 %v796, %v762
      %v798 = vadd.f32 %v797, %v763
      %v799 = vadd.f32 %v798, %v764
      %v800 = vadd.f32 %v799, %v765
      %v801 = vadd.f32 %v800, %v766
      %v802 = vadd.f32 %v801, %v767
      %v803 = vadd.f32 %v802, %v768
      %v804 = vadd.f32 %v803, %v769
      %v805 = vadd.f32 %v804, %v770
      %v806 = vadd.f32 %v805, %v771
      %v807 = vadd.f32 %v806, %v772
      %v808 = vadd.f32 %v807, %v773
      %v809 = vadd.f32 %v808, %v774
      %v810 = vadd.f32 %v809, %v775
      %v811 = vadd.f32 %v810, %v776
      %v812 = vadd.f32 %v811, %v777
      %v813 = vadd.f32 %v812, %v778
      %v814 = vadd.f32 %v813, %v779
      %v815 = vadd.f32 %v814, %v780
      %v816 = vadd.f32 %v815, %v781
      %v817 = vadd.f32 %v816, %v782
      %v818 = vadd.f32 %v817, %v783
      %v819 = vrot.slane %v818, 4
      %v820 = vadd.f32 %v818, %v819
      %v821 = vrot.slane %v820, 2
      %v822 = vadd.f32 %v820, %v821
      %v823 = vrot.slane %v822, 1
      %v824 = vadd.f32 %v822, %v823
      %v827 = vrot.slane %v824, 7
      %v828 = vsel %vm385, %v747, %v827
      %v830 = vlaneseq
      %vm831 = vcmp.ge.s32.totalorder %v830, 0
      %vm832 = vcmp.lt.s32.totalorder %v830, 256
      %vm833 = vmand %vm831, %vm832
      %834 = vst.msk [vmem:[%s170] sm:$0x3] %vm833, %v828
      %p835 = scmp.lt.s32.totalorder %s14, 1
      %s836 = scalar_select %p835, %s14, 1
      %s837 = smul.addr %s836, 2
      %s838 = scalar_lea.vmem %s3, %s837
      // Predicated region
      $region33: #{svhn_feature_extractor.5} parent=31 // pred_check
        %p839 = pneg %p100
      $region34: #{svhn_feature_extractor.5} parent=31 // pred_check_branch
        %841 = sbr.rel (%p839) target = $region36
      $region35: #{svhn_feature_extractor.5} parent=31 // pred_region
        _
      $region36: #{svhn_feature_extractor.5} parent=31 // pred_fallthru
        _
    $region32: #{svhn_feature_extractor.5} parent=5 // pred_fallthru
      _
    %p842 = scmp.le.s32.totalorder 2, %s9
    // Predicated region
    $region37: #{svhn_feature_extractor.5} parent=5 // pred_check
      %p843 = pneg %p842
    $region38: #{svhn_feature_extractor.5} parent=5 // pred_check_branch
      %845 = sbr.rel (%p843) target = $region40
    $region39: #{svhn_feature_extractor.5} parent=5 // pred_region
      %s846 = ssub.s32 %s9, 2
      // Predicated region
      $region41: #{svhn_feature_extractor.5} parent=39 // pred_check
        %p847 = pneg %p106
      $region42: #{svhn_feature_extractor.5} parent=39 // pred_check_branch
        %849 = sbr.rel (%p847) target = $region44
      $region43: #{svhn_feature_extractor.5} parent=39 // pred_region
        %p850 = scmp.lt.s32.totalorder %s15, 1
        %s851 = scalar_select %p850, %s15, 1
        %s852 = smul.addr %s851, 2
        %s853 = scalar_lea.vmem %s3, %s852
      $region44: #{svhn_feature_extractor.5} parent=39 // pred_fallthru
        _
    $region40: #{svhn_feature_extractor.5} parent=5 // pred_fallthru
      _
  $region6: #{svhn_feature_extractor.5} parent=0 // loop_footer
    %s13 = sadd.s32 1, %s9
  $region7: #{svhn_feature_extractor.5} parent=0 // loop_footer_branch
    %8 = sbr.rel target = $region3
  $region8: #{svhn_feature_extractor.5} parent=0 // loop_exit
    _

// kernel: svhn_feature_extractor.7
$region0: #{svhn_feature_extractor.7}
  #allocation0 [shape = 'u32[]', space=smem, size = 0x4, offset = 0x4, fixed_abs, tag = 'smem constant byte address 0x4 - core index']
  #allocation1 [shape = 'u32[72,128]{1,0:T(1,128)}', space=vmem, size = 0x9000, scoped, tag = 'internal scratch']
  %s0 = inlined_call_operand.vmem [shape: bf16[50,1600], index: 0, kind: input, shape index: {}]
  %s1 = inlined_call_operand.vmem [shape: bf16[1600,64], index: 1, kind: input, shape index: {}]
  %s2 = inlined_call_operand.vmem [shape: f32[1,64], index: 2, kind: input, shape index: {}]
  %s3 = inlined_call_operand.vmem [shape: bf16[50,64], index: 3, kind: output, shape index: {0}]
  %s4 = inlined_call_operand.vmem [shape: f32[2,1,128], index: 4, kind: output, shape index: {1}]
  %5 = xla_tuple %s3, %s4
  %s6 = sld [smem:[#allocation0]]
  $region97: #{svhn_feature_extractor.7} parent=0
    _
  %s8 = ssub.s32 1, %s6
  %s9 = scalar_select 0, %s8, %s6
  $region1: #{svhn_feature_extractor.7} parent=0
    #allocation2 [shape = 'u8[16384]{0}', space=vmem, size = 0x4000, scoped, tag = 'output window, operand 0']
    loop: start=0, step=1, limit=4
    $region2: #{svhn_feature_extractor.7} parent=1 // loop_pre_header
      _
    $region3: #{svhn_feature_extractor.7} parent=1 // loop_header
      %s11 = sphi 0, %s15
      %p12 = scmp.ge.s32.totalorder %s11, 4
      %s21 = sphi 0, %s23
      %s24 = sphi 0, %s21
      %s25 = sphi 0, %s24
      %s41 = sphi 0, %s25
      %s45 = sphi 0, %s45
      %s47 = sphi 0, %s45
      %s48 = sphi 0, %s47
      %s62 = sphi 0, %s48
      %s66 = sphi 0, %s66
      %s68 = sphi 0, %s66
      %s69 = sphi 0, %s68
      %s83 = sphi 0, %s69
      %s89 = sphi 0, %s91
      %s92 = sphi 0, %s89
      %s93 = sphi 0, %s92
      %s109 = sphi 0, %s93
      %s115 = sphi 0, %s117
      %s118 = sphi 0, %s115
      %s119 = sphi 0, %s118
      %s135 = sphi 0, %s119
    $region4: #{svhn_feature_extractor.7} parent=1 // loop_header_branch
      %14 = sbr.rel (%p12) target = $region8
    $region5: #{svhn_feature_extractor.7} parent=1 // loop_body
      %s16 = ssub.s32 %s11, 1
      %s17 = ssub.s32 %s11, 2
      %s18 = sadd.s32 %s11, 1
      %s19 = ssub.s32 %s11, %s18
      %p20 = scmp.eq.s32.totalorder %s19, 0
      %s22 = sadd.s32 %s21, 1
      %s23 = scalar_select %p20, %s21, %s22
      %p26 = pneg %p20
      %p27 = scmp.eq.s32.totalorder %s11, 1
      %p28 = por %p26, %p27
      %p29 = scmp.ne.s32.totalorder %s21, %s24
      %p30 = scmp.eq.s32.totalorder %s11, 0
      %p31 = por %p29, %p30
      %p32 = scmp.ne.s32.totalorder %s21, %s24
      %p33 = scmp.eq.s32.totalorder %s16, 1
      %p34 = por %p32, %p33
      %p35 = scmp.ne.s32.totalorder %s24, %s25
      %p36 = scmp.eq.s32.totalorder %s16, 0
      %p37 = por %p35, %p36
      %p38 = scmp.ne.s32.totalorder %s24, %s25
      %p39 = scmp.eq.s32.totalorder %s17, 1
      %p40 = por %p38, %p39
      %p42 = scmp.ne.s32.totalorder %s25, %s41
      %p43 = scmp.eq.s32.totalorder %s17, 0
      %p44 = por %p42, %p43
      %s46 = sadd.s32 %s45, 1
      %p49 = scmp.eq.s32.totalorder %s11, 1
      %p50 = scmp.ne.s32.totalorder %s45, %s47
      %p51 = scmp.eq.s32.totalorder %s11, 0
      %p52 = por %p50, %p51
      %p53 = scmp.ne.s32.totalorder %s45, %s47
      %p54 = scmp.eq.s32.totalorder %s16, 1
      %p55 = por %p53, %p54
      %p56 = scmp.ne.s32.totalorder %s47, %s48
      %p57 = scmp.eq.s32.totalorder %s16, 0
      %p58 = por %p56, %p57
      %p59 = scmp.ne.s32.totalorder %s47, %s48
      %p60 = scmp.eq.s32.totalorder %s17, 1
      %p61 = por %p59, %p60
      %p63 = scmp.ne.s32.totalorder %s48, %s62
      %p64 = scmp.eq.s32.totalorder %s17, 0
      %p65 = por %p63, %p64
      %s67 = sadd.s32 %s66, 1
      %p70 = scmp.eq.s32.totalorder %s11, 1
      %p71 = scmp.ne.s32.totalorder %s66, %s68
      %p72 = scmp.eq.s32.totalorder %s11, 0
      %p73 = por %p71, %p72
      %p74 = scmp.ne.s32.totalorder %s66, %s68
      %p75 = scmp.eq.s32.totalorder %s16, 1
      %p76 = por %p74, %p75
      %p77 = scmp.ne.s32.totalorder %s68, %s69
      %p78 = scmp.eq.s32.totalorder %s16, 0
      %p79 = por %p77, %p78
      %p80 = scmp.ne.s32.totalorder %s68, %s69
      %p81 = scmp.eq.s32.totalorder %s17, 1
      %p82 = por %p80, %p81
      %p84 = scmp.ne.s32.totalorder %s69, %s83
      %p85 = scmp.eq.s32.totalorder %s17, 0
      %p86 = por %p84, %p85
      %s87 = ssub.s32 %s11, %s18
      %p88 = scmp.eq.s32.totalorder %s87, 0
      %s90 = sadd.s32 %s89, 1
      %s91 = scalar_select %p88, %s89, %s90
      %p94 = pneg %p88
      %p95 = scmp.eq.s32.totalorder %s11, 1
      %p96 = por %p94, %p95
      %p97 = scmp.ne.s32.totalorder %s89, %s92
      %p98 = scmp.eq.s32.totalorder %s11, 0
      %p99 = por %p97, %p98
      %p100 = scmp.ne.s32.totalorder %s89, %s92
      %p101 = scmp.eq.s32.totalorder %s16, 1
      %p102 = por %p100, %p101
      %p103 = scmp.ne.s32.totalorder %s92, %s93
      %p104 = scmp.eq.s32.totalorder %s16, 0
      %p105 = por %p103, %p104
      %p106 = scmp.ne.s32.totalorder %s92, %s93
      %p107 = scmp.eq.s32.totalorder %s17, 1
      %p108 = por %p106, %p107
      %p110 = scmp.ne.s32.totalorder %s93, %s109
      %p111 = scmp.eq.s32.totalorder %s17, 0
      %p112 = por %p110, %p111
      %s113 = ssub.s32 %s11, %s18
      %p114 = scmp.eq.s32.totalorder %s113, 0
      %s116 = sadd.s32 %s115, 1
      %s117 = scalar_select %p114, %s115, %s116
      %p120 = pneg %p114
      %p121 = scmp.eq.s32.totalorder %s11, 1
      %p122 = por %p120, %p121
      %p123 = scmp.ne.s32.totalorder %s115, %s118
      %p124 = scmp.eq.s32.totalorder %s11, 0
      %p125 = por %p123, %p124
      %p126 = scmp.ne.s32.totalorder %s115, %s118
      %p127 = scmp.eq.s32.totalorder %s16, 1
      %p128 = por %p126, %p127
      %p129 = scmp.ne.s32.totalorder %s118, %s119
      %p130 = scmp.eq.s32.totalorder %s16, 0
      %p131 = por %p129, %p130
      %p132 = scmp.ne.s32.totalorder %s118, %s119
      %p133 = scmp.eq.s32.totalorder %s17, 1
      %p134 = por %p132, %p133
      %p136 = scmp.ne.s32.totalorder %s119, %s135
      %p137 = scmp.eq.s32.totalorder %s17, 0
      %p138 = por %p136, %p137
      %p139 = scmp.le.s32.totalorder 1, %s11
      %p140 = scmp.lt.s32.totalorder %s11, 3
      %p141 = pnand %p139, %p140
      %p142 = pneg %p141
      // Predicated region
      $region9: #{svhn_feature_extractor.7} parent=5 // pred_check
        _
      $region10: #{svhn_feature_extractor.7} parent=5 // pred_check_branch
        %144 = sbr.rel (%p141) target = $region12
      $region11: #{svhn_feature_extractor.7} parent=5 // pred_region
        %s145 = ssub.s32 %s11, 1
        // Predicated region
        $region13: #{svhn_feature_extractor.7} parent=11 // pred_check
          %p146 = pneg %p58
        $region14: #{svhn_feature_extractor.7} parent=11 // pred_check_branch
          %148 = sbr.rel (%p146) target = $region16
        $region15: #{svhn_feature_extractor.7} parent=11 // pred_region
          _
        $region16: #{svhn_feature_extractor.7} parent=11 // pred_fallthru
          _
        // Predicated region
        $region17: #{svhn_feature_extractor.7} parent=11 // pred_check
          %p149 = pneg %p79
        $region18: #{svhn_feature_extractor.7} parent=11 // pred_check_branch
          %151 = sbr.rel (%p149) target = $region20
        $region19: #{svhn_feature_extractor.7} parent=11 // pred_region
          _
        $region20: #{svhn_feature_extractor.7} parent=11 // pred_fallthru
          _
      $region12: #{svhn_feature_extractor.7} parent=5 // pred_fallthru
        _
      %p152 = scmp.lt.s32.totalorder %s11, 2
      // Predicated region
      $region21: #{svhn_feature_extractor.7} parent=5 // pred_check
        %p153 = pneg %p152
      $region22: #{svhn_feature_extractor.7} parent=5 // pred_check_branch
        %155 = sbr.rel (%p153) target = $region24
      $region23: #{svhn_feature_extractor.7} parent=5 // pred_region
        // Predicated region
        $region25: #{svhn_feature_extractor.7} parent=23 // pred_check
          %p156 = pneg %p31
        $region26: #{svhn_feature_extractor.7} parent=23 // pred_check_branch
          %158 = sbr.rel (%p156) target = $region28
        $region27: #{svhn_feature_extractor.7} parent=23 // pred_region
          %s159 = smul.u32 4, %s11
          %s160 = ssub.s32 7, %s159
          %p161 = scmp.lt.s32.totalorder %s160, 4
          %s162 = scalar_select %p161, %s160, 4
          %s163 = smul.u32 4, %s162
          %s164 = smul.u32 %s163, 13
          %p165 = scmp.lt.s32.totalorder %s159, 6
          %s166 = scalar_select %p165, %s159, 6
          %s167 = smul.addr %s166, 13
          %s168 = smul.addr %s167, 4
          %s169 = scalar_lea.vmem %s0, %s168
          %s170 = smul.u32 4, %s11
          %s171 = ssub.s32 7, %s170
          %p172 = scmp.lt.s32.totalorder %s171, 4
          %s173 = scalar_select %p172, %s171, 4
          %s174 = smul.u32 4, %s173
          %s175 = smul.u32 %s174, 13
        $region28: #{svhn_feature_extractor.7} parent=23 // pred_fallthru
          _
      $region24: #{svhn_feature_extractor.7} parent=5 // pred_fallthru
        _
      %p176 = scmp.le.s32.totalorder 1, %s11
      %p177 = scmp.lt.s32.totalorder %s11, 3
      %p178 = pnand %p176, %p177
      %p179 = pneg %p178
      // Predicated region
      $region29: #{svhn_feature_extractor.7} parent=5 // pred_check
        _
      $region30: #{svhn_feature_extractor.7} parent=5 // pred_check_branch
        %181 = sbr.rel (%p178) target = $region32
      $region31: #{svhn_feature_extractor.7} parent=5 // pred_region
        %s182 = ssub.s32 %s11, 1
        %s183 = smul.u32 4, %s16
        %s184 = ssub.s32 7, %s183
        %p185 = scmp.lt.s32.totalorder %s184, 4
        %s186 = scalar_select %p185, %s184, 4
        %s187 = smul.u32 4, %s186
        %s188 = smul.u32 %s187, 13
        %p189 = scmp.lt.s32.totalorder %s183, 6
        %s190 = scalar_select %p189, %s183, 6
        %s191 = smul.addr %s190, 13
        %s192 = smul.addr %s191, 4
        %s193 = scalar_lea.vmem %s0, %s192
        %p194 = pneg %p37
        %p195 = pneg %p34
        %p196 = pneg %p58
        %p197 = pneg %p55
        %p198 = pneg %p79
        %p199 = pneg %p76
        %p200 = pneg %p105
        %p201 = pneg %p102
        %s202 = sand.u32 %s92, 1
        %s203 = sand.u32 %s92, 1
        %s204 = smul.addr %s203, 16
        %s205 = scalar_lea.vmem [#allocation2], %s204
        %p206 = pneg %p131
        %p207 = pneg %p128
        %p208 = scmp.lt.s32.totalorder %s16, 1
        %s209 = scalar_select %p208, %s16, 1
        %s210 = scalar_lea.vmem %s4, %s209
        %s211 = smul.u32 4, %s16
        %s212 = ssub.s32 7, %s211
        %p213 = scmp.lt.s32.totalorder %s212, 4
        %s214 = scalar_select %p213, %s212, 4
        %s215 = smul.u32 4, %s214
        %s216 = smul.u32 %s215, 13
        %p217 = scmp.lt.s32.totalorder %s211, 6
        %s218 = scalar_select %p217, %s211, 6
        %s219 = smul.addr %s218, 13
        %s220 = smul.addr %s219, 4
        %s221 = scalar_lea.vmem %s0, %s220
        %s222 = smul.u32 4, %s16
        %s223 = ssub.s32 7, %s222
        %p224 = scmp.lt.s32.totalorder %s223, 4
        %s225 = scalar_select %p224, %s223, 4
        %s226 = smul.u32 4, %s225
        %s227 = smul.u32 %s226, 13
        %s228 = smul.u32 4, %s16
        %s229 = ssub.s32 7, %s228
        %p230 = scmp.lt.s32.totalorder %s229, 4
        %s231 = scalar_select %p230, %s229, 4
        %s232 = smul.u32 4, %s231
        %p233 = scmp.lt.s32.totalorder %s16, 1
        %s234 = scalar_select %p233, %s16, 1
        %s235 = scalar_lea.vmem %s4, %s234
        %v237 = vld [vmem:[%s221] sm:$0xff]
        %v238 = vld [vmem:[%s221 + $0x8] sm:$0xff]
        %v239 = vld [vmem:[%s221 + $0x10] sm:$0xff]
        %v240 = vld [vmem:[%s221 + $0x18] sm:$0xff]
        %v241 = vld [vmem:[%s221 + $0x20] sm:$0xff]
        %v242 = vld [vmem:[%s221 + $0x28] sm:$0xff]
        %v243 = vld [vmem:[%s221 + $0x30] sm:$0xf]
        %v244 = vld [vmem:[%s221 + $0x34] sm:$0xff]
        %v245 = vld [vmem:[%s221 + $0x3c] sm:$0xff]
        %v246 = vld [vmem:[%s221 + $0x44] sm:$0xff]
        %v247 = vld [vmem:[%s221 + $0x4c] sm:$0xff]
        %v248 = vld [vmem:[%s221 + $0x54] sm:$0xff]
        %v249 = vld [vmem:[%s221 + $0x5c] sm:$0xff]
        %v250 = vld [vmem:[%s221 + $0x64] sm:$0xf]
        %v251 = vld [vmem:[%s221 + $0x68] sm:$0xff]
        %v252 = vld [vmem:[%s221 + $0x70] sm:$0xff]
        %v253 = vld [vmem:[%s221 + $0x78] sm:$0xff]
        %v254 = vld [vmem:[%s221 + $0x80] sm:$0xff]
        %v255 = vld [vmem:[%s221 + $0x88] sm:$0xff]
        %v256 = vld [vmem:[%s221 + $0x90] sm:$0xff]
        %v257 = vld [vmem:[%s221 + $0x98] sm:$0xf]
        %v258 = vld [vmem:[%s221 + $0x9c] sm:$0xff]
        %v259 = vld [vmem:[%s221 + $0xa4] sm:$0xff]
        %v260 = vld [vmem:[%s221 + $0xac] sm:$0xff]
        %v261 = vld [vmem:[%s221 + $0xb4] sm:$0xff]
        %v262 = vld [vmem:[%s221 + $0xbc] sm:$0xff]
        %v263 = vld [vmem:[%s221 + $0xc4] sm:$0xff]
        %v264 = vld [vmem:[%s221 + $0xcc] sm:$0xf]
        %v265 = vld [vmem:[%s1] sm:$0xf]
        %v266 = vld [vmem:[%s1 + $0x4] sm:$0xf]
        %v267 = vld [vmem:[%s1 + $0x8] sm:$0xf]
        %v268 = vld [vmem:[%s1 + $0xc] sm:$0xf]
        %v269 = vld [vmem:[%s1 + $0x10] sm:$0xf]
        %v270 = vld [vmem:[%s1 + $0x14] sm:$0xf]
        %v271 = vld [vmem:[%s1 + $0x18] sm:$0xf]
        %v272 = vld [vmem:[%s1 + $0x1c] sm:$0xf]
        %v273 = vld [vmem:[%s1 + $0x20] sm:$0xf]
        %v274 = vld [vmem:[%s1 + $0x24] sm:$0xf]
        %v275 = vld [vmem:[%s1 + $0x28] sm:$0xf]
        %v276 = vld [vmem:[%s1 + $0x2c] sm:$0xf]
        %v277 = vld [vmem:[%s1 + $0x30] sm:$0xf]
        %v278 = vld [vmem:[%s1 + $0x34] sm:$0xf]
        %v279 = vld [vmem:[%s1 + $0x38] sm:$0xf]
        %v280 = vld [vmem:[%s1 + $0x3c] sm:$0xf]
        %v281 = vld [vmem:[%s1 + $0x40] sm:$0xf]
        %v282 = vld [vmem:[%s1 + $0x44] sm:$0xf]
        %v283 = vld [vmem:[%s1 + $0x48] sm:$0xf]
        %v284 = vld [vmem:[%s1 + $0x4c] sm:$0xf]
        %v285 = vld [vmem:[%s1 + $0x50] sm:$0xf]
        %v286 = vld [vmem:[%s1 + $0x54] sm:$0xf]
        %v287 = vld [vmem:[%s1 + $0x58] sm:$0xf]
        %v288 = vld [vmem:[%s1 + $0x5c] sm:$0xf]
        %v289 = vld [vmem:[%s1 + $0x60] sm:$0xf]
        %v290 = vld [vmem:[%s1 + $0x64] sm:$0xf]
        %v291 = vld [vmem:[%s1 + $0x68] sm:$0xf]
        %v292 = vld [vmem:[%s1 + $0x6c] sm:$0xf]
        %v293 = vld [vmem:[%s1 + $0x70] sm:$0xf]
        %v294 = vld [vmem:[%s1 + $0x74] sm:$0xf]
        %v295 = vld [vmem:[%s1 + $0x78] sm:$0xf]
        %v296 = vld [vmem:[%s1 + $0x7c] sm:$0xf]
        %v297 = vld [vmem:[%s1 + $0x80] sm:$0xf]
        %v298 = vld [vmem:[%s1 + $0x84] sm:$0xf]
        %v299 = vld [vmem:[%s1 + $0x88] sm:$0xf]
        %v300 = vld [vmem:[%s1 + $0x8c] sm:$0xf]
        %v301 = vld [vmem:[%s1 + $0x90] sm:$0xf]
        %v302 = vld [vmem:[%s1 + $0x94] sm:$0xf]
        %v303 = vld [vmem:[%s1 + $0x98] sm:$0xf]
        %v304 = vld [vmem:[%s1 + $0x9c] sm:$0xf]
        %v305 = vld [vmem:[%s1 + $0xa0] sm:$0xf]
        %v306 = vld [vmem:[%s1 + $0xa4] sm:$0xf]
        %v307 = vld [vmem:[%s1 + $0xa8] sm:$0xf]
        %v308 = vld [vmem:[%s1 + $0xac] sm:$0xf]
        %v309 = vld [vmem:[%s1 + $0xb0] sm:$0xf]
        %v310 = vld [vmem:[%s1 + $0xb4] sm:$0xf]
        %v311 = vld [vmem:[%s1 + $0xb8] sm:$0xf]
        %v312 = vld [vmem:[%s1 + $0xbc] sm:$0xf]
        %v313 = vld [vmem:[%s1 + $0xc0] sm:$0xf]
        %v314 = vld [vmem:[%s1 + $0xc4] sm:$0xf]
        %v315 = vld [vmem:[%s1 + $0xc8] sm:$0xf]
        %v316 = vld [vmem:[%s1 + $0xcc] sm:$0xf]
        %v317 = vld [vmem:[%s1 + $0xd0] sm:$0xf]
        %v318 = vld [vmem:[%s1 + $0xd4] sm:$0xf]
        %v319 = vld [vmem:[%s1 + $0xd8] sm:$0xf]
        %v320 = vld [vmem:[%s1 + $0xdc] sm:$0xf]
        %v321 = vld [vmem:[%s1 + $0xe0] sm:$0xf]
        %v322 = vld [vmem:[%s1 + $0xe4] sm:$0xf]
        %v323 = vld [vmem:[%s1 + $0xe8] sm:$0xf]
        %v324 = vld [vmem:[%s1 + $0xec] sm:$0xf]
        %v325 = vld [vmem:[%s1 + $0xf0] sm:$0xf]
        %v326 = vld [vmem:[%s1 + $0xf4] sm:$0xf]
        %v327 = vld [vmem:[%s1 + $0xf8] sm:$0xf]
        %v328 = vld [vmem:[%s1 + $0xfc] sm:$0xf]
        %v329 = vld [vmem:[%s1 + $0x100] sm:$0xf]
        %v330 = vld [vmem:[%s1 + $0x104] sm:$0xf]
        %v331 = vld [vmem:[%s1 + $0x108] sm:$0xf]
        %v332 = vld [vmem:[%s1 + $0x10c] sm:$0xf]
        %v333 = vld [vmem:[%s1 + $0x110] sm:$0xf]
        %v334 = vld [vmem:[%s1 + $0x114] sm:$0xf]
        %v335 = vld [vmem:[%s1 + $0x118] sm:$0xf]
        %v336 = vld [vmem:[%s1 + $0x11c] sm:$0xf]
        %v337 = vld [vmem:[%s1 + $0x120] sm:$0xf]
        %v338 = vld [vmem:[%s1 + $0x124] sm:$0xf]
        %v339 = vld [vmem:[%s1 + $0x128] sm:$0xf]
        %v340 = vld [vmem:[%s1 + $0x12c] sm:$0xf]
        %v341 = vld [vmem:[%s1 + $0x130] sm:$0xf]
        %v342 = vld [vmem:[%s1 + $0x134] sm:$0xf]
        %v343 = vld [vmem:[%s1 + $0x138] sm:$0xf]
        %v344 = vld [vmem:[%s1 + $0x13c] sm:$0xf]
        %v345 = vld [vmem:[%s1 + $0x140] sm:$0xf]
        %v346 = vld [vmem:[%s1 + $0x144] sm:$0xf]
        %v347 = vld [vmem:[%s1 + $0x148] sm:$0xf]
        %v348 = vld [vmem:[%s1 + $0x14c] sm:$0xf]
        %v349 = vld [vmem:[%s1 + $0x150] sm:$0xf]
        %v350 = vld [vmem:[%s1 + $0x154] sm:$0xf]
        %v351 = vld [vmem:[%s1 + $0x158] sm:$0xf]
        %v352 = vld [vmem:[%s1 + $0x15c] sm:$0xf]
        %v353 = vld [vmem:[%s1 + $0x160] sm:$0xf]
        %v354 = vld [vmem:[%s1 + $0x164] sm:$0xf]
        %v355 = vld [vmem:[%s1 + $0x168] sm:$0xf]
        %v356 = vld [vmem:[%s1 + $0x16c] sm:$0xf]
        %v357 = vld [vmem:[%s1 + $0x170] sm:$0xf]
        %v358 = vld [vmem:[%s1 + $0x174] sm:$0xf]
        %v359 = vld [vmem:[%s1 + $0x178] sm:$0xf]
        %v360 = vld [vmem:[%s1 + $0x17c] sm:$0xf]
        %v361 = vld [vmem:[%s1 + $0x180] sm:$0xf]
        %v362 = vld [vmem:[%s1 + $0x184] sm:$0xf]
        %v363 = vld [vmem:[%s1 + $0x188] sm:$0xf]
        %v364 = vld [vmem:[%s1 + $0x18c] sm:$0xf]
        %v365 = vld [vmem:[%s1 + $0x190] sm:$0xf]
        %v366 = vld [vmem:[%s1 + $0x194] sm:$0xf]
        %v367 = vld [vmem:[%s1 + $0x198] sm:$0xf]
        %v368 = vld [vmem:[%s1 + $0x19c] sm:$0xf]
        %v369 = vld [vmem:[%s1 + $0x1a0] sm:$0xf]
        %v370 = vld [vmem:[%s1 + $0x1a4] sm:$0xf]
        %v371 = vld [vmem:[%s1 + $0x1a8] sm:$0xf]
        %v372 = vld [vmem:[%s1 + $0x1ac] sm:$0xf]
        %v373 = vld [vmem:[%s1 + $0x1b0] sm:$0xf]
        %v374 = vld [vmem:[%s1 + $0x1b4] sm:$0xf]
        %v375 = vld [vmem:[%s1 + $0x1b8] sm:$0xf]
        %v376 = vld [vmem:[%s1 + $0x1bc] sm:$0xf]
        %v377 = vld [vmem:[%s1 + $0x1c0] sm:$0xf]
        %v378 = vld [vmem:[%s1 + $0x1c4] sm:$0xf]
        %v379 = vld [vmem:[%s1 + $0x1c8] sm:$0xf]
        %v380 = vld [vmem:[%s1 + $0x1cc] sm:$0xf]
        %v381 = vld [vmem:[%s1 + $0x1d0] sm:$0xf]
        %v382 = vld [vmem:[%s1 + $0x1d4] sm:$0xf]
        %v383 = vld [vmem:[%s1 + $0x1d8] sm:$0xf]
        %v384 = vld [vmem:[%s1 + $0x1dc] sm:$0xf]
        %v385 = vld [vmem:[%s1 + $0x1e0] sm:$0xf]
        %v386 = vld [vmem:[%s1 + $0x1e4] sm:$0xf]
        %v387 = vld [vmem:[%s1 + $0x1e8] sm:$0xf]
        %v388 = vld [vmem:[%s1 + $0x1ec] sm:$0xf]
        %v389 = vld [vmem:[%s1 + $0x1f0] sm:$0xf]
        %v390 = vld [vmem:[%s1 + $0x1f4] sm:$0xf]
        %v391 = vld [vmem:[%s1 + $0x1f8] sm:$0xf]
        %v392 = vld [vmem:[%s1 + $0x1fc] sm:$0xf]
        %v393 = vld [vmem:[%s1 + $0x200] sm:$0xf]
        %v394 = vld [vmem:[%s1 + $0x204] sm:$0xf]
        %v395 = vld [vmem:[%s1 + $0x208] sm:$0xf]
        %v396 = vld [vmem:[%s1 + $0x20c] sm:$0xf]
        %v397 = vld [vmem:[%s1 + $0x210] sm:$0xf]
        %v398 = vld [vmem:[%s1 + $0x214] sm:$0xf]
        %v399 = vld [vmem:[%s1 + $0x218] sm:$0xf]
        %v400 = vld [vmem:[%s1 + $0x21c] sm:$0xf]
        %v401 = vld [vmem:[%s1 + $0x220] sm:$0xf]
        %v402 = vld [vmem:[%s1 + $0x224] sm:$0xf]
        %v403 = vld [vmem:[%s1 + $0x228] sm:$0xf]
        %v404 = vld [vmem:[%s1 + $0x22c] sm:$0xf]
        %v405 = vld [vmem:[%s1 + $0x230] sm:$0xf]
        %v406 = vld [vmem:[%s1 + $0x234] sm:$0xf]
        %v407 = vld [vmem:[%s1 + $0x238] sm:$0xf]
        %v408 = vld [vmem:[%s1 + $0x23c] sm:$0xf]
        %v409 = vld [vmem:[%s1 + $0x240] sm:$0xf]
        %v410 = vld [vmem:[%s1 + $0x244] sm:$0xf]
        %v411 = vld [vmem:[%s1 + $0x248] sm:$0xf]
        %v412 = vld [vmem:[%s1 + $0x24c] sm:$0xf]
        %v413 = vld [vmem:[%s1 + $0x250] sm:$0xf]
        %v414 = vld [vmem:[%s1 + $0x254] sm:$0xf]
        %v415 = vld [vmem:[%s1 + $0x258] sm:$0xf]
        %v416 = vld [vmem:[%s1 + $0x25c] sm:$0xf]
        %v417 = vld [vmem:[%s1 + $0x260] sm:$0xf]
        %v418 = vld [vmem:[%s1 + $0x264] sm:$0xf]
        %v419 = vld [vmem:[%s1 + $0x268] sm:$0xf]
        %v420 = vld [vmem:[%s1 + $0x26c] sm:$0xf]
        %v421 = vld [vmem:[%s1 + $0x270] sm:$0xf]
        %v422 = vld [vmem:[%s1 + $0x274] sm:$0xf]
        %v423 = vld [vmem:[%s1 + $0x278] sm:$0xf]
        %v424 = vld [vmem:[%s1 + $0x27c] sm:$0xf]
        %v425 = vld [vmem:[%s1 + $0x280] sm:$0xf]
        %v426 = vld [vmem:[%s1 + $0x284] sm:$0xf]
        %v427 = vld [vmem:[%s1 + $0x288] sm:$0xf]
        %v428 = vld [vmem:[%s1 + $0x28c] sm:$0xf]
        %v429 = vld [vmem:[%s1 + $0x290] sm:$0xf]
        %v430 = vld [vmem:[%s1 + $0x294] sm:$0xf]
        %v431 = vld [vmem:[%s1 + $0x298] sm:$0xf]
        %v432 = vld [vmem:[%s1 + $0x29c] sm:$0xf]
        %v433 = vld [vmem:[%s1 + $0x2a0] sm:$0xf]
        %v434 = vld [vmem:[%s1 + $0x2a4] sm:$0xf]
        %v435 = vld [vmem:[%s1 + $0x2a8] sm:$0xf]
        %v436 = vld [vmem:[%s1 + $0x2ac] sm:$0xf]
        %v437 = vld [vmem:[%s1 + $0x2b0] sm:$0xf]
        %v438 = vld [vmem:[%s1 + $0x2b4] sm:$0xf]
        %v439 = vld [vmem:[%s1 + $0x2b8] sm:$0xf]
        %v440 = vld [vmem:[%s1 + $0x2bc] sm:$0xf]
        %v441 = vld [vmem:[%s1 + $0x2c0] sm:$0xf]
        %v442 = vld [vmem:[%s1 + $0x2c4] sm:$0xf]
        %v443 = vld [vmem:[%s1 + $0x2c8] sm:$0xf]
        %v444 = vld [vmem:[%s1 + $0x2cc] sm:$0xf]
        %v445 = vld [vmem:[%s1 + $0x2d0] sm:$0xf]
        %v446 = vld [vmem:[%s1 + $0x2d4] sm:$0xf]
        %v447 = vld [vmem:[%s1 + $0x2d8] sm:$0xf]
        %v448 = vld [vmem:[%s1 + $0x2dc] sm:$0xf]
        %v449 = vld [vmem:[%s1 + $0x2e0] sm:$0xf]
        %v450 = vld [vmem:[%s1 + $0x2e4] sm:$0xf]
        %v451 = vld [vmem:[%s1 + $0x2e8] sm:$0xf]
        %v452 = vld [vmem:[%s1 + $0x2ec] sm:$0xf]
        %v453 = vld [vmem:[%s1 + $0x2f0] sm:$0xf]
        %v454 = vld [vmem:[%s1 + $0x2f4] sm:$0xf]
        %v455 = vld [vmem:[%s1 + $0x2f8] sm:$0xf]
        %v456 = vld [vmem:[%s1 + $0x2fc] sm:$0xf]
        %v457 = vld [vmem:[%s1 + $0x300] sm:$0xf]
        %v458 = vld [vmem:[%s1 + $0x304] sm:$0xf]
        %v459 = vld [vmem:[%s1 + $0x308] sm:$0xf]
        %v460 = vld [vmem:[%s1 + $0x30c] sm:$0xf]
        %v461 = vld [vmem:[%s1 + $0x310] sm:$0xf]
        %v462 = vld [vmem:[%s1 + $0x314] sm:$0xf]
        %v463 = vld [vmem:[%s1 + $0x318] sm:$0xf]
        %v464 = vld [vmem:[%s1 + $0x31c] sm:$0xf]
        %v465 = vld [vmem:[%s2] sm:$0x1]
        %v467 = vperm.slane %v465, 0
        %v497 = vunpack.c.l.b16 %v237
        %v498 = vunpack.c.h.b16 %v237
        %v499 = vunpack.c.l.b16 %v238
        %v500 = vunpack.c.h.b16 %v238
        %v501 = vunpack.c.l.b16 %v239
        %v502 = vunpack.c.h.b16 %v239
        %v503 = vunpack.c.l.b16 %v240
        %v504 = vunpack.c.h.b16 %v240
        %v505 = vunpack.c.l.b16 %v241
        %v506 = vunpack.c.h.b16 %v241
        %v507 = vunpack.c.l.b16 %v242
        %v508 = vunpack.c.h.b16 %v242
        %v509 = vunpack.c.l.b16 %v243
        %v510 = vunpack.c.l.b16 %v244
        %v511 = vunpack.c.h.b16 %v244
        %v512 = vunpack.c.l.b16 %v245
        %v513 = vunpack.c.h.b16 %v245
        %v514 = vunpack.c.l.b16 %v246
        %v515 = vunpack.c.h.b16 %v246
        %v516 = vunpack.c.l.b16 %v247
        %v517 = vunpack.c.h.b16 %v247
        %v518 = vunpack.c.l.b16 %v248
        %v519 = vunpack.c.h.b16 %v248
        %v520 = vunpack.c.l.b16 %v249
        %v521 = vunpack.c.h.b16 %v249
        %v522 = vunpack.c.l.b16 %v250
        %v523 = vunpack.c.l.b16 %v251
        %v524 = vunpack.c.h.b16 %v251
        %v525 = vunpack.c.l.b16 %v252
        %v526 = vunpack.c.h.b16 %v252
        %v527 = vunpack.c.l.b16 %v253
        %v528 = vunpack.c.h.b16 %v253
        %v529 = vunpack.c.l.b16 %v254
        %v530 = vunpack.c.h.b16 %v254
        %v531 = vunpack.c.l.b16 %v255
        %v532 = vunpack.c.h.b16 %v255
        %v533 = vunpack.c.l.b16 %v256
        %v534 = vunpack.c.h.b16 %v256
        %v535 = vunpack.c.l.b16 %v257
        %v536 = vunpack.c.l.b16 %v258
        %v537 = vunpack.c.h.b16 %v258
        %v538 = vunpack.c.l.b16 %v259
        %v539 = vunpack.c.h.b16 %v259
        %v540 = vunpack.c.l.b16 %v260
        %v541 = vunpack.c.h.b16 %v260
        %v542 = vunpack.c.l.b16 %v261
        %v543 = vunpack.c.h.b16 %v261
        %v544 = vunpack.c.l.b16 %v262
        %v545 = vunpack.c.h.b16 %v262
        %v546 = vunpack.c.l.b16 %v263
        %v547 = vunpack.c.h.b16 %v263
        %v548 = vunpack.c.l.b16 %v264
        %v549 = vpack.c.b16 %v510, %v497
        %v550 = vpack.c.b16 %v511, %v498
        %v551 = vpack.c.b16 %v512, %v499
        %v552 = vpack.c.b16 %v513, %v500
        %v553 = vpack.c.b16 %v514, %v501
        %v554 = vpack.c.b16 %v515, %v502
        %v555 = vpack.c.b16 %v516, %v503
        %v556 = vpack.c.b16 %v517, %v504
        %v557 = vpack.c.b16 %v518, %v505
        %v558 = vpack.c.b16 %v519, %v506
        %v559 = vpack.c.b16 %v520, %v507
        %v560 = vpack.c.b16 %v521, %v508
        %v561 = vpack.c.b16 %v522, %v509
        %v562 = vpack.c.b16 %v536, %v523
        %v563 = vpack.c.b16 %v537, %v524
        %v564 = vpack.c.b16 %v538, %v525
        %v565 = vpack.c.b16 %v539, %v526
        %v566 = vpack.c.b16 %v540, %v527
        %v567 = vpack.c.b16 %v541, %v528
        %v568 = vpack.c.b16 %v542, %v529
        %v569 = vpack.c.b16 %v543, %v530
        %v570 = vpack.c.b16 %v544, %v531
        %v571 = vpack.c.b16 %v545, %v532
        %v572 = vpack.c.b16 %v546, %v533
        %v573 = vpack.c.b16 %v547, %v534
        %v574 = vpack.c.b16 %v548, %v535
        %v799 = vunpack.c.l.b16 %v265
        %v800 = vunpack.c.l.b16 %v266
        %v801 = vunpack.c.l.b16 %v267
        %v802 = vunpack.c.l.b16 %v268
        %v803 = vunpack.c.l.b16 %v269
        %v804 = vunpack.c.l.b16 %v270
        %v805 = vunpack.c.l.b16 %v271
        %v806 = vunpack.c.l.b16 %v272
        %v807 = vunpack.c.l.b16 %v273
        %v808 = vunpack.c.l.b16 %v274
        %v809 = vunpack.c.l.b16 %v275
        %v810 = vunpack.c.l.b16 %v276
        %v811 = vunpack.c.l.b16 %v277
        %v812 = vunpack.c.l.b16 %v278
        %v813 = vunpack.c.l.b16 %v279
        %v814 = vunpack.c.l.b16 %v280
        %v815 = vunpack.c.l.b16 %v281
        %v816 = vunpack.c.l.b16 %v282
        %v817 = vunpack.c.l.b16 %v283
        %v818 = vunpack.c.l.b16 %v284
        %v819 = vunpack.c.l.b16 %v285
        %v820 = vunpack.c.l.b16 %v286
        %v821 = vunpack.c.l.b16 %v287
        %v822 = vunpack.c.l.b16 %v288
        %v823 = vunpack.c.l.b16 %v289
        %v824 = vunpack.c.l.b16 %v290
        %v825 = vunpack.c.l.b16 %v291
        %v826 = vunpack.c.l.b16 %v292
        %v827 = vunpack.c.l.b16 %v293
        %v828 = vunpack.c.l.b16 %v294
        %v829 = vunpack.c.l.b16 %v295
        %v830 = vunpack.c.l.b16 %v296
        %v831 = vunpack.c.l.b16 %v297
        %v832 = vunpack.c.l.b16 %v298
        %v833 = vunpack.c.l.b16 %v299
        %v834 = vunpack.c.l.b16 %v300
        %v835 = vunpack.c.l.b16 %v301
        %v836 = vunpack.c.l.b16 %v302
        %v837 = vunpack.c.l.b16 %v303
        %v838 = vunpack.c.l.b16 %v304
        %v839 = vunpack.c.l.b16 %v305
        %v840 = vunpack.c.l.b16 %v306
        %v841 = vunpack.c.l.b16 %v307
        %v842 = vunpack.c.l.b16 %v308
        %v843 = vunpack.c.l.b16 %v309
        %v844 = vunpack.c.l.b16 %v310
        %v845 = vunpack.c.l.b16 %v311
        %v846 = vunpack.c.l.b16 %v312
        %v847 = vunpack.c.l.b16 %v313
        %v848 = vunpack.c.l.b16 %v314
        %v849 = vunpack.c.l.b16 %v315
        %v850 = vunpack.c.l.b16 %v316
        %v851 = vunpack.c.l.b16 %v317
        %v852 = vunpack.c.l.b16 %v318
        %v853 = vunpack.c.l.b16 %v319
        %v854 = vunpack.c.l.b16 %v320
        %v855 = vunpack.c.l.b16 %v321
        %v856 = vunpack.c.l.b16 %v322
        %v857 = vunpack.c.l.b16 %v323
        %v858 = vunpack.c.l.b16 %v324
        %v859 = vunpack.c.l.b16 %v325
        %v860 = vunpack.c.l.b16 %v326
        %v861 = vunpack.c.l.b16 %v327
        %v862 = vunpack.c.l.b16 %v328
        %v863 = vunpack.c.l.b16 %v329
        %v864 = vunpack.c.l.b16 %v330
        %v865 = vunpack.c.l.b16 %v331
        %v866 = vunpack.c.l.b16 %v332
        %v867 = vunpack.c.l.b16 %v333
        %v868 = vunpack.c.l.b16 %v334
        %v869 = vunpack.c.l.b16 %v335
        %v870 = vunpack.c.l.b16 %v336
        %v871 = vunpack.c.l.b16 %v337
        %v872 = vunpack.c.l.b16 %v338
        %v873 = vunpack.c.l.b16 %v339
        %v874 = vunpack.c.l.b16 %v340
        %v875 = vunpack.c.l.b16 %v341
        %v876 = vunpack.c.l.b16 %v342
        %v877 = vunpack.c.l.b16 %v343
        %v878 = vunpack.c.l.b16 %v344
        %v879 = vunpack.c.l.b16 %v345
        %v880 = vunpack.c.l.b16 %v346
        %v881 = vunpack.c.l.b16 %v347
        %v882 = vunpack.c.l.b16 %v348
        %v883 = vunpack.c.l.b16 %v349
        %v884 = vunpack.c.l.b16 %v350
        %v885 = vunpack.c.l.b16 %v351
        %v886 = vunpack.c.l.b16 %v352
        %v887 = vunpack.c.l.b16 %v353
        %v888 = vunpack.c.l.b16 %v354
        %v889 = vunpack.c.l.b16 %v355
        %v890 = vunpack.c.l.b16 %v356
        %v891 = vunpack.c.l.b16 %v357
        %v892 = vunpack.c.l.b16 %v358
        %v893 = vunpack.c.l.b16 %v359
        %v894 = vunpack.c.l.b16 %v360
        %v895 = vunpack.c.l.b16 %v361
        %v896 = vunpack.c.l.b16 %v362
        %v897 = vunpack.c.l.b16 %v363
        %v898 = vunpack.c.l.b16 %v364
        %v899 = vunpack.c.l.b16 %v365
        %v900 = vunpack.c.l.b16 %v366
        %v901 = vunpack.c.l.b16 %v367
        %v902 = vunpack.c.l.b16 %v368
        %v903 = vunpack.c.l.b16 %v369
        %v904 = vunpack.c.l.b16 %v370
        %v905 = vunpack.c.l.b16 %v371
        %v906 = vunpack.c.l.b16 %v372
        %v907 = vunpack.c.l.b16 %v373
        %v908 = vunpack.c.l.b16 %v374
        %v909 = vunpack.c.l.b16 %v375
        %v910 = vunpack.c.l.b16 %v376
        %v911 = vunpack.c.l.b16 %v377
        %v912 = vunpack.c.l.b16 %v378
        %v913 = vunpack.c.l.b16 %v379
        %v914 = vunpack.c.l.b16 %v380
        %v915 = vunpack.c.l.b16 %v381
        %v916 = vunpack.c.l.b16 %v382
        %v917 = vunpack.c.l.b16 %v383
        %v918 = vunpack.c.l.b16 %v384
        %v919 = vunpack.c.l.b16 %v385
        %v920 = vunpack.c.l.b16 %v386
        %v921 = vunpack.c.l.b16 %v387
        %v922 = vunpack.c.l.b16 %v388
        %v923 = vunpack.c.l.b16 %v389
        %v924 = vunpack.c.l.b16 %v390
        %v925 = vunpack.c.l.b16 %v391
        %v926 = vunpack.c.l.b16 %v392
        %v927 = vunpack.c.l.b16 %v393
        %v928 = vunpack.c.l.b16 %v394
        %v929 = vunpack.c.l.b16 %v395
        %v930 = vunpack.c.l.b16 %v396
        %v931 = vunpack.c.l.b16 %v397
        %v932 = vunpack.c.l.b16 %v398
        %v933 = vunpack.c.l.b16 %v399
        %v934 = vunpack.c.l.b16 %v400
        %v935 = vunpack.c.l.b16 %v401
        %v936 = vunpack.c.l.b16 %v402
        %v937 = vunpack.c.l.b16 %v403
        %v938 = vunpack.c.l.b16 %v404
        %v939 = vunpack.c.l.b16 %v405
        %v940 = vunpack.c.l.b16 %v406
        %v941 = vunpack.c.l.b16 %v407
        %v942 = vunpack.c.l.b16 %v408
        %v943 = vunpack.c.l.b16 %v409
        %v944 = vunpack.c.l.b16 %v410
        %v945 = vunpack.c.l.b16 %v411
        %v946 = vunpack.c.l.b16 %v412
        %v947 = vunpack.c.l.b16 %v413
        %v948 = vunpack.c.l.b16 %v414
        %v949 = vunpack.c.l.b16 %v415
        %v950 = vunpack.c.l.b16 %v416
        %v951 = vunpack.c.l.b16 %v417
        %v952 = vunpack.c.l.b16 %v418
        %v953 = vunpack.c.l.b16 %v419
        %v954 = vunpack.c.l.b16 %v420
        %v955 = vunpack.c.l.b16 %v421
        %v956 = vunpack.c.l.b16 %v422
        %v957 = vunpack.c.l.b16 %v423
        %v958 = vunpack.c.l.b16 %v424
        %v959 = vunpack.c.l.b16 %v425
        %v960 = vunpack.c.l.b16 %v426
        %v961 = vunpack.c.l.b16 %v427
        %v962 = vunpack.c.l.b16 %v428
        %v963 = vunpack.c.l.b16 %v429
        %v964 = vunpack.c.l.b16 %v430
        %v965 = vunpack.c.l.b16 %v431
        %v966 = vunpack.c.l.b16 %v432
        %v967 = vunpack.c.l.b16 %v433
        %v968 = vunpack.c.l.b16 %v434
        %v969 = vunpack.c.l.b16 %v435
        %v970 = vunpack.c.l.b16 %v436
        %v971 = vunpack.c.l.b16 %v437
        %v972 = vunpack.c.l.b16 %v438
        %v973 = vunpack.c.l.b16 %v439
        %v974 = vunpack.c.l.b16 %v440
        %v975 = vunpack.c.l.b16 %v441
        %v976 = vunpack.c.l.b16 %v442
        %v977 = vunpack.c.l.b16 %v443
        %v978 = vunpack.c.l.b16 %v444
        %v979 = vunpack.c.l.b16 %v445
        %v980 = vunpack.c.l.b16 %v446
        %v981 = vunpack.c.l.b16 %v447
        %v982 = vunpack.c.l.b16 %v448
        %v983 = vunpack.c.l.b16 %v449
        %v984 = vunpack.c.l.b16 %v450
        %v985 = vunpack.c.l.b16 %v451
        %v986 = vunpack.c.l.b16 %v452
        %v987 = vunpack.c.l.b16 %v453
        %v988 = vunpack.c.l.b16 %v454
        %v989 = vunpack.c.l.b16 %v455
        %v990 = vunpack.c.l.b16 %v456
        %v991 = vunpack.c.l.b16 %v457
        %v992 = vunpack.c.l.b16 %v458
        %v993 = vunpack.c.l.b16 %v459
        %v994 = vunpack.c.l.b16 %v460
        %v995 = vunpack.c.l.b16 %v461
        %v996 = vunpack.c.l.b16 %v462
        %v997 = vunpack.c.l.b16 %v463
        %v998 = vunpack.c.l.b16 %v464
        %v999 = vpack.c.b16 %v800, %v799
        %v1000 = vpack.c.b16 %v802, %v801
        %v1001 = vpack.c.b16 %v804, %v803
        %v1002 = vpack.c.b16 %v806, %v805
        %v1003 = vpack.c.b16 %v808, %v807
        %v1004 = vpack.c.b16 %v810, %v809
        %v1005 = vpack.c.b16 %v812, %v811
        %v1006 = vpack.c.b16 %v814, %v813
        %v1007 = vpack.c.b16 %v816, %v815
        %v1008 = vpack.c.b16 %v818, %v817
        %v1009 = vpack.c.b16 %v820, %v819
        %v1010 = vpack.c.b16 %v822, %v821
        %v1011 = vpack.c.b16 %v824, %v823
        %v1012 = vpack.c.b16 %v826, %v825
        %v1013 = vpack.c.b16 %v828, %v827
        %v1014 = vpack.c.b16 %v830, %v829
        %v1015 = vpack.c.b16 %v832, %v831
        %v1016 = vpack.c.b16 %v834, %v833
        %v1017 = vpack.c.b16 %v836, %v835
        %v1018 = vpack.c.b16 %v838, %v837
        %v1019 = vpack.c.b16 %v840, %v839
        %v1020 = vpack.c.b16 %v842, %v841
        %v1021 = vpack.c.b16 %v844, %v843
        %v1022 = vpack.c.b16 %v846, %v845
        %v1023 = vpack.c.b16 %v848, %v847
        %v1024 = vpack.c.b16 %v850, %v849
        %v1025 = vpack.c.b16 %v852, %v851
        %v1026 = vpack.c.b16 %v854, %v853
        %v1027 = vpack.c.b16 %v856, %v855
        %v1028 = vpack.c.b16 %v858, %v857
        %v1029 = vpack.c.b16 %v860, %v859
        %v1030 = vpack.c.b16 %v862, %v861
        %v1031 = vpack.c.b16 %v864, %v863
        %v1032 = vpack.c.b16 %v866, %v865
        %v1033 = vpack.c.b16 %v868, %v867
        %v1034 = vpack.c.b16 %v870, %v869
        %v1035 = vpack.c.b16 %v872, %v871
        %v1036 = vpack.c.b16 %v874, %v873
        %v1037 = vpack.c.b16 %v876, %v875
        %v1038 = vpack.c.b16 %v878, %v877
        %v1039 = vpack.c.b16 %v880, %v879
        %v1040 = vpack.c.b16 %v882, %v881
        %v1041 = vpack.c.b16 %v884, %v883
        %v1042 = vpack.c.b16 %v886, %v885
        %v1043 = vpack.c.b16 %v888, %v887
        %v1044 = vpack.c.b16 %v890, %v889
        %v1045 = vpack.c.b16 %v892, %v891
        %v1046 = vpack.c.b16 %v894, %v893
        %v1047 = vpack.c.b16 %v896, %v895
        %v1048 = vpack.c.b16 %v898, %v897
        %v1049 = vpack.c.b16 %v900, %v899
        %v1050 = vpack.c.b16 %v902, %v901
        %v1051 = vpack.c.b16 %v904, %v903
        %v1052 = vpack.c.b16 %v906, %v905
        %v1053 = vpack.c.b16 %v908, %v907
        %v1054 = vpack.c.b16 %v910, %v909
        %v1055 = vpack.c.b16 %v912, %v911
        %v1056 = vpack.c.b16 %v914, %v913
        %v1057 = vpack.c.b16 %v916, %v915
        %v1058 = vpack.c.b16 %v918, %v917
        %v1059 = vpack.c.b16 %v920, %v919
        %v1060 = vpack.c.b16 %v922, %v921
        %v1061 = vpack.c.b16 %v924, %v923
        %v1062 = vpack.c.b16 %v926, %v925
        %v1063 = vpack.c.b16 %v928, %v927
        %v1064 = vpack.c.b16 %v930, %v929
        %v1065 = vpack.c.b16 %v932, %v931
        %v1066 = vpack.c.b16 %v934, %v933
        %v1067 = vpack.c.b16 %v936, %v935
        %v1068 = vpack.c.b16 %v938, %v937
        %v1069 = vpack.c.b16 %v940, %v939
        %v1070 = vpack.c.b16 %v942, %v941
        %v1071 = vpack.c.b16 %v944, %v943
        %v1072 = vpack.c.b16 %v946, %v945
        %v1073 = vpack.c.b16 %v948, %v947
        %v1074 = vpack.c.b16 %v950, %v949
        %v1075 = vpack.c.b16 %v952, %v951
        %v1076 = vpack.c.b16 %v954, %v953
        %v1077 = vpack.c.b16 %v956, %v955
        %v1078 = vpack.c.b16 %v958, %v957
        %v1079 = vpack.c.b16 %v960, %v959
        %v1080 = vpack.c.b16 %v962, %v961
        %v1081 = vpack.c.b16 %v964, %v963
        %v1082 = vpack.c.b16 %v966, %v965
        %v1083 = vpack.c.b16 %v968, %v967
        %v1084 = vpack.c.b16 %v970, %v969
        %v1085 = vpack.c.b16 %v972, %v971
        %v1086 = vpack.c.b16 %v974, %v973
        %v1087 = vpack.c.b16 %v976, %v975
        %v1088 = vpack.c.b16 %v978, %v977
        %v1089 = vpack.c.b16 %v980, %v979
        %v1090 = vpack.c.b16 %v982, %v981
        %v1091 = vpack.c.b16 %v984, %v983
        %v1092 = vpack.c.b16 %v986, %v985
        %v1093 = vpack.c.b16 %v988, %v987
        %v1094 = vpack.c.b16 %v990, %v989
        %v1095 = vpack.c.b16 %v992, %v991
        %v1096 = vpack.c.b16 %v994, %v993
        %v1097 = vpack.c.b16 %v996, %v995
        %v1098 = vpack.c.b16 %v998, %v997
        %vm1199 = vcmask 523264
        %v1201 = vsel %vm1199, %v561, 0
        %v1204 = vsel %vm1199, %v574, 0
        %1206 = vmatpush.bf16.msra.mxu0 %v1006
        %1207 = vmatpush.bf16.msra.mxu0 %v1005
        %1208 = vmatpush.bf16.msra.mxu0 %v1004
        %1209 = vmatpush.bf16.msra.mxu0 %v1003
        %1210 = vmatpush.bf16.msra.mxu0 %v1002
        %1211 = vmatpush.bf16.msra.mxu0 %v1001
        %1212 = vmatpush.bf16.msra.mxu0 %v1000
        %1213 = vmatpush.bf16.msra.mxu0 %v999
        %1214 = vmatmul.bf16.gmra.mxu0 %v549
        %v1215 = vpop.f32.mrf.mxu0
        %v1216 = vadd.f32 %v467, %v1215
        %v1217 = vpop.f32.mrf.mxu0
        %v1218 = vadd.f32 %v467, %v1217
        %1219 = vmatmul.bf16.gmra.mxu0 %v562
        %v1220 = vpop.f32.mrf.mxu0
        %v1221 = vadd.f32 %v467, %v1220
        %v1222 = vpop.f32.mrf.mxu0
        %v1223 = vadd.f32 %v467, %v1222
        %1224 = vdwg.mxu0
        %1225 = vmatpush.bf16.msra.mxu0 %v1014
        %1226 = vmatpush.bf16.msra.mxu0 %v1013
        %1227 = vmatpush.bf16.msra.mxu0 %v1012
        %1228 = vmatpush.bf16.msra.mxu0 %v1011
        %1229 = vmatpush.bf16.msra.mxu0 %v1010
        %1230 = vmatpush.bf16.msra.mxu0 %v1009
        %1231 = vmatpush.bf16.msra.mxu0 %v1008
        %1232 = vmatpush.bf16.msra.mxu0 %v1007
        %1233 = vmatmul.bf16.gmra.mxu0 %v550
        %v1234 = vpop.f32.mrf.mxu0
        %v1235 = vadd.f32 %v1216, %v1234
        %v1236 = vpop.f32.mrf.mxu0
        %v1237 = vadd.f32 %v1218, %v1236
        %1238 = vmatmul.bf16.gmra.mxu0 %v563
        %v1239 = vpop.f32.mrf.mxu0
        %v1240 = vadd.f32 %v1221, %v1239
        %v1241 = vpop.f32.mrf.mxu0
        %v1242 = vadd.f32 %v1223, %v1241
        %1243 = vdwg.mxu0
        %1244 = vmatpush.bf16.msra.mxu0 %v1022
        %1245 = vmatpush.bf16.msra.mxu0 %v1021
        %1246 = vmatpush.bf16.msra.mxu0 %v1020
        %1247 = vmatpush.bf16.msra.mxu0 %v1019
        %1248 = vmatpush.bf16.msra.mxu0 %v1018
        %1249 = vmatpush.bf16.msra.mxu0 %v1017
        %1250 = vmatpush.bf16.msra.mxu0 %v1016
        %1251 = vmatpush.bf16.msra.mxu0 %v1015
        %1252 = vmatmul.bf16.gmra.mxu0 %v551
        %v1253 = vpop.f32.mrf.mxu0
        %v1254 = vadd.f32 %v1235, %v1253
        %v1255 = vpop.f32.mrf.mxu0
        %v1256 = vadd.f32 %v1237, %v1255
        %1257 = vmatmul.bf16.gmra.mxu0 %v564
        %v1258 = vpop.f32.mrf.mxu0
        %v1259 = vadd.f32 %v1240, %v1258
        %v1260 = vpop.f32.mrf.mxu0
        %v1261 = vadd.f32 %v1242, %v1260
        %1262 = vdwg.mxu0
        %1263 = vmatpush.bf16.msra.mxu0 %v1030
        %1264 = vmatpush.bf16.msra.mxu0 %v1029
        %1265 = vmatpush.bf16.msra.mxu0 %v1028
        %1266 = vmatpush.bf16.msra.mxu0 %v1027
        %1267 = vmatpush.bf16.msra.mxu0 %v1026
        %1268 = vmatpush.bf16.msra.mxu0 %v1025
        %1269 = vmatpush.bf16.msra.mxu0 %v1024
        %1270 = vmatpush.bf16.msra.mxu0 %v1023
        %1271 = vmatmul.bf16.gmra.mxu0 %v552
        %v1272 = vpop.f32.mrf.mxu0
        %v1273 = vadd.f32 %v1254, %v1272
        %v1274 = vpop.f32.mrf.mxu0
        %v1275 = vadd.f32 %v1256, %v1274
        %1276 = vmatmul.bf16.gmra.mxu0 %v565
        %v1277 = vpop.f32.mrf.mxu0
        %v1278 = vadd.f32 %v1259, %v1277
        %v1279 = vpop.f32.mrf.mxu0
        %v1280 = vadd.f32 %v1261, %v1279
        %1281 = vdwg.mxu0
        %1282 = vmatpush.bf16.msra.mxu0 %v1038
        %1283 = vmatpush.bf16.msra.mxu0 %v1037
        %1284 = vmatpush.bf16.msra.mxu0 %v1036
        %1285 = vmatpush.bf16.msra.mxu0 %v1035
        %1286 = vmatpush.bf16.msra.mxu0 %v1034
        %1287 = vmatpush.bf16.msra.mxu0 %v1033
        %1288 = vmatpush.bf16.msra.mxu0 %v1032
        %1289 = vmatpush.bf16.msra.mxu0 %v1031
        %1290 = vmatmul.bf16.gmra.mxu0 %v553
        %v1291 = vpop.f32.mrf.mxu0
        %v1292 = vadd.f32 %v1273, %v1291
        %v1293 = vpop.f32.mrf.mxu0
        %v1294 = vadd.f32 %v1275, %v1293
        %1295 = vmatmul.bf16.gmra.mxu0 %v566
        %v1296 = vpop.f32.mrf.mxu0
        %v1297 = vadd.f32 %v1278, %v1296
        %v1298 = vpop.f32.mrf.mxu0
        %v1299 = vadd.f32 %v1280, %v1298
        %1300 = vdwg.mxu0
        %1301 = vmatpush.bf16.msra.mxu0 %v1046
        %1302 = vmatpush.bf16.msra.mxu0 %v1045
        %1303 = vmatpush.bf16.msra.mxu0 %v1044
        %1304 = vmatpush.bf16.msra.mxu0 %v1043
        %1305 = vmatpush.bf16.msra.mxu0 %v1042
        %1306 = vmatpush.bf16.msra.mxu0 %v1041
        %1307 = vmatpush.bf16.msra.mxu0 %v1040
        %1308 = vmatpush.bf16.msra.mxu0 %v1039
        %1309 = vmatmul.bf16.gmra.mxu0 %v554
        %v1310 = vpop.f32.mrf.mxu0
        %v1311 = vadd.f32 %v1292, %v1310
        %v1312 = vpop.f32.mrf.mxu0
        %v1313 = vadd.f32 %v1294, %v1312
        %1314 = vmatmul.bf16.gmra.mxu0 %v567
        %v1315 = vpop.f32.mrf.mxu0
        %v1316 = vadd.f32 %v1297, %v1315
        %v1317 = vpop.f32.mrf.mxu0
        %v1318 = vadd.f32 %v1299, %v1317
        %1319 = vdwg.mxu0
        %1320 = vmatpush.bf16.msra.mxu0 %v1054
        %1321 = vmatpush.bf16.msra.mxu0 %v1053
        %1322 = vmatpush.bf16.msra.mxu0 %v1052
        %1323 = vmatpush.bf16.msra.mxu0 %v1051
        %1324 = vmatpush.bf16.msra.mxu0 %v1050
        %1325 = vmatpush.bf16.msra.mxu0 %v1049
        %1326 = vmatpush.bf16.msra.mxu0 %v1048
        %1327 = vmatpush.bf16.msra.mxu0 %v1047
        %1328 = vmatmul.bf16.gmra.mxu0 %v555
        %v1329 = vpop.f32.mrf.mxu0
        %v1330 = vadd.f32 %v1311, %v1329
        %v1331 = vpop.f32.mrf.mxu0
        %v1332 = vadd.f32 %v1313, %v1331
        %1333 = vmatmul.bf16.gmra.mxu0 %v568
        %v1334 = vpop.f32.mrf.mxu0
        %v1335 = vadd.f32 %v1316, %v1334
        %v1336 = vpop.f32.mrf.mxu0
        %v1337 = vadd.f32 %v1318, %v1336
        %1338 = vdwg.mxu0
        %1339 = vmatpush.bf16.msra.mxu0 %v1062
        %1340 = vmatpush.bf16.msra.mxu0 %v1061
        %1341 = vmatpush.bf16.msra.mxu0 %v1060
        %1342 = vmatpush.bf16.msra.mxu0 %v1059
        %1343 = vmatpush.bf16.msra.mxu0 %v1058
        %1344 = vmatpush.bf16.msra.mxu0 %v1057
        %1345 = vmatpush.bf16.msra.mxu0 %v1056
        %1346 = vmatpush.bf16.msra.mxu0 %v1055
        %1347 = vmatmul.bf16.gmra.mxu0 %v556
        %v1348 = vpop.f32.mrf.mxu0
        %v1349 = vadd.f32 %v1330, %v1348
        %v1350 = vpop.f32.mrf.mxu0
        %v1351 = vadd.f32 %v1332, %v1350
        %1352 = vmatmul.bf16.gmra.mxu0 %v569
        %v1353 = vpop.f32.mrf.mxu0
        %v1354 = vadd.f32 %v1335, %v1353
        %v1355 = vpop.f32.mrf.mxu0
        %v1356 = vadd.f32 %v1337, %v1355
        %1357 = vdwg.mxu0
        %1358 = vmatpush.bf16.msra.mxu0 %v1070
        %1359 = vmatpush.bf16.msra.mxu0 %v1069
        %1360 = vmatpush.bf16.msra.mxu0 %v1068
        %1361 = vmatpush.bf16.msra.mxu0 %v1067
        %1362 = vmatpush.bf16.msra.mxu0 %v1066
        %1363 = vmatpush.bf16.msra.mxu0 %v1065
        %1364 = vmatpush.bf16.msra.mxu0 %v1064
        %1365 = vmatpush.bf16.msra.mxu0 %v1063
        %1366 = vmatmul.bf16.gmra.mxu0 %v557
        %v1367 = vpop.f32.mrf.mxu0
        %v1368 = vadd.f32 %v1349, %v1367
        %v1369 = vpop.f32.mrf.mxu0
        %v1370 = vadd.f32 %v1351, %v1369
        %1371 = vmatmul.bf16.gmra.mxu0 %v570
        %v1372 = vpop.f32.mrf.mxu0
        %v1373 = vadd.f32 %v1354, %v1372
        %v1374 = vpop.f32.mrf.mxu0
        %v1375 = vadd.f32 %v1356, %v1374
        %1376 = vdwg.mxu0
        %1377 = vmatpush.bf16.msra.mxu0 %v1078
        %1378 = vmatpush.bf16.msra.mxu0 %v1077
        %1379 = vmatpush.bf16.msra.mxu0 %v1076
        %1380 = vmatpush.bf16.msra.mxu0 %v1075
        %1381 = vmatpush.bf16.msra.mxu0 %v1074
        %1382 = vmatpush.bf16.msra.mxu0 %v1073
        %1383 = vmatpush.bf16.msra.mxu0 %v1072
        %1384 = vmatpush.bf16.msra.mxu0 %v1071
        %1385 = vmatmul.bf16.gmra.mxu0 %v558
        %v1386 = vpop.f32.mrf.mxu0
        %v1387 = vadd.f32 %v1368, %v1386
        %v1388 = vpop.f32.mrf.mxu0
        %v1389 = vadd.f32 %v1370, %v1388
        %1390 = vmatmul.bf16.gmra.mxu0 %v571
        %v1391 = vpop.f32.mrf.mxu0
        %v1392 = vadd.f32 %v1373, %v1391
        %v1393 = vpop.f32.mrf.mxu0
        %v1394 = vadd.f32 %v1375, %v1393
        %1395 = vdwg.mxu0
        %1396 = vmatpush.bf16.msra.mxu0 %v1086
        %1397 = vmatpush.bf16.msra.mxu0 %v1085
        %1398 = vmatpush.bf16.msra.mxu0 %v1084
        %1399 = vmatpush.bf16.msra.mxu0 %v1083
        %1400 = vmatpush.bf16.msra.mxu0 %v1082
        %1401 = vmatpush.bf16.msra.mxu0 %v1081
        %1402 = vmatpush.bf16.msra.mxu0 %v1080
        %1403 = vmatpush.bf16.msra.mxu0 %v1079
        %1404 = vmatmul.bf16.gmra.mxu0 %v559
        %v1405 = vpop.f32.mrf.mxu0
        %v1406 = vadd.f32 %v1387, %v1405
        %v1407 = vpop.f32.mrf.mxu0
        %v1408 = vadd.f32 %v1389, %v1407
        %1409 = vmatmul.bf16.gmra.mxu0 %v572
        %v1410 = vpop.f32.mrf.mxu0
        %v1411 = vadd.f32 %v1392, %v1410
        %v1412 = vpop.f32.mrf.mxu0
        %v1413 = vadd.f32 %v1394, %v1412
        %1414 = vdwg.mxu0
        %1415 = vmatpush.bf16.msra.mxu0 %v1094
        %1416 = vmatpush.bf16.msra.mxu0 %v1093
        %1417 = vmatpush.bf16.msra.mxu0 %v1092
        %1418 = vmatpush.bf16.msra.mxu0 %v1091
        %1419 = vmatpush.bf16.msra.mxu0 %v1090
        %1420 = vmatpush.bf16.msra.mxu0 %v1089
        %1421 = vmatpush.bf16.msra.mxu0 %v1088
        %1422 = vmatpush.bf16.msra.mxu0 %v1087
        %1423 = vmatmul.bf16.gmra.mxu0 %v560
        %v1424 = vpop.f32.mrf.mxu0
        %v1425 = vadd.f32 %v1406, %v1424
        %v1426 = vpop.f32.mrf.mxu0
        %v1427 = vadd.f32 %v1408, %v1426
        %1428 = vmatmul.bf16.gmra.mxu0 %v573
        %v1429 = vpop.f32.mrf.mxu0
        %v1430 = vadd.f32 %v1411, %v1429
        %v1431 = vpop.f32.mrf.mxu0
        %v1432 = vadd.f32 %v1413, %v1431
        %1433 = vdwg.mxu0
        %1434 = vmatpush.bf16.msra.mxu0 0
        %1435 = vmatpush.bf16.msra.mxu0 0
        %1436 = vmatpush.bf16.msra.mxu0 0
        %1437 = vmatpush.bf16.msra.mxu0 0
        %1438 = vmatpush.bf16.msra.mxu0 %v1098
        %1439 = vmatpush.bf16.msra.mxu0 %v1097
        %1440 = vmatpush.bf16.msra.mxu0 %v1096
        %1441 = vmatpush.bf16.msra.mxu0 %v1095
        %1442 = vmatmul.bf16.gmra.mxu0 %v1201
        %v1443 = vpop.f32.mrf.mxu0
        %v1444 = vadd.f32 %v1425, %v1443
        %v1445 = vpop.f32.mrf.mxu0
        %v1446 = vadd.f32 %v1427, %v1445
        %1447 = vmatmul.bf16.gmra.mxu0 %v1204
        %v1448 = vpop.f32.mrf.mxu0
        %v1449 = vadd.f32 %v1430, %v1448
        %v1450 = vpop.f32.mrf.mxu0
        %v1451 = vadd.f32 %v1432, %v1450
        %1452 = vdwg.mxu0
        %v1453 = vpack.c.bf16 %v1444, %v1444
        %v1454 = vpack.c.bf16 %v1446, %v1446
        %v1455 = vpack.c.bf16 %v1449, %v1449
        %v1456 = vpack.c.bf16 %v1451, %v1451
        %vm1457 = vcmask 519168
        %1458 = vst.msk [vmem:[%s205] sm:$0xf] %vm1457, %v1453
        %1459 = vst.msk [vmem:[%s205 + $0x4] sm:$0xf] %vm1457, %v1454
        %1460 = vst.msk [vmem:[%s205 + $0x8] sm:$0xf] %vm1457, %v1455
        %1461 = vst.msk [vmem:[%s205 + $0xc] sm:$0xf] %vm1457, %v1456
        %s1462 = smul.u32 %s16, 32
        %v1463 = vlaneseq
        %v1464 = vshrl.u32 %v1463, 7
        %v1465 = vadd.s32 %v1464, 8
        %v1466 = vadd.s32 %v1464, 16
        %v1467 = vadd.s32 %v1464, 24
        %v1468 = vstv %s1462
        %v1469 = vadd.s32 %v1468, %v1464
        %v1470 = vadd.s32 %v1468, %v1465
        %v1471 = vadd.s32 %v1468, %v1466
        %v1472 = vadd.s32 %v1468, %v1467
        %vm1473 = vcmp.lt.s32.totalorder %v1469, 50
        %vm1474 = vcmp.lt.s32.totalorder %v1470, 50
        %vm1475 = vcmp.lt.s32.totalorder %v1471, 50
        %vm1476 = vcmp.lt.s32.totalorder %v1472, 50
        %v1477 = vsel %vm1473, 1, 0
        %v1478 = vsel %vm1474, 1, 0
        %v1479 = vsel %vm1475, 1, 0
        %v1480 = vsel %vm1476, 1, 0
        %vm1481 = vcmp.eq.s32.totalorder %v1477, 1
        %vm1482 = vcmp.eq.s32.totalorder %v1478, 1
        %vm1483 = vcmp.eq.s32.totalorder %v1479, 1
        %vm1484 = vcmp.eq.s32.totalorder %v1480, 1
        %v1485 = vsel %vm1481, %v1444, 0.0
        %v1486 = vsel %vm1482, %v1446, 0.0
        %v1487 = vsel %vm1483, %v1449, 0.0
        %v1488 = vsel %vm1484, %v1451, 0.0
        %v1489 = vsel %vm1199, %v1485, 0.0
        %v1490 = vsel %vm1199, %v1486, 0.0
        %v1491 = vadd.f32 %v1489, %v1490
        %v1492 = vsel %vm1199, %v1487, 0.0
        %v1493 = vadd.f32 %v1491, %v1492
        %v1494 = vsel %vm1199, %v1488, 0.0
        %v1495 = vadd.f32 %v1493, %v1494
        %v1496 = vrot.slane %v1495, 4
        %v1497 = vadd.f32 %v1495, %v1496
        %v1498 = vrot.slane %v1497, 2
        %v1499 = vadd.f32 %v1497, %v1498
        %v1500 = vrot.slane %v1499, 1
        %v1501 = vadd.f32 %v1499, %v1500
        %v1502 = vmul.f32 %v1485, %v1485
        %v1503 = vmul.f32 %v1486, %v1486
        %v1504 = vmul.f32 %v1487, %v1487
        %v1505 = vmul.f32 %v1488, %v1488
        %v1506 = vsel %vm1199, %v1502, 0.0
        %v1507 = vsel %vm1199, %v1503, 0.0
        %v1508 = vadd.f32 %v1506, %v1507
        %v1509 = vsel %vm1199, %v1504, 0.0
        %v1510 = vadd.f32 %v1508, %v1509
        %v1511 = vsel %vm1199, %v1505, 0.0
        %v1512 = vadd.f32 %v1510, %v1511
        %v1513 = vrot.slane %v1512, 4
        %v1514 = vadd.f32 %v1512, %v1513
        %v1515 = vrot.slane %v1514, 2
        %v1516 = vadd.f32 %v1514, %v1515
        %v1517 = vrot.slane %v1516, 1
        %v1518 = vadd.f32 %v1516, %v1517
        %1520 = vrot.lane.b32.xlu0 %v1518, 64
        %v1521 = vpop.permute.xlu0 %1520
        %v1523 = vsel %vm1199, %v1501, %v1521
        %1524 = vst [vmem:[%s235] sm:$0x1] %v1523
        %s1525 = sand.u32 %s92, 1
        %s1526 = sand.u32 %s92, 1
        %s1527 = smul.addr %s1526, 16
        %s1528 = scalar_lea.vmem [#allocation2], %s1527
        %p1529 = scmp.lt.s32.totalorder %s16, 1
        %s1530 = scalar_select %p1529, %s16, 1
        %s1531 = scalar_lea.vmem %s4, %s1530
        // Predicated region
        $region33: #{svhn_feature_extractor.7} parent=31 // pred_check
          %p1532 = pneg %p102
        $region34: #{svhn_feature_extractor.7} parent=31 // pred_check_branch
          %1534 = sbr.rel (%p1532) target = $region36
        $region35: #{svhn_feature_extractor.7} parent=31 // pred_region
          %s1535 = smul.u32 4, %s16
          %s1536 = ssub.s32 7, %s1535
          %p1537 = scmp.lt.s32.totalorder %s1536, 4
          %s1538 = scalar_select %p1537, %s1536, 4
          %s1539 = smul.u32 4, %s1538
          %p1540 = scmp.ne.s32.totalorder 0, %s1539
          %s1541 = smul.addr %s1535, 4
          %s1542 = scalar_lea.vmem %s3, %s1541
          // Predicated region
          $region37: #{svhn_feature_extractor.7} parent=35 // pred_check
            %p1543 = pneg %p1540
          $region38: #{svhn_feature_extractor.7} parent=35 // pred_check_branch
            %1545 = sbr.rel (%p1543) target = $region40
          $region39: #{svhn_feature_extractor.7} parent=35 // pred_region
            // Predicated region
            $region41: #{svhn_feature_extractor.7} parent=39 // pred_check
              _
            $region42: #{svhn_feature_extractor.7} parent=39 // pred_check_branch
              %1547 = sbr.rel target = $region44
            $region43: #{svhn_feature_extractor.7} parent=39 // pred_region
              // Predicated region
              $region63: #{svhn_feature_extractor.7} parent=43 // pred_check
                _
              $region64: #{svhn_feature_extractor.7} parent=43 // pred_check_branch
                %1603 = sbr.rel (0) target = $region66
              $region65: #{svhn_feature_extractor.7} parent=43 // pred_region
                %s1605 = ssub.s32 16, 1
                %s1606 = sshrl.u32 %s1538, 2
                // While loop
                $region67: #{svhn_feature_extractor.7} parent=65 // loop_pre_header
                  _
                $region68: #{svhn_feature_extractor.7} parent=65 // loop_header
                  %s1608 = sphi 0, %s1610
                  %p1609 = scmp.ge.s32.totalorder %s1608, %s1606
                  %s1613 = sphi 0, %s1626
                  %s1614 = sphi %s1528, %s1629
                  %s1615 = sphi %s1542, %s1630
                $region69: #{svhn_feature_extractor.7} parent=65 // loop_header_branch
                  %1612 = sbr.rel (%p1609) target = $region73
                $region70: #{svhn_feature_extractor.7} parent=65 // loop_body
                  %v1616 = vld [vmem:[%s1614] sm:%s1605]
                  %1617 = vst [vmem:[%s1615] sm:%s1605] %v1616
                  %v1618 = vld [vmem:[%s1614 + $0x4] sm:%s1605]
                  %1619 = vst [vmem:[%s1615 + $0x4] sm:%s1605] %v1618
                  %v1620 = vld [vmem:[%s1614 + $0x8] sm:%s1605]
                  %1621 = vst [vmem:[%s1615 + $0x8] sm:%s1605] %v1620
                  %v1622 = vld [vmem:[%s1614 + $0xc] sm:%s1605]
                  %1623 = vst [vmem:[%s1615 + $0xc] sm:%s1605] %v1622
                  %s1624 = sadd.s32 1, %s1613
                  %p1625 = scmp.ge.s32.totalorder %s1624, %s1606
                  %s1626 = scalar_select %p1625, 0, %s1624
                  %s1627 = smul.u32 %s1626, 16
                  %s1628 = smul.u32 %s1626, 16
                  %s1629 = scalar_lea.vmem %s1528, %s1627 [#allocation2]
                  %s1630 = scalar_lea.vmem %s1542, %s1628
                $region71: #{svhn_feature_extractor.7} parent=65 // loop_footer
                  %s1610 = sadd.s32 %s1608, 1
                $region72: #{svhn_feature_extractor.7} parent=65 // loop_footer_branch
                  %1607 = sbr.rel target = $region68
                $region73: #{svhn_feature_extractor.7} parent=65 // loop_exit
                  _
                %s1631 = sshrl.u32 %s1538, 2
                %s1632 = sand.u32 %s1538, 3
                %s1633 = smul.u32 %s1631, 4
                %s1634 = smul.u32 4, %s1633
                %s1635 = scalar_lea.vmem %s1528, %s1634 [#allocation2]
                %s1636 = smul.u32 4, %s1633
                %s1637 = scalar_lea.vmem %s1542, %s1636
                // While loop
                $region74: #{svhn_feature_extractor.7} parent=65 // loop_pre_header
                  _
                $region75: #{svhn_feature_extractor.7} parent=65 // loop_header
                  %s1639 = sphi 0, %s1641
                  %p1640 = scmp.ge.s32.totalorder %s1639, %s1632
                  %s1644 = sphi 0, %s1651
                  %s1645 = sphi %s1635, %s1654
                  %s1646 = sphi %s1637, %s1655
                $region76: #{svhn_feature_extractor.7} parent=65 // loop_header_branch
                  %1643 = sbr.rel (%p1640) target = $region80
                $region77: #{svhn_feature_extractor.7} parent=65 // loop_body
                  %v1647 = vld [vmem:[%s1645] sm:%s1605]
                  %1648 = vst [vmem:[%s1646] sm:%s1605] %v1647
                  %s1649 = sadd.s32 1, %s1644
                  %p1650 = scmp.ge.s32.totalorder %s1649, %s1632
                  %s1651 = scalar_select %p1650, 0, %s1649
                  %s1652 = smul.u32 %s1651, 4
                  %s1653 = smul.u32 %s1651, 4
                  %s1654 = scalar_lea.vmem %s1635, %s1652 [#allocation2]
                  %s1655 = scalar_lea.vmem %s1637, %s1653
                $region78: #{svhn_feature_extractor.7} parent=65 // loop_footer
                  %s1641 = sadd.s32 %s1639, 1
                $region79: #{svhn_feature_extractor.7} parent=65 // loop_footer_branch
                  %1638 = sbr.rel target = $region75
                $region80: #{svhn_feature_extractor.7} parent=65 // loop_exit
                  _
              $region66: #{svhn_feature_extractor.7} parent=43 // pred_fallthru
                _
            $region44: #{svhn_feature_extractor.7} parent=39 // pred_fallthru
              _
            // Predicated region
            $region45: #{svhn_feature_extractor.7} parent=39 // pred_check
              _
            $region46: #{svhn_feature_extractor.7} parent=39 // pred_check_branch
              %1549 = sbr.rel (0) target = $region48
            $region47: #{svhn_feature_extractor.7} parent=39 // pred_region
              %s1551 = ssub.s32 16, 1
              %s1552 = sshrl.u32 %s1538, 2
              // While loop
              $region49: #{svhn_feature_extractor.7} parent=47 // loop_pre_header
                _
              $region50: #{svhn_feature_extractor.7} parent=47 // loop_header
                %s1554 = sphi 0, %s1556
                %p1555 = scmp.ge.s32.totalorder %s1554, %s1552
                %s1559 = sphi 0, %s1572
                %s1560 = sphi %s1528, %s1575
                %s1561 = sphi %s1542, %s1576
              $region51: #{svhn_feature_extractor.7} parent=47 // loop_header_branch
                %1558 = sbr.rel (%p1555) target = $region55
              $region52: #{svhn_feature_extractor.7} parent=47 // loop_body
                %v1562 = vld [vmem:[%s1560] sm:%s1551]
                %1563 = vst [vmem:[%s1561] sm:%s1551] %v1562
                %v1564 = vld [vmem:[%s1560 + $0x4] sm:%s1551]
                %1565 = vst [vmem:[%s1561 + $0x4] sm:%s1551] %v1564
                %v1566 = vld [vmem:[%s1560 + $0x8] sm:%s1551]
                %1567 = vst [vmem:[%s1561 + $0x8] sm:%s1551] %v1566
                %v1568 = vld [vmem:[%s1560 + $0xc] sm:%s1551]
                %1569 = vst [vmem:[%s1561 + $0xc] sm:%s1551] %v1568
                %s1570 = sadd.s32 1, %s1559
                %p1571 = scmp.ge.s32.totalorder %s1570, %s1552
                %s1572 = scalar_select %p1571, 0, %s1570
                %s1573 = smul.u32 %s1572, 16
                %s1574 = smul.u32 %s1572, 16
                %s1575 = scalar_lea.vmem %s1528, %s1573 [#allocation2]
                %s1576 = scalar_lea.vmem %s1542, %s1574
              $region53: #{svhn_feature_extractor.7} parent=47 // loop_footer
                %s1556 = sadd.s32 %s1554, 1
              $region54: #{svhn_feature_extractor.7} parent=47 // loop_footer_branch
                %1553 = sbr.rel target = $region50
              $region55: #{svhn_feature_extractor.7} parent=47 // loop_exit
                _
              %s1577 = sshrl.u32 %s1538, 2
              %s1578 = sand.u32 %s1538, 3
              %s1579 = smul.u32 %s1577, 4
              %s1580 = smul.u32 4, %s1579
              %s1581 = scalar_lea.vmem %s1528, %s1580 [#allocation2]
              %s1582 = smul.u32 4, %s1579
              %s1583 = scalar_lea.vmem %s1542, %s1582
              // While loop
              $region56: #{svhn_feature_extractor.7} parent=47 // loop_pre_header
                _
              $region57: #{svhn_feature_extractor.7} parent=47 // loop_header
                %s1585 = sphi 0, %s1587
                %p1586 = scmp.ge.s32.totalorder %s1585, %s1578
                %s1590 = sphi 0, %s1597
                %s1591 = sphi %s1581, %s1600
                %s1592 = sphi %s1583, %s1601
              $region58: #{svhn_feature_extractor.7} parent=47 // loop_header_branch
                %1589 = sbr.rel (%p1586) target = $region62
              $region59: #{svhn_feature_extractor.7} parent=47 // loop_body
                %v1593 = vld [vmem:[%s1591] sm:%s1551]
                %1594 = vst [vmem:[%s1592] sm:%s1551] %v1593
                %s1595 = sadd.s32 1, %s1590
                %p1596 = scmp.ge.s32.totalorder %s1595, %s1578
                %s1597 = scalar_select %p1596, 0, %s1595
                %s1598 = smul.u32 %s1597, 4
                %s1599 = smul.u32 %s1597, 4
                %s1600 = scalar_lea.vmem %s1581, %s1598 [#allocation2]
                %s1601 = scalar_lea.vmem %s1583, %s1599
              $region60: #{svhn_feature_extractor.7} parent=47 // loop_footer
                %s1587 = sadd.s32 %s1585, 1
              $region61: #{svhn_feature_extractor.7} parent=47 // loop_footer_branch
                %1584 = sbr.rel target = $region57
              $region62: #{svhn_feature_extractor.7} parent=47 // loop_exit
                _
            $region48: #{svhn_feature_extractor.7} parent=39 // pred_fallthru
              _
          $region40: #{svhn_feature_extractor.7} parent=35 // pred_fallthru
            _
          %1656 = vnop
        $region36: #{svhn_feature_extractor.7} parent=31 // pred_fallthru
          _
        // Predicated region
        $region81: #{svhn_feature_extractor.7} parent=31 // pred_check
          %p1657 = pneg %p128
        $region82: #{svhn_feature_extractor.7} parent=31 // pred_check_branch
          %1659 = sbr.rel (%p1657) target = $region84
        $region83: #{svhn_feature_extractor.7} parent=31 // pred_region
          _
        $region84: #{svhn_feature_extractor.7} parent=31 // pred_fallthru
          _
      $region32: #{svhn_feature_extractor.7} parent=5 // pred_fallthru
        _
      %p1660 = scmp.le.s32.totalorder 2, %s11
      // Predicated region
      $region85: #{svhn_feature_extractor.7} parent=5 // pred_check
        %p1661 = pneg %p1660
      $region86: #{svhn_feature_extractor.7} parent=5 // pred_check_branch
        %1663 = sbr.rel (%p1661) target = $region88
      $region87: #{svhn_feature_extractor.7} parent=5 // pred_region
        %s1664 = ssub.s32 %s11, 2
        // Predicated region
        $region89: #{svhn_feature_extractor.7} parent=87 // pred_check
          %p1665 = pneg %p108
        $region90: #{svhn_feature_extractor.7} parent=87 // pred_check_branch
          %1667 = sbr.rel (%p1665) target = $region92
        $region91: #{svhn_feature_extractor.7} parent=87 // pred_region
          %s1668 = sand.u32 %s93, 1
          %s1669 = sand.u32 %s93, 1
          %s1670 = smul.addr %s1669, 16
          %s1671 = scalar_lea.vmem [#allocation2], %s1670
        $region92: #{svhn_feature_extractor.7} parent=87 // pred_fallthru
          _
        // Predicated region
        $region93: #{svhn_feature_extractor.7} parent=87 // pred_check
          %p1672 = pneg %p134
        $region94: #{svhn_feature_extractor.7} parent=87 // pred_check_branch
          %1674 = sbr.rel (%p1672) target = $region96
        $region95: #{svhn_feature_extractor.7} parent=87 // pred_region
          %p1675 = scmp.lt.s32.totalorder %s17, 1
          %s1676 = scalar_select %p1675, %s17, 1
          %s1677 = scalar_lea.vmem %s4, %s1676
        $region96: #{svhn_feature_extractor.7} parent=87 // pred_fallthru
          _
      $region88: #{svhn_feature_extractor.7} parent=5 // pred_fallthru
        _
    $region6: #{svhn_feature_extractor.7} parent=1 // loop_footer
      %s15 = sadd.s32 1, %s11
    $region7: #{svhn_feature_extractor.7} parent=1 // loop_footer_branch
      %10 = sbr.rel target = $region3
    $region8: #{svhn_feature_extractor.7} parent=1 // loop_exit
      _

// kernel: tile.13
$region0: #{tile.13}
  #allocation0 [shape = 's32[1]{0}', space=sflag, size = 0x4, scoped, tag = 'scoped memory for tile.13']
  %s0 = inlined_call_operand.vmem [shape: f32[64], index: 0, kind: input, shape index: {}]
  %s1 = inlined_call_operand.vmem [shape: f32[25,64], index: 1, kind: output, shape index: {}]
  // Predicated region
  $region2: #{tile.13} parent=0 // pred_check
    _
  $region3: #{tile.13} parent=0 // pred_check_branch
    %3 = sbr.rel (0) target = $region5
  $region4: #{tile.13} parent=0 // pred_region
    _
  $region5: #{tile.13} parent=0 // pred_fallthru
    _
  %v4 = vld [vmem:[%s0] ss:$0 sm:$0xff]
  %5 = vst [vmem:[%s1] sm:$0xff] %v4
  %s6 = scalar_lea.vmem %s1, 8
  %7 = vst [vmem:[%s6] sm:$0xff] %v4
  %s8 = scalar_lea.vmem %s1, 16
  %9 = vst [vmem:[%s8] sm:$0xff] %v4
  %s10 = scalar_lea.vmem %s1, 24
  %11 = vst [vmem:[%s10] sm:$0xff] %v4

// kernel: tile.18
$region0: #{tile.18}
  %s0 = inlined_call_operand.vmem [shape: f32[25,64], index: 0, kind: input, shape index: {}]
  %s1 = inlined_call_operand.vmem [shape: f32[1,1600], index: 1, kind: output, shape index: {}]
  $region1: #{tile.18} parent=0
    #allocation0 [shape = 'u8[53248]{0}', space=vmem, size = 0xd000, scoped, tag = 'scoped mem for output reshape']
    %v2 = vld [vmem:[%s0] ss:$2 sm:$0xff]
    %vm3 = vcmask 523264
    %4 = vst.msk [vmem:[#allocation0] ss:$8 sm:$0xf] %vm3, %v2
    %5 = vst.msk [vmem:[#allocation0] ss:$8 sm:$0xf0] %vm3, %v2
    %s6 = scalar_lea.vmem %s0, 16
    %v7 = vld [vmem:[%s6] ss:$2 sm:$0x1f]
    %vm8 = vcmask 523264
    %s9 = scalar_lea.vmem [#allocation0], 64
    %10 = vst.msk [vmem:[%s9] ss:$8 sm:$0xf] %vm8, %v7
    %s11 = scalar_lea.vmem [#allocation0], 92
    %12 = vst.msk [vmem:[%s11] sm:$0x10] %vm8, %v7
    %s13 = scalar_lea.vmem %s0, 1
    %v14 = vld [vmem:[%s13] ss:$2 sm:$0xff]
    %15 = vrot.lane.b32.xlu0 %v14, 64
    %v16 = vpop.permute.xlu0 %15
    %vm17 = vcmask 1048064
    %18 = vst.msk [vmem:[#allocation0] ss:$8 sm:$0xf] %vm17, %v16
    %19 = vst.msk [vmem:[#allocation0] ss:$8 sm:$0xf0] %vm17, %v16
    %s20 = scalar_lea.vmem %s0, 17
    %v21 = vld [vmem:[%s20] ss:$2 sm:$0xf]
    %22 = vrot.lane.b32.xlu0 %v21, 64
    %v23 = vpop.permute.xlu0 %22
    %vm24 = vcmask 1048064
    %s25 = scalar_lea.vmem [#allocation0], 64
    %26 = vst.msk [vmem:[%s25] ss:$8 sm:$0xf] %vm24, %v23
    %s28 = ssub.s32 2, 1
    %v29 = vld [vmem:[#allocation0] sm:%s28]
    %s31 = ssub.s32 2, 1
    %32 = vst [vmem:[%s1] sm:%s31] %v29
    %s33 = scalar_lea.vmem [#allocation0], 8
    %v34 = vld [vmem:[%s33] sm:%s28]
    %s36 = ssub.s32 2, 1
    %s37 = scalar_lea.vmem %s1, 1
    %38 = vst [vmem:[%s37] sm:%s36] %v34
    %s39 = scalar_lea.vmem [#allocation0], 16
    %v40 = vld [vmem:[%s39] sm:%s28]
    %s42 = ssub.s32 2, 1
    %s43 = scalar_lea.vmem %s1, 2
    %44 = vst [vmem:[%s43] sm:%s42] %v40
    %s45 = scalar_lea.vmem [#allocation0], 24
    %v46 = vld [vmem:[%s45] sm:%s28]
    %s48 = ssub.s32 2, 1
    %s49 = scalar_lea.vmem %s1, 3
    %50 = vst [vmem:[%s49] sm:%s48] %v46
    %s51 = scalar_lea.vmem [#allocation0], 32
    %v52 = vld [vmem:[%s51] sm:%s28]
    %s54 = ssub.s32 2, 1
    %s55 = scalar_lea.vmem %s1, 4
    %56 = vst [vmem:[%s55] sm:%s54] %v52
    %s57 = scalar_lea.vmem [#allocation0], 40
    %v58 = vld [vmem:[%s57] sm:%s28]
    %s60 = ssub.s32 2, 1
    %s61 = scalar_lea.vmem %s1, 5
    %62 = vst [vmem:[%s61] sm:%s60] %v58
    %s63 = scalar_lea.vmem [#allocation0], 48
    %v64 = vld [vmem:[%s63] sm:%s28]
    %s66 = ssub.s32 2, 1
    %s67 = scalar_lea.vmem %s1, 6
    %68 = vst [vmem:[%s67] sm:%s66] %v64
    %s69 = scalar_lea.vmem [#allocation0], 56
    %v70 = vld [vmem:[%s69] sm:%s28]
    %s72 = ssub.s32 2, 1
    %s73 = scalar_lea.vmem %s1, 7
    %74 = vst [vmem:[%s73] sm:%s72] %v70
    %s75 = scalar_lea.vmem [#allocation0], 64
    %v76 = vld [vmem:[%s75] sm:%s28]
    %s78 = ssub.s32 2, 1
    %s79 = scalar_lea.vmem %s1, 8
    %80 = vst [vmem:[%s79] sm:%s78] %v76
    %s81 = scalar_lea.vmem [#allocation0], 72
    %v82 = vld [vmem:[%s81] sm:%s28]
    %s84 = ssub.s32 2, 1
    %s85 = scalar_lea.vmem %s1, 9
    %86 = vst [vmem:[%s85] sm:%s84] %v82
    %s87 = scalar_lea.vmem [#allocation0], 80
    %v88 = vld [vmem:[%s87] sm:%s28]
    %s90 = ssub.s32 2, 1
    %s91 = scalar_lea.vmem %s1, 10
    %92 = vst [vmem:[%s91] sm:%s90] %v88
    %s93 = scalar_lea.vmem [#allocation0], 88
    %v94 = vld [vmem:[%s93] sm:%s28]
    %s96 = ssub.s32 2, 1
    %s97 = scalar_lea.vmem %s1, 11
    %98 = vst [vmem:[%s97] sm:%s96] %v94
    %s99 = scalar_lea.vmem [#allocation0], 96
    %v100 = vld [vmem:[%s99] sm:%s28]
    %s102 = ssub.s32 2, 1
    %s103 = scalar_lea.vmem %s1, 12
    %104 = vst [vmem:[%s103] sm:%s102] %v100

// kernel: svhn_feature_extractor.9
$region0: #{svhn_feature_extractor.9}
  #allocation0 [shape = 'u32[]', space=smem, size = 0x4, offset = 0x4, fixed_abs, tag = 'smem constant byte address 0x4 - core index']
  #allocation1 [shape = 'u32[72,128]{1,0:T(1,128)}', space=vmem, size = 0x9000, scoped, tag = 'internal scratch']
  %s0 = inlined_call_operand.vmem [shape: bf16[18,128], index: 0, kind: input, shape index: {}]
  %s1 = inlined_call_operand.vmem [shape: f32[1,128], index: 1, kind: input, shape index: {}]
  %s2 = inlined_call_operand.vmem [shape: f32[1,128], index: 2, kind: input, shape index: {}]
  %s3 = inlined_call_operand.vmem [shape: f32[18,128], index: 3, kind: output, shape index: {}]
  %s4 = sld [smem:[#allocation0]]
  $region93: #{svhn_feature_extractor.9} parent=0
    _
  %s6 = ssub.s32 1, %s4
  %s7 = scalar_select 0, %s6, %s4
  $region1: #{svhn_feature_extractor.9} parent=0
    #allocation2 [shape = 'u8[16384]{0}', space=vmem, size = 0x4000, scoped, tag = 'output window, operand 0']
    loop: start=0, step=1, limit=4
    $region2: #{svhn_feature_extractor.9} parent=1 // loop_pre_header
      _
    $region3: #{svhn_feature_extractor.9} parent=1 // loop_header
      %s9 = sphi 0, %s13
      %p10 = scmp.ge.s32.totalorder %s9, 4
      %s19 = sphi 0, %s21
      %s22 = sphi 0, %s19
      %s23 = sphi 0, %s22
      %s39 = sphi 0, %s23
      %s43 = sphi 0, %s43
      %s45 = sphi 0, %s43
      %s46 = sphi 0, %s45
      %s60 = sphi 0, %s46
      %s64 = sphi 0, %s64
      %s66 = sphi 0, %s64
      %s67 = sphi 0, %s66
      %s81 = sphi 0, %s67
      %s87 = sphi 0, %s89
      %s90 = sphi 0, %s87
      %s91 = sphi 0, %s90
      %s107 = sphi 0, %s91
    $region4: #{svhn_feature_extractor.9} parent=1 // loop_header_branch
      %12 = sbr.rel (%p10) target = $region8
    $region5: #{svhn_feature_extractor.9} parent=1 // loop_body
      %s14 = ssub.s32 %s9, 1
      %s15 = ssub.s32 %s9, 2
      %s16 = sadd.s32 %s9, 1
      %s17 = ssub.s32 %s9, %s16
      %p18 = scmp.eq.s32.totalorder %s17, 0
      %s20 = sadd.s32 %s19, 1
      %s21 = scalar_select %p18, %s19, %s20
      %p24 = pneg %p18
      %p25 = scmp.eq.s32.totalorder %s9, 1
      %p26 = por %p24, %p25
      %p27 = scmp.ne.s32.totalorder %s19, %s22
      %p28 = scmp.eq.s32.totalorder %s9, 0
      %p29 = por %p27, %p28
      %p30 = scmp.ne.s32.totalorder %s19, %s22
      %p31 = scmp.eq.s32.totalorder %s14, 1
      %p32 = por %p30, %p31
      %p33 = scmp.ne.s32.totalorder %s22, %s23
      %p34 = scmp.eq.s32.totalorder %s14, 0
      %p35 = por %p33, %p34
      %p36 = scmp.ne.s32.totalorder %s22, %s23
      %p37 = scmp.eq.s32.totalorder %s15, 1
      %p38 = por %p36, %p37
      %p40 = scmp.ne.s32.totalorder %s23, %s39
      %p41 = scmp.eq.s32.totalorder %s15, 0
      %p42 = por %p40, %p41
      %s44 = sadd.s32 %s43, 1
      %p47 = scmp.eq.s32.totalorder %s9, 1
      %p48 = scmp.ne.s32.totalorder %s43, %s45
      %p49 = scmp.eq.s32.totalorder %s9, 0
      %p50 = por %p48, %p49
      %p51 = scmp.ne.s32.totalorder %s43, %s45
      %p52 = scmp.eq.s32.totalorder %s14, 1
      %p53 = por %p51, %p52
      %p54 = scmp.ne.s32.totalorder %s45, %s46
      %p55 = scmp.eq.s32.totalorder %s14, 0
      %p56 = por %p54, %p55
      %p57 = scmp.ne.s32.totalorder %s45, %s46
      %p58 = scmp.eq.s32.totalorder %s15, 1
      %p59 = por %p57, %p58
      %p61 = scmp.ne.s32.totalorder %s46, %s60
      %p62 = scmp.eq.s32.totalorder %s15, 0
      %p63 = por %p61, %p62
      %s65 = sadd.s32 %s64, 1
      %p68 = scmp.eq.s32.totalorder %s9, 1
      %p69 = scmp.ne.s32.totalorder %s64, %s66
      %p70 = scmp.eq.s32.totalorder %s9, 0
      %p71 = por %p69, %p70
      %p72 = scmp.ne.s32.totalorder %s64, %s66
      %p73 = scmp.eq.s32.totalorder %s14, 1
      %p74 = por %p72, %p73
      %p75 = scmp.ne.s32.totalorder %s66, %s67
      %p76 = scmp.eq.s32.totalorder %s14, 0
      %p77 = por %p75, %p76
      %p78 = scmp.ne.s32.totalorder %s66, %s67
      %p79 = scmp.eq.s32.totalorder %s15, 1
      %p80 = por %p78, %p79
      %p82 = scmp.ne.s32.totalorder %s67, %s81
      %p83 = scmp.eq.s32.totalorder %s15, 0
      %p84 = por %p82, %p83
      %s85 = ssub.s32 %s9, %s16
      %p86 = scmp.eq.s32.totalorder %s85, 0
      %s88 = sadd.s32 %s87, 1
      %s89 = scalar_select %p86, %s87, %s88
      %p92 = pneg %p86
      %p93 = scmp.eq.s32.totalorder %s9, 1
      %p94 = por %p92, %p93
      %p95 = scmp.ne.s32.totalorder %s87, %s90
      %p96 = scmp.eq.s32.totalorder %s9, 0
      %p97 = por %p95, %p96
      %p98 = scmp.ne.s32.totalorder %s87, %s90
      %p99 = scmp.eq.s32.totalorder %s14, 1
      %p100 = por %p98, %p99
      %p101 = scmp.ne.s32.totalorder %s90, %s91
      %p102 = scmp.eq.s32.totalorder %s14, 0
      %p103 = por %p101, %p102
      %p104 = scmp.ne.s32.totalorder %s90, %s91
      %p105 = scmp.eq.s32.totalorder %s15, 1
      %p106 = por %p104, %p105
      %p108 = scmp.ne.s32.totalorder %s91, %s107
      %p109 = scmp.eq.s32.totalorder %s15, 0
      %p110 = por %p108, %p109
      %p111 = scmp.le.s32.totalorder 1, %s9
      %p112 = scmp.lt.s32.totalorder %s9, 3
      %p113 = pnand %p111, %p112
      %p114 = pneg %p113
      // Predicated region
      $region9: #{svhn_feature_extractor.9} parent=5 // pred_check
        _
      $region10: #{svhn_feature_extractor.9} parent=5 // pred_check_branch
        %116 = sbr.rel (%p113) target = $region12
      $region11: #{svhn_feature_extractor.9} parent=5 // pred_region
        %s117 = ssub.s32 %s9, 1
        // Predicated region
        $region13: #{svhn_feature_extractor.9} parent=11 // pred_check
          %p118 = pneg %p56
        $region14: #{svhn_feature_extractor.9} parent=11 // pred_check_branch
          %120 = sbr.rel (%p118) target = $region16
        $region15: #{svhn_feature_extractor.9} parent=11 // pred_region
          _
        $region16: #{svhn_feature_extractor.9} parent=11 // pred_fallthru
          _
        // Predicated region
        $region17: #{svhn_feature_extractor.9} parent=11 // pred_check
          %p121 = pneg %p77
        $region18: #{svhn_feature_extractor.9} parent=11 // pred_check_branch
          %123 = sbr.rel (%p121) target = $region20
        $region19: #{svhn_feature_extractor.9} parent=11 // pred_region
          _
        $region20: #{svhn_feature_extractor.9} parent=11 // pred_fallthru
          _
      $region12: #{svhn_feature_extractor.9} parent=5 // pred_fallthru
        _
      %p124 = scmp.lt.s32.totalorder %s9, 2
      // Predicated region
      $region21: #{svhn_feature_extractor.9} parent=5 // pred_check
        %p125 = pneg %p124
      $region22: #{svhn_feature_extractor.9} parent=5 // pred_check_branch
        %127 = sbr.rel (%p125) target = $region24
      $region23: #{svhn_feature_extractor.9} parent=5 // pred_region
        // Predicated region
        $region25: #{svhn_feature_extractor.9} parent=23 // pred_check
          %p128 = pneg %p29
        $region26: #{svhn_feature_extractor.9} parent=23 // pred_check_branch
          %130 = sbr.rel (%p128) target = $region28
        $region27: #{svhn_feature_extractor.9} parent=23 // pred_region
          %s131 = smul.u32 2, %s9
          %s132 = ssub.s32 3, %s131
          %p133 = scmp.lt.s32.totalorder %s132, 2
          %s134 = scalar_select %p133, %s132, 2
          %s135 = smul.u32 4, %s134
          %p136 = scmp.lt.s32.totalorder %s131, 2
          %s137 = scalar_select %p136, %s131, 2
          %s138 = smul.addr %s137, 4
          %s139 = scalar_lea.vmem %s0, %s138
          %s140 = smul.u32 2, %s9
          %s141 = ssub.s32 3, %s140
          %p142 = scmp.lt.s32.totalorder %s141, 2
          %s143 = scalar_select %p142, %s141, 2
          %s144 = smul.u32 4, %s143
        $region28: #{svhn_feature_extractor.9} parent=23 // pred_fallthru
          _
      $region24: #{svhn_feature_extractor.9} parent=5 // pred_fallthru
        _
      %p145 = scmp.le.s32.totalorder 1, %s9
      %p146 = scmp.lt.s32.totalorder %s9, 3
      %p147 = pnand %p145, %p146
      %p148 = pneg %p147
      // Predicated region
      $region29: #{svhn_feature_extractor.9} parent=5 // pred_check
        _
      $region30: #{svhn_feature_extractor.9} parent=5 // pred_check_branch
        %150 = sbr.rel (%p147) target = $region32
      $region31: #{svhn_feature_extractor.9} parent=5 // pred_region
        %s151 = ssub.s32 %s9, 1
        %s152 = smul.u32 2, %s14
        %s153 = ssub.s32 3, %s152
        %p154 = scmp.lt.s32.totalorder %s153, 2
        %s155 = scalar_select %p154, %s153, 2
        %s156 = smul.u32 4, %s155
        %p157 = scmp.lt.s32.totalorder %s152, 2
        %s158 = scalar_select %p157, %s152, 2
        %s159 = smul.addr %s158, 4
        %s160 = scalar_lea.vmem %s0, %s159
        %p161 = pneg %p35
        %p162 = pneg %p32
        %p163 = pneg %p56
        %p164 = pneg %p53
        %p165 = pneg %p77
        %p166 = pneg %p74
        %p167 = pneg %p103
        %p168 = pneg %p100
        %s169 = sand.u32 %s90, 1
        %s170 = sand.u32 %s90, 1
        %s171 = smul.addr %s170, 16
        %s172 = scalar_lea.vmem [#allocation2], %s171
        %s173 = smul.u32 2, %s14
        %s174 = ssub.s32 3, %s173
        %p175 = scmp.lt.s32.totalorder %s174, 2
        %s176 = scalar_select %p175, %s174, 2
        %s177 = smul.u32 4, %s176
        %p178 = scmp.lt.s32.totalorder %s173, 2
        %s179 = scalar_select %p178, %s173, 2
        %s180 = smul.addr %s179, 4
        %s181 = scalar_lea.vmem %s0, %s180
        %s182 = smul.u32 2, %s14
        %s183 = ssub.s32 3, %s182
        %p184 = scmp.lt.s32.totalorder %s183, 2
        %s185 = scalar_select %p184, %s183, 2
        %s186 = smul.u32 4, %s185
        %s187 = smul.u32 2, %s14
        %s188 = ssub.s32 3, %s187
        %p189 = scmp.lt.s32.totalorder %s188, 2
        %s190 = scalar_select %p189, %s188, 2
        %s191 = smul.u32 8, %s190
        %v192 = vld [vmem:[%s181] sm:$0xf]
        %v193 = vld [vmem:[%s181 + $0x4] sm:$0xf]
        %v194 = vunpack.c.l.bf16 %v192
        %v195 = vunpack.c.l.bf16 %v193
        %v196 = vld [vmem:[%s1] sm:$0x1]
        %v198 = vperm.slane %v196, 0
        %v200 = vmul.f32 %v194, %v198
        %v201 = vmul.f32 %v195, %v198
        %v202 = vld [vmem:[%s2] sm:$0x1]
        %v204 = vperm.slane %v202, 0
        %v206 = vadd.f32 %v200, %v204
        %v207 = vadd.f32 %v201, %v204
        %v208 = vmax.f32 %v206, 0.0
        %v209 = vmax.f32 %v207, 0.0
        %210 = vst [vmem:[%s172] sm:$0xff] %v208
        %211 = vst [vmem:[%s172 + $0x8] sm:$0xff] %v209
        %s212 = sand.u32 %s90, 1
        %s213 = sand.u32 %s90, 1
        %s214 = smul.addr %s213, 16
        %s215 = scalar_lea.vmem [#allocation2], %s214
        // Predicated region
        $region33: #{svhn_feature_extractor.9} parent=31 // pred_check
          %p216 = pneg %p100
        $region34: #{svhn_feature_extractor.9} parent=31 // pred_check_branch
          %218 = sbr.rel (%p216) target = $region36
        $region35: #{svhn_feature_extractor.9} parent=31 // pred_region
          %s219 = smul.u32 2, %s14
          %s220 = ssub.s32 3, %s219
          %p221 = scmp.lt.s32.totalorder %s220, 2
          %s222 = scalar_select %p221, %s220, 2
          %s223 = smul.u32 8, %s222
          %p224 = scmp.ne.s32.totalorder 0, %s223
          %s225 = smul.addr %s219, 8
          %s226 = scalar_lea.vmem %s3, %s225
          // Predicated region
          $region37: #{svhn_feature_extractor.9} parent=35 // pred_check
            %p227 = pneg %p224
          $region38: #{svhn_feature_extractor.9} parent=35 // pred_check_branch
            %229 = sbr.rel (%p227) target = $region40
          $region39: #{svhn_feature_extractor.9} parent=35 // pred_region
            // Predicated region
            $region41: #{svhn_feature_extractor.9} parent=39 // pred_check
              _
            $region42: #{svhn_feature_extractor.9} parent=39 // pred_check_branch
              %231 = sbr.rel (0) target = $region44
            $region43: #{svhn_feature_extractor.9} parent=39 // pred_region
              // Predicated region
              $region63: #{svhn_feature_extractor.9} parent=43 // pred_check
                _
              $region64: #{svhn_feature_extractor.9} parent=43 // pred_check_branch
                %283 = sbr.rel (0) target = $region66
              $region65: #{svhn_feature_extractor.9} parent=43 // pred_region
                %s284 = sshrl.u32 %s222, 1
                // While loop
                $region67: #{svhn_feature_extractor.9} parent=65 // loop_pre_header
                  _
                $region68: #{svhn_feature_extractor.9} parent=65 // loop_header
                  %s286 = sphi 0, %s288
                  %p287 = scmp.ge.s32.totalorder %s286, %s284
                  %s291 = sphi 0, %s300
                  %s292 = sphi %s215, %s303
                  %s293 = sphi %s226, %s304
                $region69: #{svhn_feature_extractor.9} parent=65 // loop_header_branch
                  %290 = sbr.rel (%p287) target = $region73
                $region70: #{svhn_feature_extractor.9} parent=65 // loop_body
                  %v294 = vld [vmem:[%s292] sm:$0xff]
                  %295 = vst [vmem:[%s293] sm:$0xff] %v294
                  %v296 = vld [vmem:[%s292 + $0x8] sm:$0xff]
                  %297 = vst [vmem:[%s293 + $0x8] sm:$0xff] %v296
                  %s298 = sadd.s32 1, %s291
                  %p299 = scmp.ge.s32.totalorder %s298, %s284
                  %s300 = scalar_select %p299, 0, %s298
                  %s301 = smul.u32 %s300, 16
                  %s302 = smul.u32 %s300, 16
                  %s303 = scalar_lea.vmem %s215, %s301 [#allocation2]
                  %s304 = scalar_lea.vmem %s226, %s302
                $region71: #{svhn_feature_extractor.9} parent=65 // loop_footer
                  %s288 = sadd.s32 %s286, 1
                $region72: #{svhn_feature_extractor.9} parent=65 // loop_footer_branch
                  %285 = sbr.rel target = $region68
                $region73: #{svhn_feature_extractor.9} parent=65 // loop_exit
                  _
                %s305 = sshrl.u32 %s222, 1
                %s306 = sand.u32 %s222, 1
                %s307 = smul.u32 %s305, 2
                %s308 = smul.u32 8, %s307
                %s309 = scalar_lea.vmem %s215, %s308 [#allocation2]
                %s310 = smul.u32 8, %s307
                %s311 = scalar_lea.vmem %s226, %s310
                // While loop
                $region74: #{svhn_feature_extractor.9} parent=65 // loop_pre_header
                  _
                $region75: #{svhn_feature_extractor.9} parent=65 // loop_header
                  %s313 = sphi 0, %s315
                  %p314 = scmp.ge.s32.totalorder %s313, %s306
                  %s318 = sphi 0, %s325
                  %s319 = sphi %s309, %s328
                  %s320 = sphi %s311, %s329
                $region76: #{svhn_feature_extractor.9} parent=65 // loop_header_branch
                  %317 = sbr.rel (%p314) target = $region80
                $region77: #{svhn_feature_extractor.9} parent=65 // loop_body
                  %v321 = vld [vmem:[%s319] sm:$0xff]
                  %322 = vst [vmem:[%s320] sm:$0xff] %v321
                  %s323 = sadd.s32 1, %s318
                  %p324 = scmp.ge.s32.totalorder %s323, %s306
                  %s325 = scalar_select %p324, 0, %s323
                  %s326 = smul.u32 %s325, 8
                  %s327 = smul.u32 %s325, 8
                  %s328 = scalar_lea.vmem %s309, %s326 [#allocation2]
                  %s329 = scalar_lea.vmem %s311, %s327
                $region78: #{svhn_feature_extractor.9} parent=65 // loop_footer
                  %s315 = sadd.s32 %s313, 1
                $region79: #{svhn_feature_extractor.9} parent=65 // loop_footer_branch
                  %312 = sbr.rel target = $region75
                $region80: #{svhn_feature_extractor.9} parent=65 // loop_exit
                  _
              $region66: #{svhn_feature_extractor.9} parent=43 // pred_fallthru
                _
              // Predicated region
              $region81: #{svhn_feature_extractor.9} parent=43 // pred_check
                _
              $region82: #{svhn_feature_extractor.9} parent=43 // pred_check_branch
                %331 = sbr.rel target = $region84
              $region83: #{svhn_feature_extractor.9} parent=43 // pred_region
                _
              $region84: #{svhn_feature_extractor.9} parent=43 // pred_fallthru
                _
            $region44: #{svhn_feature_extractor.9} parent=39 // pred_fallthru
              _
            // Predicated region
            $region45: #{svhn_feature_extractor.9} parent=39 // pred_check
              _
            $region46: #{svhn_feature_extractor.9} parent=39 // pred_check_branch
              %233 = sbr.rel target = $region48
            $region47: #{svhn_feature_extractor.9} parent=39 // pred_region
              %s235 = ssub.s32 256, 1
              %s236 = sshrl.u32 %s222, 1
              // While loop
              $region49: #{svhn_feature_extractor.9} parent=47 // loop_pre_header
                _
              $region50: #{svhn_feature_extractor.9} parent=47 // loop_header
                %s238 = sphi 0, %s240
                %p239 = scmp.ge.s32.totalorder %s238, %s236
                %s243 = sphi 0, %s252
                %s244 = sphi %s215, %s255
                %s245 = sphi %s226, %s256
              $region51: #{svhn_feature_extractor.9} parent=47 // loop_header_branch
                %242 = sbr.rel (%p239) target = $region55
              $region52: #{svhn_feature_extractor.9} parent=47 // loop_body
                %v246 = vld [vmem:[%s244] sm:%s235]
                %247 = vst [vmem:[%s245] sm:%s235] %v246
                %v248 = vld [vmem:[%s244 + $0x8] sm:%s235]
                %249 = vst [vmem:[%s245 + $0x8] sm:%s235] %v248
                %s250 = sadd.s32 1, %s243
                %p251 = scmp.ge.s32.totalorder %s250, %s236
                %s252 = scalar_select %p251, 0, %s250
                %s253 = smul.u32 %s252, 16
                %s254 = smul.u32 %s252, 16
                %s255 = scalar_lea.vmem %s215, %s253 [#allocation2]
                %s256 = scalar_lea.vmem %s226, %s254
              $region53: #{svhn_feature_extractor.9} parent=47 // loop_footer
                %s240 = sadd.s32 %s238, 1
              $region54: #{svhn_feature_extractor.9} parent=47 // loop_footer_branch
                %237 = sbr.rel target = $region50
              $region55: #{svhn_feature_extractor.9} parent=47 // loop_exit
                _
              %s257 = sshrl.u32 %s222, 1
              %s258 = sand.u32 %s222, 1
              %s259 = smul.u32 %s257, 2
              %s260 = smul.u32 8, %s259
              %s261 = scalar_lea.vmem %s215, %s260 [#allocation2]
              %s262 = smul.u32 8, %s259
              %s263 = scalar_lea.vmem %s226, %s262
              // While loop
              $region56: #{svhn_feature_extractor.9} parent=47 // loop_pre_header
                _
              $region57: #{svhn_feature_extractor.9} parent=47 // loop_header
                %s265 = sphi 0, %s267
                %p266 = scmp.ge.s32.totalorder %s265, %s258
                %s270 = sphi 0, %s277
                %s271 = sphi %s261, %s280
                %s272 = sphi %s263, %s281
              $region58: #{svhn_feature_extractor.9} parent=47 // loop_header_branch
                %269 = sbr.rel (%p266) target = $region62
              $region59: #{svhn_feature_extractor.9} parent=47 // loop_body
                %v273 = vld [vmem:[%s271] sm:%s235]
                %274 = vst [vmem:[%s272] sm:%s235] %v273
                %s275 = sadd.s32 1, %s270
                %p276 = scmp.ge.s32.totalorder %s275, %s258
                %s277 = scalar_select %p276, 0, %s275
                %s278 = smul.u32 %s277, 8
                %s279 = smul.u32 %s277, 8
                %s280 = scalar_lea.vmem %s261, %s278 [#allocation2]
                %s281 = scalar_lea.vmem %s263, %s279
              $region60: #{svhn_feature_extractor.9} parent=47 // loop_footer
                %s267 = sadd.s32 %s265, 1
              $region61: #{svhn_feature_extractor.9} parent=47 // loop_footer_branch
                %264 = sbr.rel target = $region57
              $region62: #{svhn_feature_extractor.9} parent=47 // loop_exit
                _
            $region48: #{svhn_feature_extractor.9} parent=39 // pred_fallthru
              _
          $region40: #{svhn_feature_extractor.9} parent=35 // pred_fallthru
            _
          %332 = vnop
        $region36: #{svhn_feature_extractor.9} parent=31 // pred_fallthru
          _
      $region32: #{svhn_feature_extractor.9} parent=5 // pred_fallthru
        _
      %p333 = scmp.le.s32.totalorder 2, %s9
      // Predicated region
      $region85: #{svhn_feature_extractor.9} parent=5 // pred_check
        %p334 = pneg %p333
      $region86: #{svhn_feature_extractor.9} parent=5 // pred_check_branch
        %336 = sbr.rel (%p334) target = $region88
      $region87: #{svhn_feature_extractor.9} parent=5 // pred_region
        %s337 = ssub.s32 %s9, 2
        // Predicated region
        $region89: #{svhn_feature_extractor.9} parent=87 // pred_check
          %p338 = pneg %p106
        $region90: #{svhn_feature_extractor.9} parent=87 // pred_check_branch
          %340 = sbr.rel (%p338) target = $region92
        $region91: #{svhn_feature_extractor.9} parent=87 // pred_region
          %s341 = sand.u32 %s91, 1
          %s342 = sand.u32 %s91, 1
          %s343 = smul.addr %s342, 16
          %s344 = scalar_lea.vmem [#allocation2], %s343
        $region92: #{svhn_feature_extractor.9} parent=87 // pred_fallthru
          _
      $region88: #{svhn_feature_extractor.9} parent=5 // pred_fallthru
        _
    $region6: #{svhn_feature_extractor.9} parent=1 // loop_footer
      %s13 = sadd.s32 1, %s9
    $region7: #{svhn_feature_extractor.9} parent=1 // loop_footer_branch
      %8 = sbr.rel target = $region3
    $region8: #{svhn_feature_extractor.9} parent=1 // loop_exit
      _

// kernel: svhn_feature_extractor.8
$region0: #{svhn_feature_extractor.8}
  #allocation0 [shape = 'u32[]', space=smem, size = 0x4, offset = 0x4, fixed_abs, tag = 'smem constant byte address 0x4 - core index']
  #allocation1 [shape = 'u32[72,128]{1,0:T(1,128)}', space=vmem, size = 0x9000, scoped, tag = 'internal scratch']
  %s0 = inlined_call_operand.vmem [shape: bf16[18,1600], index: 0, kind: input, shape index: {}]
  %s1 = inlined_call_operand.vmem [shape: bf16[1600,128], index: 1, kind: input, shape index: {}]
  %s2 = inlined_call_operand.vmem [shape: f32[1,128], index: 2, kind: input, shape index: {}]
  %s3 = inlined_call_operand.vmem [shape: f32[1,1600], index: 3, kind: input, shape index: {}]
  %s4 = inlined_call_operand.vmem [shape: f32[1,1600], index: 4, kind: input, shape index: {}]
  %s5 = inlined_call_operand.vmem [shape: bf16[18,128], index: 5, kind: output, shape index: {0}]
  %s6 = inlined_call_operand.vmem [shape: f32[2,1,256], index: 6, kind: output, shape index: {1}]
  %7 = xla_tuple %s5, %s6
  %s8 = sld [smem:[#allocation0]]
  $region105: #{svhn_feature_extractor.8} parent=0
    _
  %s10 = ssub.s32 1, %s8
  %s11 = scalar_select 0, %s10, %s8
  $region1: #{svhn_feature_extractor.8} parent=0
    #allocation2 [shape = 'u8[8192]{0}', space=vmem, size = 0x2000, scoped, tag = 'output window, operand 0']
    loop: start=0, step=1, limit=4
    $region2: #{svhn_feature_extractor.8} parent=1 // loop_pre_header
      _
    $region3: #{svhn_feature_extractor.8} parent=1 // loop_header
      %s13 = sphi 0, %s17
      %p14 = scmp.ge.s32.totalorder %s13, 4
      %s23 = sphi 0, %s25
      %s26 = sphi 0, %s23
      %s27 = sphi 0, %s26
      %s43 = sphi 0, %s27
      %s47 = sphi 0, %s47
      %s49 = sphi 0, %s47
      %s50 = sphi 0, %s49
      %s64 = sphi 0, %s50
      %s68 = sphi 0, %s68
      %s70 = sphi 0, %s68
      %s71 = sphi 0, %s70
      %s85 = sphi 0, %s71
      %s89 = sphi 0, %s89
      %s91 = sphi 0, %s89
      %s92 = sphi 0, %s91
      %s106 = sphi 0, %s92
      %s110 = sphi 0, %s110
      %s112 = sphi 0, %s110
      %s113 = sphi 0, %s112
      %s127 = sphi 0, %s113
      %s133 = sphi 0, %s135
      %s136 = sphi 0, %s133
      %s137 = sphi 0, %s136
      %s153 = sphi 0, %s137
      %s159 = sphi 0, %s161
      %s162 = sphi 0, %s159
      %s163 = sphi 0, %s162
      %s179 = sphi 0, %s163
    $region4: #{svhn_feature_extractor.8} parent=1 // loop_header_branch
      %16 = sbr.rel (%p14) target = $region8
    $region5: #{svhn_feature_extractor.8} parent=1 // loop_body
      %s18 = ssub.s32 %s13, 1
      %s19 = ssub.s32 %s13, 2
      %s20 = sadd.s32 %s13, 1
      %s21 = ssub.s32 %s13, %s20
      %p22 = scmp.eq.s32.totalorder %s21, 0
      %s24 = sadd.s32 %s23, 1
      %s25 = scalar_select %p22, %s23, %s24
      %p28 = pneg %p22
      %p29 = scmp.eq.s32.totalorder %s13, 1
      %p30 = por %p28, %p29
      %p31 = scmp.ne.s32.totalorder %s23, %s26
      %p32 = scmp.eq.s32.totalorder %s13, 0
      %p33 = por %p31, %p32
      %p34 = scmp.ne.s32.totalorder %s23, %s26
      %p35 = scmp.eq.s32.totalorder %s18, 1
      %p36 = por %p34, %p35
      %p37 = scmp.ne.s32.totalorder %s26, %s27
      %p38 = scmp.eq.s32.totalorder %s18, 0
      %p39 = por %p37, %p38
      %p40 = scmp.ne.s32.totalorder %s26, %s27
      %p41 = scmp.eq.s32.totalorder %s19, 1
      %p42 = por %p40, %p41
      %p44 = scmp.ne.s32.totalorder %s27, %s43
      %p45 = scmp.eq.s32.totalorder %s19, 0
      %p46 = por %p44, %p45
      %s48 = sadd.s32 %s47, 1
      %p51 = scmp.eq.s32.totalorder %s13, 1
      %p52 = scmp.ne.s32.totalorder %s47, %s49
      %p53 = scmp.eq.s32.totalorder %s13, 0
      %p54 = por %p52, %p53
      %p55 = scmp.ne.s32.totalorder %s47, %s49
      %p56 = scmp.eq.s32.totalorder %s18, 1
      %p57 = por %p55, %p56
      %p58 = scmp.ne.s32.totalorder %s49, %s50
      %p59 = scmp.eq.s32.totalorder %s18, 0
      %p60 = por %p58, %p59
      %p61 = scmp.ne.s32.totalorder %s49, %s50
      %p62 = scmp.eq.s32.totalorder %s19, 1
      %p63 = por %p61, %p62
      %p65 = scmp.ne.s32.totalorder %s50, %s64
      %p66 = scmp.eq.s32.totalorder %s19, 0
      %p67 = por %p65, %p66
      %s69 = sadd.s32 %s68, 1
      %p72 = scmp.eq.s32.totalorder %s13, 1
      %p73 = scmp.ne.s32.totalorder %s68, %s70
      %p74 = scmp.eq.s32.totalorder %s13, 0
      %p75 = por %p73, %p74
      %p76 = scmp.ne.s32.totalorder %s68, %s70
      %p77 = scmp.eq.s32.totalorder %s18, 1
      %p78 = por %p76, %p77
      %p79 = scmp.ne.s32.totalorder %s70, %s71
      %p80 = scmp.eq.s32.totalorder %s18, 0
      %p81 = por %p79, %p80
      %p82 = scmp.ne.s32.totalorder %s70, %s71
      %p83 = scmp.eq.s32.totalorder %s19, 1
      %p84 = por %p82, %p83
      %p86 = scmp.ne.s32.totalorder %s71, %s85
      %p87 = scmp.eq.s32.totalorder %s19, 0
      %p88 = por %p86, %p87
      %s90 = sadd.s32 %s89, 1
      %p93 = scmp.eq.s32.totalorder %s13, 1
      %p94 = scmp.ne.s32.totalorder %s89, %s91
      %p95 = scmp.eq.s32.totalorder %s13, 0
      %p96 = por %p94, %p95
      %p97 = scmp.ne.s32.totalorder %s89, %s91
      %p98 = scmp.eq.s32.totalorder %s18, 1
      %p99 = por %p97, %p98
      %p100 = scmp.ne.s32.totalorder %s91, %s92
      %p101 = scmp.eq.s32.totalorder %s18, 0
      %p102 = por %p100, %p101
      %p103 = scmp.ne.s32.totalorder %s91, %s92
      %p104 = scmp.eq.s32.totalorder %s19, 1
      %p105 = por %p103, %p104
      %p107 = scmp.ne.s32.totalorder %s92, %s106
      %p108 = scmp.eq.s32.totalorder %s19, 0
      %p109 = por %p107, %p108
      %s111 = sadd.s32 %s110, 1
      %p114 = scmp.eq.s32.totalorder %s13, 1
      %p115 = scmp.ne.s32.totalorder %s110, %s112
      %p116 = scmp.eq.s32.totalorder %s13, 0
      %p117 = por %p115, %p116
      %p118 = scmp.ne.s32.totalorder %s110, %s112
      %p119 = scmp.eq.s32.totalorder %s18, 1
      %p120 = por %p118, %p119
      %p121 = scmp.ne.s32.totalorder %s112, %s113
      %p122 = scmp.eq.s32.totalorder %s18, 0
      %p123 = por %p121, %p122
      %p124 = scmp.ne.s32.totalorder %s112, %s113
      %p125 = scmp.eq.s32.totalorder %s19, 1
      %p126 = por %p124, %p125
      %p128 = scmp.ne.s32.totalorder %s113, %s127
      %p129 = scmp.eq.s32.totalorder %s19, 0
      %p130 = por %p128, %p129
      %s131 = ssub.s32 %s13, %s20
      %p132 = scmp.eq.s32.totalorder %s131, 0
      %s134 = sadd.s32 %s133, 1
      %s135 = scalar_select %p132, %s133, %s134
      %p138 = pneg %p132
      %p139 = scmp.eq.s32.totalorder %s13, 1
      %p140 = por %p138, %p139
      %p141 = scmp.ne.s32.totalorder %s133, %s136
      %p142 = scmp.eq.s32.totalorder %s13, 0
      %p143 = por %p141, %p142
      %p144 = scmp.ne.s32.totalorder %s133, %s136
      %p145 = scmp.eq.s32.totalorder %s18, 1
      %p146 = por %p144, %p145
      %p147 = scmp.ne.s32.totalorder %s136, %s137
      %p148 = scmp.eq.s32.totalorder %s18, 0
      %p149 = por %p147, %p148
      %p150 = scmp.ne.s32.totalorder %s136, %s137
      %p151 = scmp.eq.s32.totalorder %s19, 1
      %p152 = por %p150, %p151
      %p154 = scmp.ne.s32.totalorder %s137, %s153
      %p155 = scmp.eq.s32.totalorder %s19, 0
      %p156 = por %p154, %p155
      %s157 = ssub.s32 %s13, %s20
      %p158 = scmp.eq.s32.totalorder %s157, 0
      %s160 = sadd.s32 %s159, 1
      %s161 = scalar_select %p158, %s159, %s160
      %p164 = pneg %p158
      %p165 = scmp.eq.s32.totalorder %s13, 1
      %p166 = por %p164, %p165
      %p167 = scmp.ne.s32.totalorder %s159, %s162
      %p168 = scmp.eq.s32.totalorder %s13, 0
      %p169 = por %p167, %p168
      %p170 = scmp.ne.s32.totalorder %s159, %s162
      %p171 = scmp.eq.s32.totalorder %s18, 1
      %p172 = por %p170, %p171
      %p173 = scmp.ne.s32.totalorder %s162, %s163
      %p174 = scmp.eq.s32.totalorder %s18, 0
      %p175 = por %p173, %p174
      %p176 = scmp.ne.s32.totalorder %s162, %s163
      %p177 = scmp.eq.s32.totalorder %s19, 1
      %p178 = por %p176, %p177
      %p180 = scmp.ne.s32.totalorder %s163, %s179
      %p181 = scmp.eq.s32.totalorder %s19, 0
      %p182 = por %p180, %p181
      %p183 = scmp.le.s32.totalorder 1, %s13
      %p184 = scmp.lt.s32.totalorder %s13, 3
      %p185 = pnand %p183, %p184
      %p186 = pneg %p185
      // Predicated region
      $region9: #{svhn_feature_extractor.8} parent=5 // pred_check
        _
      $region10: #{svhn_feature_extractor.8} parent=5 // pred_check_branch
        %188 = sbr.rel (%p185) target = $region12
      $region11: #{svhn_feature_extractor.8} parent=5 // pred_region
        %s189 = ssub.s32 %s13, 1
        // Predicated region
        $region13: #{svhn_feature_extractor.8} parent=11 // pred_check
          %p190 = pneg %p60
        $region14: #{svhn_feature_extractor.8} parent=11 // pred_check_branch
          %192 = sbr.rel (%p190) target = $region16
        $region15: #{svhn_feature_extractor.8} parent=11 // pred_region
          _
        $region16: #{svhn_feature_extractor.8} parent=11 // pred_fallthru
          _
        // Predicated region
        $region17: #{svhn_feature_extractor.8} parent=11 // pred_check
          %p193 = pneg %p81
        $region18: #{svhn_feature_extractor.8} parent=11 // pred_check_branch
          %195 = sbr.rel (%p193) target = $region20
        $region19: #{svhn_feature_extractor.8} parent=11 // pred_region
          _
        $region20: #{svhn_feature_extractor.8} parent=11 // pred_fallthru
          _
        // Predicated region
        $region21: #{svhn_feature_extractor.8} parent=11 // pred_check
          %p196 = pneg %p102
        $region22: #{svhn_feature_extractor.8} parent=11 // pred_check_branch
          %198 = sbr.rel (%p196) target = $region24
        $region23: #{svhn_feature_extractor.8} parent=11 // pred_region
          _
        $region24: #{svhn_feature_extractor.8} parent=11 // pred_fallthru
          _
        // Predicated region
        $region25: #{svhn_feature_extractor.8} parent=11 // pred_check
          %p199 = pneg %p123
        $region26: #{svhn_feature_extractor.8} parent=11 // pred_check_branch
          %201 = sbr.rel (%p199) target = $region28
        $region27: #{svhn_feature_extractor.8} parent=11 // pred_region
          _
        $region28: #{svhn_feature_extractor.8} parent=11 // pred_fallthru
          _
      $region12: #{svhn_feature_extractor.8} parent=5 // pred_fallthru
        _
      %p202 = scmp.lt.s32.totalorder %s13, 2
      // Predicated region
      $region29: #{svhn_feature_extractor.8} parent=5 // pred_check
        %p203 = pneg %p202
      $region30: #{svhn_feature_extractor.8} parent=5 // pred_check_branch
        %205 = sbr.rel (%p203) target = $region32
      $region31: #{svhn_feature_extractor.8} parent=5 // pred_region
        // Predicated region
        $region33: #{svhn_feature_extractor.8} parent=31 // pred_check
          %p206 = pneg %p33
        $region34: #{svhn_feature_extractor.8} parent=31 // pred_check_branch
          %208 = sbr.rel (%p206) target = $region36
        $region35: #{svhn_feature_extractor.8} parent=31 // pred_region
          %s209 = smul.u32 2, %s13
          %s210 = ssub.s32 3, %s209
          %p211 = scmp.lt.s32.totalorder %s210, 2
          %s212 = scalar_select %p211, %s210, 2
          %s213 = smul.u32 4, %s212
          %s214 = smul.u32 %s213, 13
          %p215 = scmp.lt.s32.totalorder %s209, 2
          %s216 = scalar_select %p215, %s209, 2
          %s217 = smul.addr %s216, 13
          %s218 = smul.addr %s217, 4
          %s219 = scalar_lea.vmem %s0, %s218
          %s220 = smul.u32 2, %s13
          %s221 = ssub.s32 3, %s220
          %p222 = scmp.lt.s32.totalorder %s221, 2
          %s223 = scalar_select %p222, %s221, 2
          %s224 = smul.u32 4, %s223
          %s225 = smul.u32 %s224, 13
        $region36: #{svhn_feature_extractor.8} parent=31 // pred_fallthru
          _
      $region32: #{svhn_feature_extractor.8} parent=5 // pred_fallthru
        _
      %p226 = scmp.le.s32.totalorder 1, %s13
      %p227 = scmp.lt.s32.totalorder %s13, 3
      %p228 = pnand %p226, %p227
      %p229 = pneg %p228
      // Predicated region
      $region37: #{svhn_feature_extractor.8} parent=5 // pred_check
        _
      $region38: #{svhn_feature_extractor.8} parent=5 // pred_check_branch
        %231 = sbr.rel (%p228) target = $region40
      $region39: #{svhn_feature_extractor.8} parent=5 // pred_region
        %s232 = ssub.s32 %s13, 1
        %s233 = smul.u32 2, %s18
        %s234 = ssub.s32 3, %s233
        %p235 = scmp.lt.s32.totalorder %s234, 2
        %s236 = scalar_select %p235, %s234, 2
        %s237 = smul.u32 4, %s236
        %s238 = smul.u32 %s237, 13
        %p239 = scmp.lt.s32.totalorder %s233, 2
        %s240 = scalar_select %p239, %s233, 2
        %s241 = smul.addr %s240, 13
        %s242 = smul.addr %s241, 4
        %s243 = scalar_lea.vmem %s0, %s242
        %p244 = pneg %p39
        %p245 = pneg %p36
        %p246 = pneg %p60
        %p247 = pneg %p57
        %p248 = pneg %p81
        %p249 = pneg %p78
        %p250 = pneg %p102
        %p251 = pneg %p99
        %p252 = pneg %p123
        %p253 = pneg %p120
        %p254 = pneg %p149
        %p255 = pneg %p146
        %s256 = sand.u32 %s136, 1
        %s257 = sand.u32 %s136, 1
        %s258 = smul.addr %s257, 8
        %s259 = scalar_lea.vmem [#allocation2], %s258
        %p260 = pneg %p175
        %p261 = pneg %p172
        %p262 = scmp.lt.s32.totalorder %s18, 1
        %s263 = scalar_select %p262, %s18, 1
        %s264 = smul.addr %s263, 2
        %s265 = scalar_lea.vmem %s6, %s264
        %s266 = smul.u32 2, %s18
        %s267 = ssub.s32 3, %s266
        %p268 = scmp.lt.s32.totalorder %s267, 2
        %s269 = scalar_select %p268, %s267, 2
        %s270 = smul.u32 4, %s269
        %s271 = smul.u32 %s270, 13
        %p272 = scmp.lt.s32.totalorder %s266, 2
        %s273 = scalar_select %p272, %s266, 2
        %s274 = smul.addr %s273, 13
        %s275 = smul.addr %s274, 4
        %s276 = scalar_lea.vmem %s0, %s275
        %s277 = smul.u32 2, %s18
        %s278 = ssub.s32 3, %s277
        %p279 = scmp.lt.s32.totalorder %s278, 2
        %s280 = scalar_select %p279, %s278, 2
        %s281 = smul.u32 4, %s280
        %s282 = smul.u32 %s281, 13
        %s283 = smul.u32 2, %s18
        %s284 = ssub.s32 3, %s283
        %p285 = scmp.lt.s32.totalorder %s284, 2
        %s286 = scalar_select %p285, %s284, 2
        %s287 = smul.u32 4, %s286
        %p288 = scmp.lt.s32.totalorder %s18, 1
        %s289 = scalar_select %p288, %s18, 1
        %s290 = smul.addr %s289, 2
        %s291 = scalar_lea.vmem %s6, %s290
        %v293 = vld [vmem:[%s276] sm:$0xff]
        %v294 = vld [vmem:[%s276 + $0x8] sm:$0xff]
        %v295 = vld [vmem:[%s276 + $0x10] sm:$0xff]
        %v296 = vld [vmem:[%s276 + $0x18] sm:$0xff]
        %v297 = vld [vmem:[%s276 + $0x20] sm:$0xff]
        %v298 = vld [vmem:[%s276 + $0x28] sm:$0xff]
        %v299 = vld [vmem:[%s276 + $0x30] sm:$0xf]
        %v300 = vld [vmem:[%s276 + $0x34] sm:$0xff]
        %v301 = vld [vmem:[%s276 + $0x3c] sm:$0xff]
        %v302 = vld [vmem:[%s276 + $0x44] sm:$0xff]
        %v303 = vld [vmem:[%s276 + $0x4c] sm:$0xff]
        %v304 = vld [vmem:[%s276 + $0x54] sm:$0xff]
        %v305 = vld [vmem:[%s276 + $0x5c] sm:$0xff]
        %v306 = vld [vmem:[%s276 + $0x64] sm:$0xf]
        %v307 = vunpack.c.l.bf16 %v293
        %v308 = vunpack.c.h.bf16 %v293
        %v309 = vunpack.c.l.bf16 %v294
        %v310 = vunpack.c.h.bf16 %v294
        %v311 = vunpack.c.l.bf16 %v295
        %v312 = vunpack.c.h.bf16 %v295
        %v313 = vunpack.c.l.bf16 %v296
        %v314 = vunpack.c.h.bf16 %v296
        %v315 = vunpack.c.l.bf16 %v297
        %v316 = vunpack.c.h.bf16 %v297
        %v317 = vunpack.c.l.bf16 %v298
        %v318 = vunpack.c.h.bf16 %v298
        %v319 = vunpack.c.l.bf16 %v299
        %v320 = vunpack.c.l.bf16 %v300
        %v321 = vunpack.c.h.bf16 %v300
        %v322 = vunpack.c.l.bf16 %v301
        %v323 = vunpack.c.h.bf16 %v301
        %v324 = vunpack.c.l.bf16 %v302
        %v325 = vunpack.c.h.bf16 %v302
        %v326 = vunpack.c.l.bf16 %v303
        %v327 = vunpack.c.h.bf16 %v303
        %v328 = vunpack.c.l.bf16 %v304
        %v329 = vunpack.c.h.bf16 %v304
        %v330 = vunpack.c.l.bf16 %v305
        %v331 = vunpack.c.h.bf16 %v305
        %v332 = vunpack.c.l.bf16 %v306
        %v333 = vld [vmem:[%s3] sm:$0xff]
        %v334 = vld [vmem:[%s3 + $0x8] sm:$0x1f]
        %v337 = vperm.slane %v333, 0
        %v338 = vperm.slane %v333, 1
        %v339 = vperm.slane %v333, 2
        %v340 = vperm.slane %v333, 3
        %v341 = vperm.slane %v333, 4
        %v342 = vperm.slane %v333, 5
        %v343 = vperm.slane %v333, 6
        %v344 = vperm.slane %v333, 7
        %v345 = vperm.slane %v334, 0
        %v346 = vperm.slane %v334, 1
        %v347 = vperm.slane %v334, 2
        %v348 = vperm.slane %v334, 3
        %v349 = vperm.slane %v334, 4
        %v363 = vmul.f32 %v307, %v337
        %v364 = vmul.f32 %v308, %v338
        %v365 = vmul.f32 %v309, %v339
        %v366 = vmul.f32 %v310, %v340
        %v367 = vmul.f32 %v311, %v341
        %v368 = vmul.f32 %v312, %v342
        %v369 = vmul.f32 %v313, %v343
        %v370 = vmul.f32 %v314, %v344
        %v371 = vmul.f32 %v315, %v345
        %v372 = vmul.f32 %v316, %v346
        %v373 = vmul.f32 %v317, %v347
        %v374 = vmul.f32 %v318, %v348
        %v375 = vmul.f32 %v319, %v349
        %v376 = vmul.f32 %v320, %v337
        %v377 = vmul.f32 %v321, %v338
        %v378 = vmul.f32 %v322, %v339
        %v379 = vmul.f32 %v323, %v340
        %v380 = vmul.f32 %v324, %v341
        %v381 = vmul.f32 %v325, %v342
        %v382 = vmul.f32 %v326, %v343
        %v383 = vmul.f32 %v327, %v344
        %v384 = vmul.f32 %v328, %v345
        %v385 = vmul.f32 %v329, %v346
        %v386 = vmul.f32 %v330, %v347
        %v387 = vmul.f32 %v331, %v348
        %v388 = vmul.f32 %v332, %v349
        %v389 = vld [vmem:[%s4] sm:$0xff]
        %v390 = vld [vmem:[%s4 + $0x8] sm:$0x1f]
        %v393 = vperm.slane %v389, 0
        %v394 = vperm.slane %v389, 1
        %v395 = vperm.slane %v389, 2
        %v396 = vperm.slane %v389, 3
        %v397 = vperm.slane %v389, 4
        %v398 = vperm.slane %v389, 5
        %v399 = vperm.slane %v389, 6
        %v400 = vperm.slane %v389, 7
        %v401 = vperm.slane %v390, 0
        %v402 = vperm.slane %v390, 1
        %v403 = vperm.slane %v390, 2
        %v404 = vperm.slane %v390, 3
        %v405 = vperm.slane %v390, 4
        %v419 = vadd.f32 %v363, %v393
        %v420 = vadd.f32 %v364, %v394
        %v421 = vadd.f32 %v365, %v395
        %v422 = vadd.f32 %v366, %v396
        %v423 = vadd.f32 %v367, %v397
        %v424 = vadd.f32 %v368, %v398
        %v425 = vadd.f32 %v369, %v399
        %v426 = vadd.f32 %v370, %v400
        %v427 = vadd.f32 %v371, %v401
        %v428 = vadd.f32 %v372, %v402
        %v429 = vadd.f32 %v373, %v403
        %v430 = vadd.f32 %v374, %v404
        %v431 = vadd.f32 %v375, %v405
        %v432 = vadd.f32 %v376, %v393
        %v433 = vadd.f32 %v377, %v394
        %v434 = vadd.f32 %v378, %v395
        %v435 = vadd.f32 %v379, %v396
        %v436 = vadd.f32 %v380, %v397
        %v437 = vadd.f32 %v381, %v398
        %v438 = vadd.f32 %v382, %v399
        %v439 = vadd.f32 %v383, %v400
        %v440 = vadd.f32 %v384, %v401
        %v441 = vadd.f32 %v385, %v402
        %v442 = vadd.f32 %v386, %v403
        %v443 = vadd.f32 %v387, %v404
        %v444 = vadd.f32 %v388, %v405
        %v445 = vmax.f32 %v419, 0.0
        %v446 = vmax.f32 %v420, 0.0
        %v447 = vmax.f32 %v421, 0.0
        %v448 = vmax.f32 %v422, 0.0
        %v449 = vmax.f32 %v423, 0.0
        %v450 = vmax.f32 %v424, 0.0
        %v451 = vmax.f32 %v425, 0.0
        %v452 = vmax.f32 %v426, 0.0
        %v453 = vmax.f32 %v427, 0.0
        %v454 = vmax.f32 %v428, 0.0
        %v455 = vmax.f32 %v429, 0.0
        %v456 = vmax.f32 %v430, 0.0
        %v457 = vmax.f32 %v431, 0.0
        %v458 = vmax.f32 %v432, 0.0
        %v459 = vmax.f32 %v433, 0.0
        %v460 = vmax.f32 %v434, 0.0
        %v461 = vmax.f32 %v435, 0.0
        %v462 = vmax.f32 %v436, 0.0
        %v463 = vmax.f32 %v437, 0.0
        %v464 = vmax.f32 %v438, 0.0
        %v465 = vmax.f32 %v439, 0.0
        %v466 = vmax.f32 %v440, 0.0
        %v467 = vmax.f32 %v441, 0.0
        %v468 = vmax.f32 %v442, 0.0
        %v469 = vmax.f32 %v443, 0.0
        %v470 = vmax.f32 %v444, 0.0
        %v471 = vpack.c.bf16 %v458, %v445
        %v472 = vpack.c.bf16 %v459, %v446
        %v473 = vpack.c.bf16 %v460, %v447
        %v474 = vpack.c.bf16 %v461, %v448
        %v475 = vpack.c.bf16 %v462, %v449
        %v476 = vpack.c.bf16 %v463, %v450
        %v477 = vpack.c.bf16 %v464, %v451
        %v478 = vpack.c.bf16 %v465, %v452
        %v479 = vpack.c.bf16 %v466, %v453
        %v480 = vpack.c.bf16 %v467, %v454
        %v481 = vpack.c.bf16 %v468, %v455
        %v482 = vpack.c.bf16 %v469, %v456
        %v483 = vpack.c.bf16 %v470, %v457
        %v484 = vld [vmem:[%s1] sm:$0xf]
        %v485 = vld [vmem:[%s1 + $0x4] sm:$0xf]
        %v486 = vld [vmem:[%s1 + $0x8] sm:$0xf]
        %v487 = vld [vmem:[%s1 + $0xc] sm:$0xf]
        %v488 = vld [vmem:[%s1 + $0x10] sm:$0xf]
        %v489 = vld [vmem:[%s1 + $0x14] sm:$0xf]
        %v490 = vld [vmem:[%s1 + $0x18] sm:$0xf]
        %v491 = vld [vmem:[%s1 + $0x1c] sm:$0xf]
        %v492 = vld [vmem:[%s1 + $0x20] sm:$0xf]
        %v493 = vld [vmem:[%s1 + $0x24] sm:$0xf]
        %v494 = vld [vmem:[%s1 + $0x28] sm:$0xf]
        %v495 = vld [vmem:[%s1 + $0x2c] sm:$0xf]
        %v496 = vld [vmem:[%s1 + $0x30] sm:$0xf]
        %v497 = vld [vmem:[%s1 + $0x34] sm:$0xf]
        %v498 = vld [vmem:[%s1 + $0x38] sm:$0xf]
        %v499 = vld [vmem:[%s1 + $0x3c] sm:$0xf]
        %v500 = vld [vmem:[%s1 + $0x40] sm:$0xf]
        %v501 = vld [vmem:[%s1 + $0x44] sm:$0xf]
        %v502 = vld [vmem:[%s1 + $0x48] sm:$0xf]
        %v503 = vld [vmem:[%s1 + $0x4c] sm:$0xf]
        %v504 = vld [vmem:[%s1 + $0x50] sm:$0xf]
        %v505 = vld [vmem:[%s1 + $0x54] sm:$0xf]
        %v506 = vld [vmem:[%s1 + $0x58] sm:$0xf]
        %v507 = vld [vmem:[%s1 + $0x5c] sm:$0xf]
        %v508 = vld [vmem:[%s1 + $0x60] sm:$0xf]
        %v509 = vld [vmem:[%s1 + $0x64] sm:$0xf]
        %v510 = vld [vmem:[%s1 + $0x68] sm:$0xf]
        %v511 = vld [vmem:[%s1 + $0x6c] sm:$0xf]
        %v512 = vld [vmem:[%s1 + $0x70] sm:$0xf]
        %v513 = vld [vmem:[%s1 + $0x74] sm:$0xf]
        %v514 = vld [vmem:[%s1 + $0x78] sm:$0xf]
        %v515 = vld [vmem:[%s1 + $0x7c] sm:$0xf]
        %v516 = vld [vmem:[%s1 + $0x80] sm:$0xf]
        %v517 = vld [vmem:[%s1 + $0x84] sm:$0xf]
        %v518 = vld [vmem:[%s1 + $0x88] sm:$0xf]
        %v519 = vld [vmem:[%s1 + $0x8c] sm:$0xf]
        %v520 = vld [vmem:[%s1 + $0x90] sm:$0xf]
        %v521 = vld [vmem:[%s1 + $0x94] sm:$0xf]
        %v522 = vld [vmem:[%s1 + $0x98] sm:$0xf]
        %v523 = vld [vmem:[%s1 + $0x9c] sm:$0xf]
        %v524 = vld [vmem:[%s1 + $0xa0] sm:$0xf]
        %v525 = vld [vmem:[%s1 + $0xa4] sm:$0xf]
        %v526 = vld [vmem:[%s1 + $0xa8] sm:$0xf]
        %v527 = vld [vmem:[%s1 + $0xac] sm:$0xf]
        %v528 = vld [vmem:[%s1 + $0xb0] sm:$0xf]
        %v529 = vld [vmem:[%s1 + $0xb4] sm:$0xf]
        %v530 = vld [vmem:[%s1 + $0xb8] sm:$0xf]
        %v531 = vld [vmem:[%s1 + $0xbc] sm:$0xf]
        %v532 = vld [vmem:[%s1 + $0xc0] sm:$0xf]
        %v533 = vld [vmem:[%s1 + $0xc4] sm:$0xf]
        %v534 = vld [vmem:[%s1 + $0xc8] sm:$0xf]
        %v535 = vld [vmem:[%s1 + $0xcc] sm:$0xf]
        %v536 = vld [vmem:[%s1 + $0xd0] sm:$0xf]
        %v537 = vld [vmem:[%s1 + $0xd4] sm:$0xf]
        %v538 = vld [vmem:[%s1 + $0xd8] sm:$0xf]
        %v539 = vld [vmem:[%s1 + $0xdc] sm:$0xf]
        %v540 = vld [vmem:[%s1 + $0xe0] sm:$0xf]
        %v541 = vld [vmem:[%s1 + $0xe4] sm:$0xf]
        %v542 = vld [vmem:[%s1 + $0xe8] sm:$0xf]
        %v543 = vld [vmem:[%s1 + $0xec] sm:$0xf]
        %v544 = vld [vmem:[%s1 + $0xf0] sm:$0xf]
        %v545 = vld [vmem:[%s1 + $0xf4] sm:$0xf]
        %v546 = vld [vmem:[%s1 + $0xf8] sm:$0xf]
        %v547 = vld [vmem:[%s1 + $0xfc] sm:$0xf]
        %v548 = vld [vmem:[%s1 + $0x100] sm:$0xf]
        %v549 = vld [vmem:[%s1 + $0x104] sm:$0xf]
        %v550 = vld [vmem:[%s1 + $0x108] sm:$0xf]
        %v551 = vld [vmem:[%s1 + $0x10c] sm:$0xf]
        %v552 = vld [vmem:[%s1 + $0x110] sm:$0xf]
        %v553 = vld [vmem:[%s1 + $0x114] sm:$0xf]
        %v554 = vld [vmem:[%s1 + $0x118] sm:$0xf]
        %v555 = vld [vmem:[%s1 + $0x11c] sm:$0xf]
        %v556 = vld [vmem:[%s1 + $0x120] sm:$0xf]
        %v557 = vld [vmem:[%s1 + $0x124] sm:$0xf]
        %v558 = vld [vmem:[%s1 + $0x128] sm:$0xf]
        %v559 = vld [vmem:[%s1 + $0x12c] sm:$0xf]
        %v560 = vld [vmem:[%s1 + $0x130] sm:$0xf]
        %v561 = vld [vmem:[%s1 + $0x134] sm:$0xf]
        %v562 = vld [vmem:[%s1 + $0x138] sm:$0xf]
        %v563 = vld [vmem:[%s1 + $0x13c] sm:$0xf]
        %v564 = vld [vmem:[%s1 + $0x140] sm:$0xf]
        %v565 = vld [vmem:[%s1 + $0x144] sm:$0xf]
        %v566 = vld [vmem:[%s1 + $0x148] sm:$0xf]
        %v567 = vld [vmem:[%s1 + $0x14c] sm:$0xf]
        %v568 = vld [vmem:[%s1 + $0x150] sm:$0xf]
        %v569 = vld [vmem:[%s1 + $0x154] sm:$0xf]
        %v570 = vld [vmem:[%s1 + $0x158] sm:$0xf]
        %v571 = vld [vmem:[%s1 + $0x15c] sm:$0xf]
        %v572 = vld [vmem:[%s1 + $0x160] sm:$0xf]
        %v573 = vld [vmem:[%s1 + $0x164] sm:$0xf]
        %v574 = vld [vmem:[%s1 + $0x168] sm:$0xf]
        %v575 = vld [vmem:[%s1 + $0x16c] sm:$0xf]
        %v576 = vld [vmem:[%s1 + $0x170] sm:$0xf]
        %v577 = vld [vmem:[%s1 + $0x174] sm:$0xf]
        %v578 = vld [vmem:[%s1 + $0x178] sm:$0xf]
        %v579 = vld [vmem:[%s1 + $0x17c] sm:$0xf]
        %v580 = vld [vmem:[%s1 + $0x180] sm:$0xf]
        %v581 = vld [vmem:[%s1 + $0x184] sm:$0xf]
        %v582 = vld [vmem:[%s1 + $0x188] sm:$0xf]
        %v583 = vld [vmem:[%s1 + $0x18c] sm:$0xf]
        %v584 = vld [vmem:[%s1 + $0x190] sm:$0xf]
        %v585 = vld [vmem:[%s1 + $0x194] sm:$0xf]
        %v586 = vld [vmem:[%s1 + $0x198] sm:$0xf]
        %v587 = vld [vmem:[%s1 + $0x19c] sm:$0xf]
        %v588 = vld [vmem:[%s1 + $0x1a0] sm:$0xf]
        %v589 = vld [vmem:[%s1 + $0x1a4] sm:$0xf]
        %v590 = vld [vmem:[%s1 + $0x1a8] sm:$0xf]
        %v591 = vld [vmem:[%s1 + $0x1ac] sm:$0xf]
        %v592 = vld [vmem:[%s1 + $0x1b0] sm:$0xf]
        %v593 = vld [vmem:[%s1 + $0x1b4] sm:$0xf]
        %v594 = vld [vmem:[%s1 + $0x1b8] sm:$0xf]
        %v595 = vld [vmem:[%s1 + $0x1bc] sm:$0xf]
        %v596 = vld [vmem:[%s1 + $0x1c0] sm:$0xf]
        %v597 = vld [vmem:[%s1 + $0x1c4] sm:$0xf]
        %v598 = vld [vmem:[%s1 + $0x1c8] sm:$0xf]
        %v599 = vld [vmem:[%s1 + $0x1cc] sm:$0xf]
        %v600 = vld [vmem:[%s1 + $0x1d0] sm:$0xf]
        %v601 = vld [vmem:[%s1 + $0x1d4] sm:$0xf]
        %v602 = vld [vmem:[%s1 + $0x1d8] sm:$0xf]
        %v603 = vld [vmem:[%s1 + $0x1dc] sm:$0xf]
        %v604 = vld [vmem:[%s1 + $0x1e0] sm:$0xf]
        %v605 = vld [vmem:[%s1 + $0x1e4] sm:$0xf]
        %v606 = vld [vmem:[%s1 + $0x1e8] sm:$0xf]
        %v607 = vld [vmem:[%s1 + $0x1ec] sm:$0xf]
        %v608 = vld [vmem:[%s1 + $0x1f0] sm:$0xf]
        %v609 = vld [vmem:[%s1 + $0x1f4] sm:$0xf]
        %v610 = vld [vmem:[%s1 + $0x1f8] sm:$0xf]
        %v611 = vld [vmem:[%s1 + $0x1fc] sm:$0xf]
        %v612 = vld [vmem:[%s1 + $0x200] sm:$0xf]
        %v613 = vld [vmem:[%s1 + $0x204] sm:$0xf]
        %v614 = vld [vmem:[%s1 + $0x208] sm:$0xf]
        %v615 = vld [vmem:[%s1 + $0x20c] sm:$0xf]
        %v616 = vld [vmem:[%s1 + $0x210] sm:$0xf]
        %v617 = vld [vmem:[%s1 + $0x214] sm:$0xf]
        %v618 = vld [vmem:[%s1 + $0x218] sm:$0xf]
        %v619 = vld [vmem:[%s1 + $0x21c] sm:$0xf]
        %v620 = vld [vmem:[%s1 + $0x220] sm:$0xf]
        %v621 = vld [vmem:[%s1 + $0x224] sm:$0xf]
        %v622 = vld [vmem:[%s1 + $0x228] sm:$0xf]
        %v623 = vld [vmem:[%s1 + $0x22c] sm:$0xf]
        %v624 = vld [vmem:[%s1 + $0x230] sm:$0xf]
        %v625 = vld [vmem:[%s1 + $0x234] sm:$0xf]
        %v626 = vld [vmem:[%s1 + $0x238] sm:$0xf]
        %v627 = vld [vmem:[%s1 + $0x23c] sm:$0xf]
        %v628 = vld [vmem:[%s1 + $0x240] sm:$0xf]
        %v629 = vld [vmem:[%s1 + $0x244] sm:$0xf]
        %v630 = vld [vmem:[%s1 + $0x248] sm:$0xf]
        %v631 = vld [vmem:[%s1 + $0x24c] sm:$0xf]
        %v632 = vld [vmem:[%s1 + $0x250] sm:$0xf]
        %v633 = vld [vmem:[%s1 + $0x254] sm:$0xf]
        %v634 = vld [vmem:[%s1 + $0x258] sm:$0xf]
        %v635 = vld [vmem:[%s1 + $0x25c] sm:$0xf]
        %v636 = vld [vmem:[%s1 + $0x260] sm:$0xf]
        %v637 = vld [vmem:[%s1 + $0x264] sm:$0xf]
        %v638 = vld [vmem:[%s1 + $0x268] sm:$0xf]
        %v639 = vld [vmem:[%s1 + $0x26c] sm:$0xf]
        %v640 = vld [vmem:[%s1 + $0x270] sm:$0xf]
        %v641 = vld [vmem:[%s1 + $0x274] sm:$0xf]
        %v642 = vld [vmem:[%s1 + $0x278] sm:$0xf]
        %v643 = vld [vmem:[%s1 + $0x27c] sm:$0xf]
        %v644 = vld [vmem:[%s1 + $0x280] sm:$0xf]
        %v645 = vld [vmem:[%s1 + $0x284] sm:$0xf]
        %v646 = vld [vmem:[%s1 + $0x288] sm:$0xf]
        %v647 = vld [vmem:[%s1 + $0x28c] sm:$0xf]
        %v648 = vld [vmem:[%s1 + $0x290] sm:$0xf]
        %v649 = vld [vmem:[%s1 + $0x294] sm:$0xf]
        %v650 = vld [vmem:[%s1 + $0x298] sm:$0xf]
        %v651 = vld [vmem:[%s1 + $0x29c] sm:$0xf]
        %v652 = vld [vmem:[%s1 + $0x2a0] sm:$0xf]
        %v653 = vld [vmem:[%s1 + $0x2a4] sm:$0xf]
        %v654 = vld [vmem:[%s1 + $0x2a8] sm:$0xf]
        %v655 = vld [vmem:[%s1 + $0x2ac] sm:$0xf]
        %v656 = vld [vmem:[%s1 + $0x2b0] sm:$0xf]
        %v657 = vld [vmem:[%s1 + $0x2b4] sm:$0xf]
        %v658 = vld [vmem:[%s1 + $0x2b8] sm:$0xf]
        %v659 = vld [vmem:[%s1 + $0x2bc] sm:$0xf]
        %v660 = vld [vmem:[%s1 + $0x2c0] sm:$0xf]
        %v661 = vld [vmem:[%s1 + $0x2c4] sm:$0xf]
        %v662 = vld [vmem:[%s1 + $0x2c8] sm:$0xf]
        %v663 = vld [vmem:[%s1 + $0x2cc] sm:$0xf]
        %v664 = vld [vmem:[%s1 + $0x2d0] sm:$0xf]
        %v665 = vld [vmem:[%s1 + $0x2d4] sm:$0xf]
        %v666 = vld [vmem:[%s1 + $0x2d8] sm:$0xf]
        %v667 = vld [vmem:[%s1 + $0x2dc] sm:$0xf]
        %v668 = vld [vmem:[%s1 + $0x2e0] sm:$0xf]
        %v669 = vld [vmem:[%s1 + $0x2e4] sm:$0xf]
        %v670 = vld [vmem:[%s1 + $0x2e8] sm:$0xf]
        %v671 = vld [vmem:[%s1 + $0x2ec] sm:$0xf]
        %v672 = vld [vmem:[%s1 + $0x2f0] sm:$0xf]
        %v673 = vld [vmem:[%s1 + $0x2f4] sm:$0xf]
        %v674 = vld [vmem:[%s1 + $0x2f8] sm:$0xf]
        %v675 = vld [vmem:[%s1 + $0x2fc] sm:$0xf]
        %v676 = vld [vmem:[%s1 + $0x300] sm:$0xf]
        %v677 = vld [vmem:[%s1 + $0x304] sm:$0xf]
        %v678 = vld [vmem:[%s1 + $0x308] sm:$0xf]
        %v679 = vld [vmem:[%s1 + $0x30c] sm:$0xf]
        %v680 = vld [vmem:[%s1 + $0x310] sm:$0xf]
        %v681 = vld [vmem:[%s1 + $0x314] sm:$0xf]
        %v682 = vld [vmem:[%s1 + $0x318] sm:$0xf]
        %v683 = vld [vmem:[%s1 + $0x31c] sm:$0xf]
        %v684 = vld [vmem:[%s2] sm:$0x1]
        %v686 = vperm.slane %v684, 0
        %v888 = vunpack.c.l.b16 %v484
        %v889 = vunpack.c.l.b16 %v485
        %v890 = vunpack.c.l.b16 %v486
        %v891 = vunpack.c.l.b16 %v487
        %v892 = vunpack.c.l.b16 %v488
        %v893 = vunpack.c.l.b16 %v489
        %v894 = vunpack.c.l.b16 %v490
        %v895 = vunpack.c.l.b16 %v491
        %v896 = vunpack.c.l.b16 %v492
        %v897 = vunpack.c.l.b16 %v493
        %v898 = vunpack.c.l.b16 %v494
        %v899 = vunpack.c.l.b16 %v495
        %v900 = vunpack.c.l.b16 %v496
        %v901 = vunpack.c.l.b16 %v497
        %v902 = vunpack.c.l.b16 %v498
        %v903 = vunpack.c.l.b16 %v499
        %v904 = vunpack.c.l.b16 %v500
        %v905 = vunpack.c.l.b16 %v501
        %v906 = vunpack.c.l.b16 %v502
        %v907 = vunpack.c.l.b16 %v503
        %v908 = vunpack.c.l.b16 %v504
        %v909 = vunpack.c.l.b16 %v505
        %v910 = vunpack.c.l.b16 %v506
        %v911 = vunpack.c.l.b16 %v507
        %v912 = vunpack.c.l.b16 %v508
        %v913 = vunpack.c.l.b16 %v509
        %v914 = vunpack.c.l.b16 %v510
        %v915 = vunpack.c.l.b16 %v511
        %v916 = vunpack.c.l.b16 %v512
        %v917 = vunpack.c.l.b16 %v513
        %v918 = vunpack.c.l.b16 %v514
        %v919 = vunpack.c.l.b16 %v515
        %v920 = vunpack.c.l.b16 %v516
        %v921 = vunpack.c.l.b16 %v517
        %v922 = vunpack.c.l.b16 %v518
        %v923 = vunpack.c.l.b16 %v519
        %v924 = vunpack.c.l.b16 %v520
        %v925 = vunpack.c.l.b16 %v521
        %v926 = vunpack.c.l.b16 %v522
        %v927 = vunpack.c.l.b16 %v523
        %v928 = vunpack.c.l.b16 %v524
        %v929 = vunpack.c.l.b16 %v525
        %v930 = vunpack.c.l.b16 %v526
        %v931 = vunpack.c.l.b16 %v527
        %v932 = vunpack.c.l.b16 %v528
        %v933 = vunpack.c.l.b16 %v529
        %v934 = vunpack.c.l.b16 %v530
        %v935 = vunpack.c.l.b16 %v531
        %v936 = vunpack.c.l.b16 %v532
        %v937 = vunpack.c.l.b16 %v533
        %v938 = vunpack.c.l.b16 %v534
        %v939 = vunpack.c.l.b16 %v535
        %v940 = vunpack.c.l.b16 %v536
        %v941 = vunpack.c.l.b16 %v537
        %v942 = vunpack.c.l.b16 %v538
        %v943 = vunpack.c.l.b16 %v539
        %v944 = vunpack.c.l.b16 %v540
        %v945 = vunpack.c.l.b16 %v541
        %v946 = vunpack.c.l.b16 %v542
        %v947 = vunpack.c.l.b16 %v543
        %v948 = vunpack.c.l.b16 %v544
        %v949 = vunpack.c.l.b16 %v545
        %v950 = vunpack.c.l.b16 %v546
        %v951 = vunpack.c.l.b16 %v547
        %v952 = vunpack.c.l.b16 %v548
        %v953 = vunpack.c.l.b16 %v549
        %v954 = vunpack.c.l.b16 %v550
        %v955 = vunpack.c.l.b16 %v551
        %v956 = vunpack.c.l.b16 %v552
        %v957 = vunpack.c.l.b16 %v553
        %v958 = vunpack.c.l.b16 %v554
        %v959 = vunpack.c.l.b16 %v555
        %v960 = vunpack.c.l.b16 %v556
        %v961 = vunpack.c.l.b16 %v557
        %v962 = vunpack.c.l.b16 %v558
        %v963 = vunpack.c.l.b16 %v559
        %v964 = vunpack.c.l.b16 %v560
        %v965 = vunpack.c.l.b16 %v561
        %v966 = vunpack.c.l.b16 %v562
        %v967 = vunpack.c.l.b16 %v563
        %v968 = vunpack.c.l.b16 %v564
        %v969 = vunpack.c.l.b16 %v565
        %v970 = vunpack.c.l.b16 %v566
        %v971 = vunpack.c.l.b16 %v567
        %v972 = vunpack.c.l.b16 %v568
        %v973 = vunpack.c.l.b16 %v569
        %v974 = vunpack.c.l.b16 %v570
        %v975 = vunpack.c.l.b16 %v571
        %v976 = vunpack.c.l.b16 %v572
        %v977 = vunpack.c.l.b16 %v573
        %v978 = vunpack.c.l.b16 %v574
        %v979 = vunpack.c.l.b16 %v575
        %v980 = vunpack.c.l.b16 %v576
        %v981 = vunpack.c.l.b16 %v577
        %v982 = vunpack.c.l.b16 %v578
        %v983 = vunpack.c.l.b16 %v579
        %v984 = vunpack.c.l.b16 %v580
        %v985 = vunpack.c.l.b16 %v581
        %v986 = vunpack.c.l.b16 %v582
        %v987 = vunpack.c.l.b16 %v583
        %v988 = vunpack.c.l.b16 %v584
        %v989 = vunpack.c.l.b16 %v585
        %v990 = vunpack.c.l.b16 %v586
        %v991 = vunpack.c.l.b16 %v587
        %v992 = vunpack.c.l.b16 %v588
        %v993 = vunpack.c.l.b16 %v589
        %v994 = vunpack.c.l.b16 %v590
        %v995 = vunpack.c.l.b16 %v591
        %v996 = vunpack.c.l.b16 %v592
        %v997 = vunpack.c.l.b16 %v593
        %v998 = vunpack.c.l.b16 %v594
        %v999 = vunpack.c.l.b16 %v595
        %v1000 = vunpack.c.l.b16 %v596
        %v1001 = vunpack.c.l.b16 %v597
        %v1002 = vunpack.c.l.b16 %v598
        %v1003 = vunpack.c.l.b16 %v599
        %v1004 = vunpack.c.l.b16 %v600
        %v1005 = vunpack.c.l.b16 %v601
        %v1006 = vunpack.c.l.b16 %v602
        %v1007 = vunpack.c.l.b16 %v603
        %v1008 = vunpack.c.l.b16 %v604
        %v1009 = vunpack.c.l.b16 %v605
        %v1010 = vunpack.c.l.b16 %v606
        %v1011 = vunpack.c.l.b16 %v607
        %v1012 = vunpack.c.l.b16 %v608
        %v1013 = vunpack.c.l.b16 %v609
        %v1014 = vunpack.c.l.b16 %v610
        %v1015 = vunpack.c.l.b16 %v611
        %v1016 = vunpack.c.l.b16 %v612
        %v1017 = vunpack.c.l.b16 %v613
        %v1018 = vunpack.c.l.b16 %v614
        %v1019 = vunpack.c.l.b16 %v615
        %v1020 = vunpack.c.l.b16 %v616
        %v1021 = vunpack.c.l.b16 %v617
        %v1022 = vunpack.c.l.b16 %v618
        %v1023 = vunpack.c.l.b16 %v619
        %v1024 = vunpack.c.l.b16 %v620
        %v1025 = vunpack.c.l.b16 %v621
        %v1026 = vunpack.c.l.b16 %v622
        %v1027 = vunpack.c.l.b16 %v623
        %v1028 = vunpack.c.l.b16 %v624
        %v1029 = vunpack.c.l.b16 %v625
        %v1030 = vunpack.c.l.b16 %v626
        %v1031 = vunpack.c.l.b16 %v627
        %v1032 = vunpack.c.l.b16 %v628
        %v1033 = vunpack.c.l.b16 %v629
        %v1034 = vunpack.c.l.b16 %v630
        %v1035 = vunpack.c.l.b16 %v631
        %v1036 = vunpack.c.l.b16 %v632
        %v1037 = vunpack.c.l.b16 %v633
        %v1038 = vunpack.c.l.b16 %v634
        %v1039 = vunpack.c.l.b16 %v635
        %v1040 = vunpack.c.l.b16 %v636
        %v1041 = vunpack.c.l.b16 %v637
        %v1042 = vunpack.c.l.b16 %v638
        %v1043 = vunpack.c.l.b16 %v639
        %v1044 = vunpack.c.l.b16 %v640
        %v1045 = vunpack.c.l.b16 %v641
        %v1046 = vunpack.c.l.b16 %v642
        %v1047 = vunpack.c.l.b16 %v643
        %v1048 = vunpack.c.l.b16 %v644
        %v1049 = vunpack.c.l.b16 %v645
        %v1050 = vunpack.c.l.b16 %v646
        %v1051 = vunpack.c.l.b16 %v647
        %v1052 = vunpack.c.l.b16 %v648
        %v1053 = vunpack.c.l.b16 %v649
        %v1054 = vunpack.c.l.b16 %v650
        %v1055 = vunpack.c.l.b16 %v651
        %v1056 = vunpack.c.l.b16 %v652
        %v1057 = vunpack.c.l.b16 %v653
        %v1058 = vunpack.c.l.b16 %v654
        %v1059 = vunpack.c.l.b16 %v655
        %v1060 = vunpack.c.l.b16 %v656
        %v1061 = vunpack.c.l.b16 %v657
        %v1062 = vunpack.c.l.b16 %v658
        %v1063 = vunpack.c.l.b16 %v659
        %v1064 = vunpack.c.l.b16 %v660
        %v1065 = vunpack.c.l.b16 %v661
        %v1066 = vunpack.c.l.b16 %v662
        %v1067 = vunpack.c.l.b16 %v663
        %v1068 = vunpack.c.l.b16 %v664
        %v1069 = vunpack.c.l.b16 %v665
        %v1070 = vunpack.c.l.b16 %v666
        %v1071 = vunpack.c.l.b16 %v667
        %v1072 = vunpack.c.l.b16 %v668
        %v1073 = vunpack.c.l.b16 %v669
        %v1074 = vunpack.c.l.b16 %v670
        %v1075 = vunpack.c.l.b16 %v671
        %v1076 = vunpack.c.l.b16 %v672
        %v1077 = vunpack.c.l.b16 %v673
        %v1078 = vunpack.c.l.b16 %v674
        %v1079 = vunpack.c.l.b16 %v675
        %v1080 = vunpack.c.l.b16 %v676
        %v1081 = vunpack.c.l.b16 %v677
        %v1082 = vunpack.c.l.b16 %v678
        %v1083 = vunpack.c.l.b16 %v679
        %v1084 = vunpack.c.l.b16 %v680
        %v1085 = vunpack.c.l.b16 %v681
        %v1086 = vunpack.c.l.b16 %v682
        %v1087 = vunpack.c.l.b16 %v683
        %v1088 = vpack.c.b16 %v889, %v888
        %v1089 = vpack.c.b16 %v891, %v890
        %v1090 = vpack.c.b16 %v893, %v892
        %v1091 = vpack.c.b16 %v895, %v894
        %v1092 = vpack.c.b16 %v897, %v896
        %v1093 = vpack.c.b16 %v899, %v898
        %v1094 = vpack.c.b16 %v901, %v900
        %v1095 = vpack.c.b16 %v903, %v902
        %v1096 = vpack.c.b16 %v905, %v904
        %v1097 = vpack.c.b16 %v907, %v906
        %v1098 = vpack.c.b16 %v909, %v908
        %v1099 = vpack.c.b16 %v911, %v910
        %v1100 = vpack.c.b16 %v913, %v912
        %v1101 = vpack.c.b16 %v915, %v914
        %v1102 = vpack.c.b16 %v917, %v916
        %v1103 = vpack.c.b16 %v919, %v918
        %v1104 = vpack.c.b16 %v921, %v920
        %v1105 = vpack.c.b16 %v923, %v922
        %v1106 = vpack.c.b16 %v925, %v924
        %v1107 = vpack.c.b16 %v927, %v926
        %v1108 = vpack.c.b16 %v929, %v928
        %v1109 = vpack.c.b16 %v931, %v930
        %v1110 = vpack.c.b16 %v933, %v932
        %v1111 = vpack.c.b16 %v935, %v934
        %v1112 = vpack.c.b16 %v937, %v936
        %v1113 = vpack.c.b16 %v939, %v938
        %v1114 = vpack.c.b16 %v941, %v940
        %v1115 = vpack.c.b16 %v943, %v942
        %v1116 = vpack.c.b16 %v945, %v944
        %v1117 = vpack.c.b16 %v947, %v946
        %v1118 = vpack.c.b16 %v949, %v948
        %v1119 = vpack.c.b16 %v951, %v950
        %v1120 = vpack.c.b16 %v953, %v952
        %v1121 = vpack.c.b16 %v955, %v954
        %v1122 = vpack.c.b16 %v957, %v956
        %v1123 = vpack.c.b16 %v959, %v958
        %v1124 = vpack.c.b16 %v961, %v960
        %v1125 = vpack.c.b16 %v963, %v962
        %v1126 = vpack.c.b16 %v965, %v964
        %v1127 = vpack.c.b16 %v967, %v966
        %v1128 = vpack.c.b16 %v969, %v968
        %v1129 = vpack.c.b16 %v971, %v970
        %v1130 = vpack.c.b16 %v973, %v972
        %v1131 = vpack.c.b16 %v975, %v974
        %v1132 = vpack.c.b16 %v977, %v976
        %v1133 = vpack.c.b16 %v979, %v978
        %v1134 = vpack.c.b16 %v981, %v980
        %v1135 = vpack.c.b16 %v983, %v982
        %v1136 = vpack.c.b16 %v985, %v984
        %v1137 = vpack.c.b16 %v987, %v986
        %v1138 = vpack.c.b16 %v989, %v988
        %v1139 = vpack.c.b16 %v991, %v990
        %v1140 = vpack.c.b16 %v993, %v992
        %v1141 = vpack.c.b16 %v995, %v994
        %v1142 = vpack.c.b16 %v997, %v996
        %v1143 = vpack.c.b16 %v999, %v998
        %v1144 = vpack.c.b16 %v1001, %v1000
        %v1145 = vpack.c.b16 %v1003, %v1002
        %v1146 = vpack.c.b16 %v1005, %v1004
        %v1147 = vpack.c.b16 %v1007, %v1006
        %v1148 = vpack.c.b16 %v1009, %v1008
        %v1149 = vpack.c.b16 %v1011, %v1010
        %v1150 = vpack.c.b16 %v1013, %v1012
        %v1151 = vpack.c.b16 %v1015, %v1014
        %v1152 = vpack.c.b16 %v1017, %v1016
        %v1153 = vpack.c.b16 %v1019, %v1018
        %v1154 = vpack.c.b16 %v1021, %v1020
        %v1155 = vpack.c.b16 %v1023, %v1022
        %v1156 = vpack.c.b16 %v1025, %v1024
        %v1157 = vpack.c.b16 %v1027, %v1026
        %v1158 = vpack.c.b16 %v1029, %v1028
        %v1159 = vpack.c.b16 %v1031, %v1030
        %v1160 = vpack.c.b16 %v1033, %v1032
        %v1161 = vpack.c.b16 %v1035, %v1034
        %v1162 = vpack.c.b16 %v1037, %v1036
        %v1163 = vpack.c.b16 %v1039, %v1038
        %v1164 = vpack.c.b16 %v1041, %v1040
        %v1165 = vpack.c.b16 %v1043, %v1042
        %v1166 = vpack.c.b16 %v1045, %v1044
        %v1167 = vpack.c.b16 %v1047, %v1046
        %v1168 = vpack.c.b16 %v1049, %v1048
        %v1169 = vpack.c.b16 %v1051, %v1050
        %v1170 = vpack.c.b16 %v1053, %v1052
        %v1171 = vpack.c.b16 %v1055, %v1054
        %v1172 = vpack.c.b16 %v1057, %v1056
        %v1173 = vpack.c.b16 %v1059, %v1058
        %v1174 = vpack.c.b16 %v1061, %v1060
        %v1175 = vpack.c.b16 %v1063, %v1062
        %v1176 = vpack.c.b16 %v1065, %v1064
        %v1177 = vpack.c.b16 %v1067, %v1066
        %v1178 = vpack.c.b16 %v1069, %v1068
        %v1179 = vpack.c.b16 %v1071, %v1070
        %v1180 = vpack.c.b16 %v1073, %v1072
        %v1181 = vpack.c.b16 %v1075, %v1074
        %v1182 = vpack.c.b16 %v1077, %v1076
        %v1183 = vpack.c.b16 %v1079, %v1078
        %v1184 = vpack.c.b16 %v1081, %v1080
        %v1185 = vpack.c.b16 %v1083, %v1082
        %v1186 = vpack.c.b16 %v1085, %v1084
        %v1187 = vpack.c.b16 %v1087, %v1086
        %vm1288 = vcmask 523264
        %v1290 = vsel %vm1288, %v483, 0
        %1292 = vmatpush.bf16.msra.mxu0 %v1095
        %1293 = vmatpush.bf16.msra.mxu0 %v1094
        %1294 = vmatpush.bf16.msra.mxu0 %v1093
        %1295 = vmatpush.bf16.msra.mxu0 %v1092
        %1296 = vmatpush.bf16.msra.mxu0 %v1091
        %1297 = vmatpush.bf16.msra.mxu0 %v1090
        %1298 = vmatpush.bf16.msra.mxu0 %v1089
        %1299 = vmatpush.bf16.msra.mxu0 %v1088
        %1300 = vmatmul.bf16.gmra.mxu0 %v471
        %v1301 = vpop.f32.mrf.mxu0
        %v1302 = vadd.f32 %v686, %v1301
        %v1303 = vpop.f32.mrf.mxu0
        %v1304 = vadd.f32 %v686, %v1303
        %1305 = vdwg.mxu0
        %1306 = vmatpush.bf16.msra.mxu0 %v1103
        %1307 = vmatpush.bf16.msra.mxu0 %v1102
        %1308 = vmatpush.bf16.msra.mxu0 %v1101
        %1309 = vmatpush.bf16.msra.mxu0 %v1100
        %1310 = vmatpush.bf16.msra.mxu0 %v1099
        %1311 = vmatpush.bf16.msra.mxu0 %v1098
        %1312 = vmatpush.bf16.msra.mxu0 %v1097
        %1313 = vmatpush.bf16.msra.mxu0 %v1096
        %1314 = vmatmul.bf16.gmra.mxu0 %v472
        %v1315 = vpop.f32.mrf.mxu0
        %v1316 = vadd.f32 %v1302, %v1315
        %v1317 = vpop.f32.mrf.mxu0
        %v1318 = vadd.f32 %v1304, %v1317
        %1319 = vdwg.mxu0
        %1320 = vmatpush.bf16.msra.mxu0 %v1111
        %1321 = vmatpush.bf16.msra.mxu0 %v1110
        %1322 = vmatpush.bf16.msra.mxu0 %v1109
        %1323 = vmatpush.bf16.msra.mxu0 %v1108
        %1324 = vmatpush.bf16.msra.mxu0 %v1107
        %1325 = vmatpush.bf16.msra.mxu0 %v1106
        %1326 = vmatpush.bf16.msra.mxu0 %v1105
        %1327 = vmatpush.bf16.msra.mxu0 %v1104
        %1328 = vmatmul.bf16.gmra.mxu0 %v473
        %v1329 = vpop.f32.mrf.mxu0
        %v1330 = vadd.f32 %v1316, %v1329
        %v1331 = vpop.f32.mrf.mxu0
        %v1332 = vadd.f32 %v1318, %v1331
        %1333 = vdwg.mxu0
        %1334 = vmatpush.bf16.msra.mxu0 %v1119
        %1335 = vmatpush.bf16.msra.mxu0 %v1118
        %1336 = vmatpush.bf16.msra.mxu0 %v1117
        %1337 = vmatpush.bf16.msra.mxu0 %v1116
        %1338 = vmatpush.bf16.msra.mxu0 %v1115
        %1339 = vmatpush.bf16.msra.mxu0 %v1114
        %1340 = vmatpush.bf16.msra.mxu0 %v1113
        %1341 = vmatpush.bf16.msra.mxu0 %v1112
        %1342 = vmatmul.bf16.gmra.mxu0 %v474
        %v1343 = vpop.f32.mrf.mxu0
        %v1344 = vadd.f32 %v1330, %v1343
        %v1345 = vpop.f32.mrf.mxu0
        %v1346 = vadd.f32 %v1332, %v1345
        %1347 = vdwg.mxu0
        %1348 = vmatpush.bf16.msra.mxu0 %v1127
        %1349 = vmatpush.bf16.msra.mxu0 %v1126
        %1350 = vmatpush.bf16.msra.mxu0 %v1125
        %1351 = vmatpush.bf16.msra.mxu0 %v1124
        %1352 = vmatpush.bf16.msra.mxu0 %v1123
        %1353 = vmatpush.bf16.msra.mxu0 %v1122
        %1354 = vmatpush.bf16.msra.mxu0 %v1121
        %1355 = vmatpush.bf16.msra.mxu0 %v1120
        %1356 = vmatmul.bf16.gmra.mxu0 %v475
        %v1357 = vpop.f32.mrf.mxu0
        %v1358 = vadd.f32 %v1344, %v1357
        %v1359 = vpop.f32.mrf.mxu0
        %v1360 = vadd.f32 %v1346, %v1359
        %1361 = vdwg.mxu0
        %1362 = vmatpush.bf16.msra.mxu0 %v1135
        %1363 = vmatpush.bf16.msra.mxu0 %v1134
        %1364 = vmatpush.bf16.msra.mxu0 %v1133
        %1365 = vmatpush.bf16.msra.mxu0 %v1132
        %1366 = vmatpush.bf16.msra.mxu0 %v1131
        %1367 = vmatpush.bf16.msra.mxu0 %v1130
        %1368 = vmatpush.bf16.msra.mxu0 %v1129
        %1369 = vmatpush.bf16.msra.mxu0 %v1128
        %1370 = vmatmul.bf16.gmra.mxu0 %v476
        %v1371 = vpop.f32.mrf.mxu0
        %v1372 = vadd.f32 %v1358, %v1371
        %v1373 = vpop.f32.mrf.mxu0
        %v1374 = vadd.f32 %v1360, %v1373
        %1375 = vdwg.mxu0
        %1376 = vmatpush.bf16.msra.mxu0 %v1143
        %1377 = vmatpush.bf16.msra.mxu0 %v1142
        %1378 = vmatpush.bf16.msra.mxu0 %v1141
        %1379 = vmatpush.bf16.msra.mxu0 %v1140
        %1380 = vmatpush.bf16.msra.mxu0 %v1139
        %1381 = vmatpush.bf16.msra.mxu0 %v1138
        %1382 = vmatpush.bf16.msra.mxu0 %v1137
        %1383 = vmatpush.bf16.msra.mxu0 %v1136
        %1384 = vmatmul.bf16.gmra.mxu0 %v477
        %v1385 = vpop.f32.mrf.mxu0
        %v1386 = vadd.f32 %v1372, %v1385
        %v1387 = vpop.f32.mrf.mxu0
        %v1388 = vadd.f32 %v1374, %v1387
        %1389 = vdwg.mxu0
        %1390 = vmatpush.bf16.msra.mxu0 %v1151
        %1391 = vmatpush.bf16.msra.mxu0 %v1150
        %1392 = vmatpush.bf16.msra.mxu0 %v1149
        %1393 = vmatpush.bf16.msra.mxu0 %v1148
        %1394 = vmatpush.bf16.msra.mxu0 %v1147
        %1395 = vmatpush.bf16.msra.mxu0 %v1146
        %1396 = vmatpush.bf16.msra.mxu0 %v1145
        %1397 = vmatpush.bf16.msra.mxu0 %v1144
        %1398 = vmatmul.bf16.gmra.mxu0 %v478
        %v1399 = vpop.f32.mrf.mxu0
        %v1400 = vadd.f32 %v1386, %v1399
        %v1401 = vpop.f32.mrf.mxu0
        %v1402 = vadd.f32 %v1388, %v1401
        %1403 = vdwg.mxu0
        %1404 = vmatpush.bf16.msra.mxu0 %v1159
        %1405 = vmatpush.bf16.msra.mxu0 %v1158
        %1406 = vmatpush.bf16.msra.mxu0 %v1157
        %1407 = vmatpush.bf16.msra.mxu0 %v1156
        %1408 = vmatpush.bf16.msra.mxu0 %v1155
        %1409 = vmatpush.bf16.msra.mxu0 %v1154
        %1410 = vmatpush.bf16.msra.mxu0 %v1153
        %1411 = vmatpush.bf16.msra.mxu0 %v1152
        %1412 = vmatmul.bf16.gmra.mxu0 %v479
        %v1413 = vpop.f32.mrf.mxu0
        %v1414 = vadd.f32 %v1400, %v1413
        %v1415 = vpop.f32.mrf.mxu0
        %v1416 = vadd.f32 %v1402, %v1415
        %1417 = vdwg.mxu0
        %1418 = vmatpush.bf16.msra.mxu0 %v1167
        %1419 = vmatpush.bf16.msra.mxu0 %v1166
        %1420 = vmatpush.bf16.msra.mxu0 %v1165
        %1421 = vmatpush.bf16.msra.mxu0 %v1164
        %1422 = vmatpush.bf16.msra.mxu0 %v1163
        %1423 = vmatpush.bf16.msra.mxu0 %v1162
        %1424 = vmatpush.bf16.msra.mxu0 %v1161
        %1425 = vmatpush.bf16.msra.mxu0 %v1160
        %1426 = vmatmul.bf16.gmra.mxu0 %v480
        %v1427 = vpop.f32.mrf.mxu0
        %v1428 = vadd.f32 %v1414, %v1427
        %v1429 = vpop.f32.mrf.mxu0
        %v1430 = vadd.f32 %v1416, %v1429
        %1431 = vdwg.mxu0
        %1432 = vmatpush.bf16.msra.mxu0 %v1175
        %1433 = vmatpush.bf16.msra.mxu0 %v1174
        %1434 = vmatpush.bf16.msra.mxu0 %v1173
        %1435 = vmatpush.bf16.msra.mxu0 %v1172
        %1436 = vmatpush.bf16.msra.mxu0 %v1171
        %1437 = vmatpush.bf16.msra.mxu0 %v1170
        %1438 = vmatpush.bf16.msra.mxu0 %v1169
        %1439 = vmatpush.bf16.msra.mxu0 %v1168
        %1440 = vmatmul.bf16.gmra.mxu0 %v481
        %v1441 = vpop.f32.mrf.mxu0
        %v1442 = vadd.f32 %v1428, %v1441
        %v1443 = vpop.f32.mrf.mxu0
        %v1444 = vadd.f32 %v1430, %v1443
        %1445 = vdwg.mxu0
        %1446 = vmatpush.bf16.msra.mxu0 %v1183
        %1447 = vmatpush.bf16.msra.mxu0 %v1182
        %1448 = vmatpush.bf16.msra.mxu0 %v1181
        %1449 = vmatpush.bf16.msra.mxu0 %v1180
        %1450 = vmatpush.bf16.msra.mxu0 %v1179
        %1451 = vmatpush.bf16.msra.mxu0 %v1178
        %1452 = vmatpush.bf16.msra.mxu0 %v1177
        %1453 = vmatpush.bf16.msra.mxu0 %v1176
        %1454 = vmatmul.bf16.gmra.mxu0 %v482
        %v1455 = vpop.f32.mrf.mxu0
        %v1456 = vadd.f32 %v1442, %v1455
        %v1457 = vpop.f32.mrf.mxu0
        %v1458 = vadd.f32 %v1444, %v1457
        %1459 = vdwg.mxu0
        %1460 = vmatpush.bf16.msra.mxu0 0
        %1461 = vmatpush.bf16.msra.mxu0 0
        %1462 = vmatpush.bf16.msra.mxu0 0
        %1463 = vmatpush.bf16.msra.mxu0 0
        %1464 = vmatpush.bf16.msra.mxu0 %v1187
        %1465 = vmatpush.bf16.msra.mxu0 %v1186
        %1466 = vmatpush.bf16.msra.mxu0 %v1185
        %1467 = vmatpush.bf16.msra.mxu0 %v1184
        %1468 = vmatmul.bf16.gmra.mxu0 %v1290
        %v1469 = vpop.f32.mrf.mxu0
        %v1470 = vadd.f32 %v1456, %v1469
        %v1471 = vpop.f32.mrf.mxu0
        %v1472 = vadd.f32 %v1458, %v1471
        %1473 = vdwg.mxu0
        %v1474 = vpack.c.bf16 %v1470, %v1470
        %v1475 = vpack.c.bf16 %v1472, %v1472
        %1476 = vst [vmem:[%s259] sm:$0xf] %v1474
        %1477 = vst [vmem:[%s259 + $0x4] sm:$0xf] %v1475
        %s1478 = smul.u32 %s18, 16
        %v1479 = vlaneseq
        %v1480 = vshrl.u32 %v1479, 7
        %v1481 = vadd.s32 %v1480, 8
        %v1482 = vstv %s1478
        %v1483 = vadd.s32 %v1482, %v1480
        %v1484 = vadd.s32 %v1482, %v1481
        %vm1485 = vcmp.lt.s32.totalorder %v1483, 18
        %vm1486 = vcmp.lt.s32.totalorder %v1484, 18
        %v1487 = vsel %vm1485, 1, 0
        %v1488 = vsel %vm1486, 1, 0
        %vm1489 = vcmp.eq.s32.totalorder %v1487, 1
        %vm1490 = vcmp.eq.s32.totalorder %v1488, 1
        %v1491 = vsel %vm1489, %v1470, 0.0
        %v1492 = vsel %vm1490, %v1472, 0.0
        %v1493 = vadd.f32 %v1491, %v1492
        %v1494 = vrot.slane %v1493, 4
        %v1495 = vadd.f32 %v1493, %v1494
        %v1496 = vrot.slane %v1495, 2
        %v1497 = vadd.f32 %v1495, %v1496
        %v1498 = vrot.slane %v1497, 1
        %v1499 = vadd.f32 %v1497, %v1498
        %v1500 = vmul.f32 %v1491, %v1491
        %v1501 = vmul.f32 %v1492, %v1492
        %v1502 = vadd.f32 %v1500, %v1501
        %v1503 = vrot.slane %v1502, 4
        %v1504 = vadd.f32 %v1502, %v1503
        %v1505 = vrot.slane %v1504, 2
        %v1506 = vadd.f32 %v1504, %v1505
        %v1507 = vrot.slane %v1506, 1
        %v1508 = vadd.f32 %v1506, %v1507
        %v1511 = vrot.slane %v1508, 7
        %vm1512 = vcmask 1040384
        %v1513 = vsel %vm1512, %v1499, %v1511
        %v1515 = vlaneseq
        %vm1516 = vcmp.ge.s32.totalorder %v1515, 0
        %vm1517 = vcmp.lt.s32.totalorder %v1515, 256
        %vm1518 = vmand %vm1516, %vm1517
        %1519 = vst.msk [vmem:[%s291] sm:$0x3] %vm1518, %v1513
        %s1520 = sand.u32 %s136, 1
        %s1521 = sand.u32 %s136, 1
        %s1522 = smul.addr %s1521, 8
        %s1523 = scalar_lea.vmem [#allocation2], %s1522
        %p1524 = scmp.lt.s32.totalorder %s18, 1
        %s1525 = scalar_select %p1524, %s18, 1
        %s1526 = smul.addr %s1525, 2
        %s1527 = scalar_lea.vmem %s6, %s1526
        // Predicated region
        $region41: #{svhn_feature_extractor.8} parent=39 // pred_check
          %p1528 = pneg %p146
        $region42: #{svhn_feature_extractor.8} parent=39 // pred_check_branch
          %1530 = sbr.rel (%p1528) target = $region44
        $region43: #{svhn_feature_extractor.8} parent=39 // pred_region
          %s1531 = smul.u32 2, %s18
          %s1532 = ssub.s32 3, %s1531
          %p1533 = scmp.lt.s32.totalorder %s1532, 2
          %s1534 = scalar_select %p1533, %s1532, 2
          %s1535 = smul.u32 4, %s1534
          %p1536 = scmp.ne.s32.totalorder 0, %s1535
          %s1537 = smul.addr %s1531, 4
          %s1538 = scalar_lea.vmem %s5, %s1537
          // Predicated region
          $region45: #{svhn_feature_extractor.8} parent=43 // pred_check
            %p1539 = pneg %p1536
          $region46: #{svhn_feature_extractor.8} parent=43 // pred_check_branch
            %1541 = sbr.rel (%p1539) target = $region48
          $region47: #{svhn_feature_extractor.8} parent=43 // pred_region
            // Predicated region
            $region49: #{svhn_feature_extractor.8} parent=47 // pred_check
              _
            $region50: #{svhn_feature_extractor.8} parent=47 // pred_check_branch
              %1543 = sbr.rel target = $region52
            $region51: #{svhn_feature_extractor.8} parent=47 // pred_region
              // Predicated region
              $region71: #{svhn_feature_extractor.8} parent=51 // pred_check
                _
              $region72: #{svhn_feature_extractor.8} parent=51 // pred_check_branch
                %1595 = sbr.rel (0) target = $region74
              $region73: #{svhn_feature_extractor.8} parent=51 // pred_region
                %s1597 = ssub.s32 16, 1
                %s1598 = sshrl.u32 %s1534, 1
                // While loop
                $region75: #{svhn_feature_extractor.8} parent=73 // loop_pre_header
                  _
                $region76: #{svhn_feature_extractor.8} parent=73 // loop_header
                  %s1600 = sphi 0, %s1602
                  %p1601 = scmp.ge.s32.totalorder %s1600, %s1598
                  %s1605 = sphi 0, %s1614
                  %s1606 = sphi %s1523, %s1617
                  %s1607 = sphi %s1538, %s1618
                $region77: #{svhn_feature_extractor.8} parent=73 // loop_header_branch
                  %1604 = sbr.rel (%p1601) target = $region81
                $region78: #{svhn_feature_extractor.8} parent=73 // loop_body
                  %v1608 = vld [vmem:[%s1606] sm:%s1597]
                  %1609 = vst [vmem:[%s1607] sm:%s1597] %v1608
                  %v1610 = vld [vmem:[%s1606 + $0x4] sm:%s1597]
                  %1611 = vst [vmem:[%s1607 + $0x4] sm:%s1597] %v1610
                  %s1612 = sadd.s32 1, %s1605
                  %p1613 = scmp.ge.s32.totalorder %s1612, %s1598
                  %s1614 = scalar_select %p1613, 0, %s1612
                  %s1615 = smul.u32 %s1614, 8
                  %s1616 = smul.u32 %s1614, 8
                  %s1617 = scalar_lea.vmem %s1523, %s1615 [#allocation2]
                  %s1618 = scalar_lea.vmem %s1538, %s1616
                $region79: #{svhn_feature_extractor.8} parent=73 // loop_footer
                  %s1602 = sadd.s32 %s1600, 1
                $region80: #{svhn_feature_extractor.8} parent=73 // loop_footer_branch
                  %1599 = sbr.rel target = $region76
                $region81: #{svhn_feature_extractor.8} parent=73 // loop_exit
                  _
                %s1619 = sshrl.u32 %s1534, 1
                %s1620 = sand.u32 %s1534, 1
                %s1621 = smul.u32 %s1619, 2
                %s1622 = smul.u32 4, %s1621
                %s1623 = scalar_lea.vmem %s1523, %s1622 [#allocation2]
                %s1624 = smul.u32 4, %s1621
                %s1625 = scalar_lea.vmem %s1538, %s1624
                // While loop
                $region82: #{svhn_feature_extractor.8} parent=73 // loop_pre_header
                  _
                $region83: #{svhn_feature_extractor.8} parent=73 // loop_header
                  %s1627 = sphi 0, %s1629
                  %p1628 = scmp.ge.s32.totalorder %s1627, %s1620
                  %s1632 = sphi 0, %s1639
                  %s1633 = sphi %s1623, %s1642
                  %s1634 = sphi %s1625, %s1643
                $region84: #{svhn_feature_extractor.8} parent=73 // loop_header_branch
                  %1631 = sbr.rel (%p1628) target = $region88
                $region85: #{svhn_feature_extractor.8} parent=73 // loop_body
                  %v1635 = vld [vmem:[%s1633] sm:%s1597]
                  %1636 = vst [vmem:[%s1634] sm:%s1597] %v1635
                  %s1637 = sadd.s32 1, %s1632
                  %p1638 = scmp.ge.s32.totalorder %s1637, %s1620
                  %s1639 = scalar_select %p1638, 0, %s1637
                  %s1640 = smul.u32 %s1639, 4
                  %s1641 = smul.u32 %s1639, 4
                  %s1642 = scalar_lea.vmem %s1623, %s1640 [#allocation2]
                  %s1643 = scalar_lea.vmem %s1625, %s1641
                $region86: #{svhn_feature_extractor.8} parent=73 // loop_footer
                  %s1629 = sadd.s32 %s1627, 1
                $region87: #{svhn_feature_extractor.8} parent=73 // loop_footer_branch
                  %1626 = sbr.rel target = $region83
                $region88: #{svhn_feature_extractor.8} parent=73 // loop_exit
                  _
              $region74: #{svhn_feature_extractor.8} parent=51 // pred_fallthru
                _
            $region52: #{svhn_feature_extractor.8} parent=47 // pred_fallthru
              _
            // Predicated region
            $region53: #{svhn_feature_extractor.8} parent=47 // pred_check
              _
            $region54: #{svhn_feature_extractor.8} parent=47 // pred_check_branch
              %1545 = sbr.rel (0) target = $region56
            $region55: #{svhn_feature_extractor.8} parent=47 // pred_region
              %s1547 = ssub.s32 16, 1
              %s1548 = sshrl.u32 %s1534, 1
              // While loop
              $region57: #{svhn_feature_extractor.8} parent=55 // loop_pre_header
                _
              $region58: #{svhn_feature_extractor.8} parent=55 // loop_header
                %s1550 = sphi 0, %s1552
                %p1551 = scmp.ge.s32.totalorder %s1550, %s1548
                %s1555 = sphi 0, %s1564
                %s1556 = sphi %s1523, %s1567
                %s1557 = sphi %s1538, %s1568
              $region59: #{svhn_feature_extractor.8} parent=55 // loop_header_branch
                %1554 = sbr.rel (%p1551) target = $region63
              $region60: #{svhn_feature_extractor.8} parent=55 // loop_body
                %v1558 = vld [vmem:[%s1556] sm:%s1547]
                %1559 = vst [vmem:[%s1557] sm:%s1547] %v1558
                %v1560 = vld [vmem:[%s1556 + $0x4] sm:%s1547]
                %1561 = vst [vmem:[%s1557 + $0x4] sm:%s1547] %v1560
                %s1562 = sadd.s32 1, %s1555
                %p1563 = scmp.ge.s32.totalorder %s1562, %s1548
                %s1564 = scalar_select %p1563, 0, %s1562
                %s1565 = smul.u32 %s1564, 8
                %s1566 = smul.u32 %s1564, 8
                %s1567 = scalar_lea.vmem %s1523, %s1565 [#allocation2]
                %s1568 = scalar_lea.vmem %s1538, %s1566
              $region61: #{svhn_feature_extractor.8} parent=55 // loop_footer
                %s1552 = sadd.s32 %s1550, 1
              $region62: #{svhn_feature_extractor.8} parent=55 // loop_footer_branch
                %1549 = sbr.rel target = $region58
              $region63: #{svhn_feature_extractor.8} parent=55 // loop_exit
                _
              %s1569 = sshrl.u32 %s1534, 1
              %s1570 = sand.u32 %s1534, 1
              %s1571 = smul.u32 %s1569, 2
              %s1572 = smul.u32 4, %s1571
              %s1573 = scalar_lea.vmem %s1523, %s1572 [#allocation2]
              %s1574 = smul.u32 4, %s1571
              %s1575 = scalar_lea.vmem %s1538, %s1574
              // While loop
              $region64: #{svhn_feature_extractor.8} parent=55 // loop_pre_header
                _
              $region65: #{svhn_feature_extractor.8} parent=55 // loop_header
                %s1577 = sphi 0, %s1579
                %p1578 = scmp.ge.s32.totalorder %s1577, %s1570
                %s1582 = sphi 0, %s1589
                %s1583 = sphi %s1573, %s1592
                %s1584 = sphi %s1575, %s1593
              $region66: #{svhn_feature_extractor.8} parent=55 // loop_header_branch
                %1581 = sbr.rel (%p1578) target = $region70
              $region67: #{svhn_feature_extractor.8} parent=55 // loop_body
                %v1585 = vld [vmem:[%s1583] sm:%s1547]
                %1586 = vst [vmem:[%s1584] sm:%s1547] %v1585
                %s1587 = sadd.s32 1, %s1582
                %p1588 = scmp.ge.s32.totalorder %s1587, %s1570
                %s1589 = scalar_select %p1588, 0, %s1587
                %s1590 = smul.u32 %s1589, 4
                %s1591 = smul.u32 %s1589, 4
                %s1592 = scalar_lea.vmem %s1573, %s1590 [#allocation2]
                %s1593 = scalar_lea.vmem %s1575, %s1591
              $region68: #{svhn_feature_extractor.8} parent=55 // loop_footer
                %s1579 = sadd.s32 %s1577, 1
              $region69: #{svhn_feature_extractor.8} parent=55 // loop_footer_branch
                %1576 = sbr.rel target = $region65
              $region70: #{svhn_feature_extractor.8} parent=55 // loop_exit
                _
            $region56: #{svhn_feature_extractor.8} parent=47 // pred_fallthru
              _
          $region48: #{svhn_feature_extractor.8} parent=43 // pred_fallthru
            _
          %1644 = vnop
        $region44: #{svhn_feature_extractor.8} parent=39 // pred_fallthru
          _
        // Predicated region
        $region89: #{svhn_feature_extractor.8} parent=39 // pred_check
          %p1645 = pneg %p172
        $region90: #{svhn_feature_extractor.8} parent=39 // pred_check_branch
          %1647 = sbr.rel (%p1645) target = $region92
        $region91: #{svhn_feature_extractor.8} parent=39 // pred_region
          _
        $region92: #{svhn_feature_extractor.8} parent=39 // pred_fallthru
          _
      $region40: #{svhn_feature_extractor.8} parent=5 // pred_fallthru
        _
      %p1648 = scmp.le.s32.totalorder 2, %s13
      // Predicated region
      $region93: #{svhn_feature_extractor.8} parent=5 // pred_check
        %p1649 = pneg %p1648
      $region94: #{svhn_feature_extractor.8} parent=5 // pred_check_branch
        %1651 = sbr.rel (%p1649) target = $region96
      $region95: #{svhn_feature_extractor.8} parent=5 // pred_region
        %s1652 = ssub.s32 %s13, 2
        // Predicated region
        $region97: #{svhn_feature_extractor.8} parent=95 // pred_check
          %p1653 = pneg %p152
        $region98: #{svhn_feature_extractor.8} parent=95 // pred_check_branch
          %1655 = sbr.rel (%p1653) target = $region100
        $region99: #{svhn_feature_extractor.8} parent=95 // pred_region
          %s1656 = sand.u32 %s137, 1
          %s1657 = sand.u32 %s137, 1
          %s1658 = smul.addr %s1657, 8
          %s1659 = scalar_lea.vmem [#allocation2], %s1658
        $region100: #{svhn_feature_extractor.8} parent=95 // pred_fallthru
          _
        // Predicated region
        $region101: #{svhn_feature_extractor.8} parent=95 // pred_check
          %p1660 = pneg %p178
        $region102: #{svhn_feature_extractor.8} parent=95 // pred_check_branch
          %1662 = sbr.rel (%p1660) target = $region104
        $region103: #{svhn_feature_extractor.8} parent=95 // pred_region
          %p1663 = scmp.lt.s32.totalorder %s19, 1
          %s1664 = scalar_select %p1663, %s19, 1
          %s1665 = smul.addr %s1664, 2
          %s1666 = scalar_lea.vmem %s6, %s1665
        $region104: #{svhn_feature_extractor.8} parent=95 // pred_fallthru
          _
      $region96: #{svhn_feature_extractor.8} parent=5 // pred_fallthru
        _
    $region6: #{svhn_feature_extractor.8} parent=1 // loop_footer
      %s17 = sadd.s32 1, %s13
    $region7: #{svhn_feature_extractor.8} parent=1 // loop_footer_branch
      %12 = sbr.rel target = $region3
    $region8: #{svhn_feature_extractor.8} parent=1 // loop_exit
      _

</llo_original>
